<compile_context>
chip_gen: v5e
topology: v5e:2x2
jax: 0.10.0
libtpu: 0.0.40
codegen_flags: <defaults>
</compile_context>

<pallas_src>
import jax
import jax.numpy as jnp
from jax import lax
from jax.experimental import pallas as pl
from jax.experimental.pallas import tpu as pltpu

CLASS_DIM = 3
DATA_DIM = 8
NH = 512


def _round_up(n, m):
    return ((n + m - 1) // m) * m


def _disc_kernel(x_ref, y_ref, w1x_ref, w1y_ref, b1_ref, w2_ref, b2_ref,
                 w3_ref, b3_ref, w4_ref, b4_ref, o_ref):
    """One batch tile (TB rows) of the 4-layer MLP discriminator.

    x_ref: (TB, DATA_DIM) f32, y_ref: (TB, CLASS_DIM) f32.
    Weights are bf16 (MXU rate), biases f32, accumulation f32.
    o_ref: (1, TB) f32 -- lane-dense row of sigmoid probabilities.
    """
    # Layer 1: concat-free -- cat([x, y]) @ W1 == x @ W1[:D] + y @ W1[D:]
    h = jnp.dot(x_ref[...].astype(jnp.bfloat16), w1x_ref[...],
                preferred_element_type=jnp.float32)
    h = h + jnp.dot(y_ref[...].astype(jnp.bfloat16), w1y_ref[...],
                    preferred_element_type=jnp.float32)
    h = jnp.maximum(h + b1_ref[...], 0.0)

    # Layer 2: (TB, 512) @ (512, 256) -> ReLU
    h = jnp.dot(h.astype(jnp.bfloat16), w2_ref[...],
                preferred_element_type=jnp.float32)
    h = jnp.maximum(h + b2_ref[...], 0.0)

    # Layer 3: (TB, 256) @ (256, 256) -> ReLU
    h = jnp.dot(h.astype(jnp.bfloat16), w3_ref[...],
                preferred_element_type=jnp.float32)
    h = jnp.maximum(h + b3_ref[...], 0.0)

    # Layer 4 (output width 1): contract the (1, 256) weight row with the
    # (TB, 256) activations on their last dims -> (1, TB) logits, lane-dense.
    logit = lax.dot_general(
        w4_ref[...], h.astype(jnp.bfloat16),
        dimension_numbers=(((1,), (1,)), ((), ())),
        preferred_element_type=jnp.float32)
    logit = logit + b4_ref[0]                       # scalar bias from SMEM
    o_ref[...] = jax.nn.sigmoid(logit).astype(o_ref.dtype)


def discriminator_forward(x, y, params, *, tb=None):
    """x: (B, DATA_DIM) f32, y: (B, CLASS_DIM) f32 -> (B, 1) f32 in [0, 1]."""
    (w1, b1), (w2, b2), (w3, b3), (w4, b4) = params
    B = x.shape[0]

    # Batch tile: multiple of 256 (fills the 2x256^2 MXU on v6e/v7x, is
    # 128-aligned for v5e), capped at 512 so per-tile f32 activations stay
    # around 1 MiB (well inside every chip's scoped VMEM limit).
    if tb is None:
        tb = min(512, _round_up(max(B, 1), 256))
    b_pad = _round_up(B, tb)
    num_tiles = pl.cdiv(b_pad, tb)

    if b_pad != B:
        x = jnp.pad(x, ((0, b_pad - B), (0, 0)))
        y = jnp.pad(y, ((0, b_pad - B), (0, 0)))

    # Weights stored (in_features, out_features); matmul operands cast to
    # bf16 once (halves weight VMEM/DMA bytes). Biases stay f32.
    w1x = w1[:DATA_DIM].astype(jnp.bfloat16)        # (DATA_DIM, nh)
    w1y = w1[DATA_DIM:].astype(jnp.bfloat16)        # (CLASS_DIM, nh)
    w2b = w2.astype(jnp.bfloat16)                   # (nh, nh//2)
    w3b = w3.astype(jnp.bfloat16)                   # (nh//2, nh//2)
    w4r = w4.reshape(1, -1).astype(jnp.bfloat16)    # (1, nh//2) row vector
    b1r = b1.reshape(1, -1)
    b2r = b2.reshape(1, -1)
    b3r = b3.reshape(1, -1)
    b4s = b4.reshape(1)                             # scalar -> SMEM

    def _resident(a):
        # Full block, same block index every step -> DMA'd once, stays in VMEM.
        return pl.BlockSpec(a.shape, lambda i: (0, 0))

    in_specs = [
        pl.BlockSpec((tb, DATA_DIM), lambda i: (i, 0)),      # x batch tile
        pl.BlockSpec((tb, CLASS_DIM), lambda i: (i, 0)),     # y batch tile
        _resident(w1x), _resident(w1y), _resident(b1r),
        _resident(w2b), _resident(b2r),
        _resident(w3b), _resident(b3r),
        _resident(w4r),
        pl.BlockSpec(memory_space=pltpu.MemorySpace.SMEM),   # b4 scalar
    ]
    out_spec = pl.BlockSpec((1, tb), lambda i: (0, i))       # lane-dense row

    out = pl.pallas_call(
        _disc_kernel,
        out_shape=jax.ShapeDtypeStruct((1, b_pad), jnp.float32),
        grid=(num_tiles,),
        in_specs=in_specs,
        out_specs=out_spec,
        compiler_params=pltpu.CompilerParams(
            dimension_semantics=("parallel",),   # v7x: shard batch tiles over 2 TCs
            vmem_limit_bytes=32 * 1024 * 1024,   # explicit; << v7x 64 MiB physical
        ),
    )(x, y, w1x, w1y, b1r, w2b, b2r, w3b, b3r, w4r, b4s)

    return out[0, :B][:, None]                   # (B, 1), drop batch padding


def init_params(key, class_dim=CLASS_DIM, data_dim=DATA_DIM, nh=NH):
    """PyTorch-Linear-style init; weights stored (in_features, out_features)."""
    dims = [(class_dim + data_dim, nh), (nh, nh // 2),
            (nh // 2, nh // 2), (nh // 2, 1)]
    params = []
    for (fan_in, fan_out) in dims:
        key, kw, kb = jax.random.split(key, 3)
        bound = 1.0 / jnp.sqrt(jnp.float32(fan_in))
        w = jax.random.uniform(kw, (fan_in, fan_out), jnp.float32, -bound, bound)
        b = jax.random.uniform(kb, (fan_out,), jnp.float32, -bound, bound)
        params.append((w, b))
    return params


def _reference_forward(x, y, params):
    h = jnp.concatenate([x, y], axis=1)
    (w1, b1), (w2, b2), (w3, b3), (w4, b4) = params
    h = jax.nn.relu(h @ w1 + b1)
    h = jax.nn.relu(h @ w2 + b2)
    h = jax.nn.relu(h @ w3 + b3)
    return jax.nn.sigmoid(h @ w4 + b4)


if __name__ == "__main__":
    key = jax.random.PRNGKey(0)
    kp, kx, ky = jax.random.split(key, 3)

    B = 8
    params = init_params(kp)
    x = jax.random.normal(kx, (B, DATA_DIM), jnp.float32)
    # One-hot class conditioning, like a typical CGAN label input.
    labels = jax.random.randint(ky, (B,), 0, CLASS_DIM)
    y = jax.nn.one_hot(labels, CLASS_DIM, dtype=jnp.float32)

    out = discriminator_forward(x, y, params)
    out = jax.block_until_ready(out)

    ref = _reference_forward(x, y, params)
    assert out.shape == (B, 1)
    assert bool(jnp.all(jnp.isfinite(out)))
    # bf16 matmul operands (f32 accumulation) vs. the f32 reference.
    assert jnp.allclose(out, ref, atol=2e-2, rtol=2e-2), "mismatch vs JAX reference"
    print("KERNEL_OK")
</pallas_src>

<mosaic_0001>
module attributes {stable_mosaic.version = 11 : i64} {
  func.func @_disc_kernel(%arg0: i32, %arg1: memref<256x8xf32, #tpu.memory_space<vmem>>, %arg2: memref<256x3xf32, #tpu.memory_space<vmem>>, %arg3: memref<8x512xbf16, #tpu.memory_space<vmem>>, %arg4: memref<3x512xbf16, #tpu.memory_space<vmem>>, %arg5: memref<1x512xf32, #tpu.memory_space<vmem>>, %arg6: memref<512x256xbf16, #tpu.memory_space<vmem>>, %arg7: memref<1x256xf32, #tpu.memory_space<vmem>>, %arg8: memref<256x256xbf16, #tpu.memory_space<vmem>>, %arg9: memref<1x256xf32, #tpu.memory_space<vmem>>, %arg10: memref<1x256xbf16, #tpu.memory_space<vmem>>, %arg11: memref<1xf32, #tpu.memory_space<smem>>, %arg12: memref<1x256xf32, #tpu.memory_space<vmem>>) attributes {dimension_semantics = [#tpu.dimension_semantics<parallel>], iteration_bounds = array<i64: 1>, scalar_prefetch = 0 : i64, scratch_operands = 0 : i64, tpu.core_type = #tpu.core_type<tc>, window_params = [{transform_indices = @transform_0, window_bounds = array<i64: 256, 8>}, {transform_indices = @transform_1, window_bounds = array<i64: 256, 3>}, {pipeline_mode = #tpu.pipeline_mode<synchronous>, transform_indices = @transform_2, window_bounds = array<i64: 8, 512>}, {pipeline_mode = #tpu.pipeline_mode<synchronous>, transform_indices = @transform_3, window_bounds = array<i64: 3, 512>}, {pipeline_mode = #tpu.pipeline_mode<synchronous>, transform_indices = @transform_4, window_bounds = array<i64: 1, 512>}, {pipeline_mode = #tpu.pipeline_mode<synchronous>, transform_indices = @transform_5, window_bounds = array<i64: 512, 256>}, {pipeline_mode = #tpu.pipeline_mode<synchronous>, transform_indices = @transform_6, window_bounds = array<i64: 1, 256>}, {pipeline_mode = #tpu.pipeline_mode<synchronous>, transform_indices = @transform_7, window_bounds = array<i64: 256, 256>}, {pipeline_mode = #tpu.pipeline_mode<synchronous>, transform_indices = @transform_8, window_bounds = array<i64: 1, 256>}, {pipeline_mode = #tpu.pipeline_mode<synchronous>, transform_indices = @transform_9, window_bounds = array<i64: 1, 256>}, {transform_indices = @transform_10, window_bounds = array<i64: 1>}, {transform_indices = @transform_11, window_bounds = array<i64: 1, 256>}]} {
    %c0 = arith.constant 0 : index
    %c0_0 = arith.constant 0 : index
    %0 = vector.load %arg1[%c0, %c0_0] : memref<256x8xf32, #tpu.memory_space<vmem>>, vector<256x8xf32>
    %1 = arith.truncf %0 : vector<256x8xf32> to vector<256x8xbf16>
    %c0_1 = arith.constant 0 : index
    %c0_2 = arith.constant 0 : index
    %2 = vector.load %arg3[%c0_1, %c0_2] : memref<8x512xbf16, #tpu.memory_space<vmem>>, vector<8x512xbf16>
    %cst = arith.constant dense<0.000000e+00> : vector<256x512xf32>
    %3 = tpu.matmul %1, %2, %cst {dimension_numbers = #tpu.dot_dimension_numbers<[1], [0], [0], [1], [0, 0, 1, 1], [], []>} : vector<256x8xbf16>, vector<8x512xbf16>, vector<256x512xf32> -> vector<256x512xf32>
    %c0_3 = arith.constant 0 : index
    %c0_4 = arith.constant 0 : index
    %4 = vector.load %arg2[%c0_3, %c0_4] : memref<256x3xf32, #tpu.memory_space<vmem>>, vector<256x3xf32>
    %5 = arith.truncf %4 : vector<256x3xf32> to vector<256x3xbf16>
    %c0_5 = arith.constant 0 : index
    %c0_6 = arith.constant 0 : index
    %6 = vector.load %arg4[%c0_5, %c0_6] : memref<3x512xbf16, #tpu.memory_space<vmem>>, vector<3x512xbf16>
    %cst_7 = arith.constant dense<0.000000e+00> : vector<256x512xf32>
    %7 = tpu.matmul %5, %6, %cst_7 {dimension_numbers = #tpu.dot_dimension_numbers<[1], [0], [0], [1], [0, 0, 1, 1], [], []>} : vector<256x3xbf16>, vector<3x512xbf16>, vector<256x512xf32> -> vector<256x512xf32>
    %8 = arith.addf %3, %7 : vector<256x512xf32>
    %c0_8 = arith.constant 0 : index
    %c0_9 = arith.constant 0 : index
    %9 = vector.load %arg5[%c0_8, %c0_9] : memref<1x512xf32, #tpu.memory_space<vmem>>, vector<1x512xf32>
    %10 = vector.broadcast %9 : vector<1x512xf32> to vector<256x512xf32>
    %11 = arith.addf %8, %10 : vector<256x512xf32>
    %cst_10 = arith.constant 0.000000e+00 : f32
    %12 = vector.broadcast %cst_10 : f32 to vector<256x512xf32>
    %13 = arith.maximumf %11, %12 : vector<256x512xf32>
    %14 = arith.truncf %13 : vector<256x512xf32> to vector<256x512xbf16>
    %c0_11 = arith.constant 0 : index
    %c0_12 = arith.constant 0 : index
    %15 = vector.load %arg6[%c0_11, %c0_12] : memref<512x256xbf16, #tpu.memory_space<vmem>>, vector<512x256xbf16>
    %cst_13 = arith.constant dense<0.000000e+00> : vector<256x256xf32>
    %16 = tpu.matmul %14, %15, %cst_13 {dimension_numbers = #tpu.dot_dimension_numbers<[1], [0], [0], [1], [0, 0, 1, 1], [], []>} : vector<256x512xbf16>, vector<512x256xbf16>, vector<256x256xf32> -> vector<256x256xf32>
    %c0_14 = arith.constant 0 : index
    %c0_15 = arith.constant 0 : index
    %17 = vector.load %arg7[%c0_14, %c0_15] : memref<1x256xf32, #tpu.memory_space<vmem>>, vector<1x256xf32>
    %18 = vector.broadcast %17 : vector<1x256xf32> to vector<256x256xf32>
    %19 = arith.addf %16, %18 : vector<256x256xf32>
    %cst_16 = arith.constant 0.000000e+00 : f32
    %20 = vector.broadcast %cst_16 : f32 to vector<256x256xf32>
    %21 = arith.maximumf %19, %20 : vector<256x256xf32>
    %22 = arith.truncf %21 : vector<256x256xf32> to vector<256x256xbf16>
    %c0_17 = arith.constant 0 : index
    %c0_18 = arith.constant 0 : index
    %23 = vector.load %arg8[%c0_17, %c0_18] : memref<256x256xbf16, #tpu.memory_space<vmem>>, vector<256x256xbf16>
    %cst_19 = arith.constant dense<0.000000e+00> : vector<256x256xf32>
    %24 = tpu.matmul %22, %23, %cst_19 {dimension_numbers = #tpu.dot_dimension_numbers<[1], [0], [0], [1], [0, 0, 1, 1], [], []>} : vector<256x256xbf16>, vector<256x256xbf16>, vector<256x256xf32> -> vector<256x256xf32>
    %c0_20 = arith.constant 0 : index
    %c0_21 = arith.constant 0 : index
    %25 = vector.load %arg9[%c0_20, %c0_21] : memref<1x256xf32, #tpu.memory_space<vmem>>, vector<1x256xf32>
    %26 = vector.broadcast %25 : vector<1x256xf32> to vector<256x256xf32>
    %27 = arith.addf %24, %26 : vector<256x256xf32>
    %cst_22 = arith.constant 0.000000e+00 : f32
    %28 = vector.broadcast %cst_22 : f32 to vector<256x256xf32>
    %29 = arith.maximumf %27, %28 : vector<256x256xf32>
    %c0_23 = arith.constant 0 : index
    %c0_24 = arith.constant 0 : index
    %30 = vector.load %arg10[%c0_23, %c0_24] : memref<1x256xbf16, #tpu.memory_space<vmem>>, vector<1x256xbf16>
    %31 = arith.truncf %29 : vector<256x256xf32> to vector<256x256xbf16>
    %cst_25 = arith.constant dense<0.000000e+00> : vector<1x256xf32>
    %32 = tpu.matmul %30, %31, %cst_25 {dimension_numbers = #tpu.dot_dimension_numbers<[1], [1], [0], [0], [0, 0, 1, 0], [], []>} : vector<1x256xbf16>, vector<256x256xbf16>, vector<1x256xf32> -> vector<1x256xf32>
    %c0_26 = arith.constant 0 : index
    %33 = memref.load %arg11[%c0_26] : memref<1xf32, #tpu.memory_space<smem>>
    %34 = vector.broadcast %33 : f32 to vector<1x256xf32>
    %35 = arith.addf %32, %34 : vector<1x256xf32>
    %36 = arith.negf %35 : vector<1x256xf32>
    %37 = math.exp %36 : vector<1x256xf32>
    %cst_27 = arith.constant 1.000000e+00 : f32
    %38 = vector.broadcast %cst_27 : f32 to vector<1x256xf32>
    %39 = arith.addf %38, %37 : vector<1x256xf32>
    %40 = arith.divf %38, %39 : vector<1x256xf32>
    %c0_28 = arith.constant 0 : index
    %c0_29 = arith.constant 0 : index
    %41 = vector.load %arg12[%c0_28, %c0_29] : memref<1x256xf32, #tpu.memory_space<vmem>>, vector<1x256xf32>
    tpu.vector_store %arg12[%c0_28, %c0_29], %40 {strides = array<i32>} : memref<1x256xf32, #tpu.memory_space<vmem>>, vector<1x256xf32>,
    return
  }
  func.func @transform_0(%arg0: i32) -> (i32, i32) {
    %c0_i32 = arith.constant 0 : i32
    %c0_i32_0 = arith.constant 0 : i32
    return %arg0, %c0_i32 : i32, i32
  }
  func.func @transform_1(%arg0: i32) -> (i32, i32) {
    %c0_i32 = arith.constant 0 : i32
    %c0_i32_0 = arith.constant 0 : i32
    return %arg0, %c0_i32 : i32, i32
  }
  func.func @transform_2(%arg0: i32) -> (i32, i32) {
    %c0_i32 = arith.constant 0 : i32
    %c0_i32_0 = arith.constant 0 : i32
    %c0_i32_1 = arith.constant 0 : i32
    return %c0_i32, %c0_i32_0 : i32, i32
  }
  func.func @transform_3(%arg0: i32) -> (i32, i32) {
    %c0_i32 = arith.constant 0 : i32
    %c0_i32_0 = arith.constant 0 : i32
    %c0_i32_1 = arith.constant 0 : i32
    return %c0_i32, %c0_i32_0 : i32, i32
  }
  func.func @transform_4(%arg0: i32) -> (i32, i32) {
    %c0_i32 = arith.constant 0 : i32
    %c0_i32_0 = arith.constant 0 : i32
    %c0_i32_1 = arith.constant 0 : i32
    return %c0_i32, %c0_i32_0 : i32, i32
  }
  func.func @transform_5(%arg0: i32) -> (i32, i32) {
    %c0_i32 = arith.constant 0 : i32
    %c0_i32_0 = arith.constant 0 : i32
    %c0_i32_1 = arith.constant 0 : i32
    return %c0_i32, %c0_i32_0 : i32, i32
  }
  func.func @transform_6(%arg0: i32) -> (i32, i32) {
    %c0_i32 = arith.constant 0 : i32
    %c0_i32_0 = arith.constant 0 : i32
    %c0_i32_1 = arith.constant 0 : i32
    return %c0_i32, %c0_i32_0 : i32, i32
  }
  func.func @transform_7(%arg0: i32) -> (i32, i32) {
    %c0_i32 = arith.constant 0 : i32
    %c0_i32_0 = arith.constant 0 : i32
    %c0_i32_1 = arith.constant 0 : i32
    return %c0_i32, %c0_i32_0 : i32, i32
  }
  func.func @transform_8(%arg0: i32) -> (i32, i32) {
    %c0_i32 = arith.constant 0 : i32
    %c0_i32_0 = arith.constant 0 : i32
    %c0_i32_1 = arith.constant 0 : i32
    return %c0_i32, %c0_i32_0 : i32, i32
  }
  func.func @transform_9(%arg0: i32) -> (i32, i32) {
    %c0_i32 = arith.constant 0 : i32
    %c0_i32_0 = arith.constant 0 : i32
    %c0_i32_1 = arith.constant 0 : i32
    return %c0_i32, %c0_i32_0 : i32, i32
  }
  func.func @transform_10(%arg0: i32) -> i32 {
    %c0_i32 = arith.constant 0 : i32
    %c0_i32_0 = arith.constant 0 : i32
    return %c0_i32 : i32
  }
  func.func @transform_11(%arg0: i32) -> (i32, i32) {
    %c0_i32 = arith.constant 0 : i32
    %c0_i32_0 = arith.constant 0 : i32
    return %c0_i32, %arg0 : i32, i32
  }
}

</mosaic_0001>

<llo_original>
// kernel: tpu_custom_call.1
$region0: #{tpu_custom_call.1}
  #allocation0 [shape = 'u32[]', space=smem, size = 0x4, offset = 0x4, fixed_abs, tag = 'smem constant byte address 0x4 - core index']
  #allocation1 [shape = 'u32[72,128]{1,0:T(1,128)}', space=vmem, size = 0x9000, scoped, tag = 'internal scratch']
  #allocation2 [shape = 'f32[1]{0:T(128)S(6)}', space=smem, size = 0x200, scoped, tag = 'scoped memory for tpu_custom_call.1']
  %s0 = inlined_call_operand.vmem [shape: f32[256,8], index: 0, kind: input, shape index: {}]
  %s1 = inlined_call_operand.vmem [shape: f32[256,3], index: 1, kind: input, shape index: {}]
  %s2 = inlined_call_operand.vmem [shape: bf16[8,512], index: 2, kind: input, shape index: {}]
  %s3 = inlined_call_operand.hbm [shape: bf16[3,512], index: 3, kind: input, shape index: {}]
  %s4 = inlined_call_operand.vmem [shape: f32[1,512], index: 4, kind: input, shape index: {}]
  %s5 = inlined_call_operand.vmem [shape: bf16[512,256], index: 5, kind: input, shape index: {}]
  %s6 = inlined_call_operand.hbm [shape: f32[1,256], index: 6, kind: input, shape index: {}]
  %s7 = inlined_call_operand.hbm [shape: bf16[256,256], index: 7, kind: input, shape index: {}]
  %s8 = inlined_call_operand.hbm [shape: f32[1,256], index: 8, kind: input, shape index: {}]
  %s9 = inlined_call_operand.hbm [shape: bf16[1,256], index: 9, kind: input, shape index: {}]
  %s10 = inlined_call_operand.<no memory space> [shape: f32[1], index: 10, kind: input, shape index: {}]
  %s11 = inlined_call_operand.hbm [shape: f32[1,256], index: 11, kind: output, shape index: {}]
  %s12 = sld [smem:[#allocation0]]
  $region74: #{tpu_custom_call.1} parent=0
    _
  %s14 = ssub.s32 1, %s12
  %s15 = scalar_select 0, %s14, %s12
  %16 = sst [smem:[#allocation2]] %s10
  $region1: #{tpu_custom_call.1} parent=0
    #allocation3 [shape = 'u8[4096]{0}', space=vmem, size = 0x1000, scoped, tag = 'input window, operand 3, single buffered']
    #allocation4 [shape = 's32[1]{0}', space=sflag, size = 0x4, scoped, tag = 'scoped memory for tpu_custom_call.1']
    #allocation5 [shape = 's32[1]{0}', space=sflag, size = 0x4, scoped, tag = 'scoped memory for tpu_custom_call.1']
    #allocation6 [shape = 'u8[1024]{0}', space=vmem, size = 0x400, scoped, tag = 'input window, operand 6, single buffered']
    #allocation7 [shape = 's32[1]{0}', space=sflag, size = 0x4, scoped, tag = 'scoped memory for tpu_custom_call.1']
    #allocation8 [shape = 'u8[131072]{0}', space=vmem, size = 0x20000, scoped, tag = 'input window, operand 7, single buffered']
    #allocation9 [shape = 'u8[1024]{0}', space=vmem, size = 0x400, scoped, tag = 'input window, operand 8, single buffered']
    #allocation10 [shape = 's32[1]{0}', space=sflag, size = 0x4, scoped, tag = 'scoped memory for tpu_custom_call.1']
    #allocation11 [shape = 'u8[1024]{0}', space=vmem, size = 0x400, scoped, tag = 'input window, operand 9, single buffered']
    #allocation12 [shape = 'u8[1024]{0}', space=vmem, size = 0x400, scoped, tag = 'output window, operand 0, single buffered']
    %17 = vsyncpa [#allocation4], 0
    %18 = vsyncpa [#allocation7], 0
    %19 = vsyncpa [#allocation10], 0
    %20 = vsyncpa [#allocation5], 0
    // Predicated region
    $region2: #{tpu_custom_call.1} parent=1 // pred_check
      _
    $region3: #{tpu_custom_call.1} parent=1 // pred_check_branch
      %22 = sbr.rel (0) target = $region5
    $region4: #{tpu_custom_call.1} parent=1 // pred_region
      _
    $region5: #{tpu_custom_call.1} parent=1 // pred_fallthru
      _
    // Predicated region
    $region6: #{tpu_custom_call.1} parent=1 // pred_check
      _
    $region7: #{tpu_custom_call.1} parent=1 // pred_check_branch
      %24 = sbr.rel (0) target = $region9
    $region8: #{tpu_custom_call.1} parent=1 // pred_region
      _
    $region9: #{tpu_custom_call.1} parent=1 // pred_fallthru
      _
    // Predicated region
    $region10: #{tpu_custom_call.1} parent=1 // pred_check
      _
    $region11: #{tpu_custom_call.1} parent=1 // pred_check_branch
      %26 = sbr.rel (0) target = $region13
    $region12: #{tpu_custom_call.1} parent=1 // pred_region
      _
    $region13: #{tpu_custom_call.1} parent=1 // pred_fallthru
      _
    // Predicated region
    $region14: #{tpu_custom_call.1} parent=1 // pred_check
      _
    $region15: #{tpu_custom_call.1} parent=1 // pred_check_branch
      %28 = sbr.rel (0) target = $region17
    $region16: #{tpu_custom_call.1} parent=1 // pred_region
      %30 = vsyncadd [#allocation4], 0
      %s32 = sshll.u32 %s3, 4
      %s33 = int_to_ptr.hbm [resolvable:$true] %s32
      %s34 = sshll.u32 [#allocation3], 4
      %s35 = int_to_ptr.vmem [resolvable:$true] %s34
      %37 = dma.hbm_to_vmem [thread:$0]  %s33, 128, %s35, [#allocation4]
    $region17: #{tpu_custom_call.1} parent=1 // pred_fallthru
      _
    // Predicated region
    $region18: #{tpu_custom_call.1} parent=1 // pred_check
      _
    $region19: #{tpu_custom_call.1} parent=1 // pred_check_branch
      %39 = sbr.rel (0) target = $region21
    $region20: #{tpu_custom_call.1} parent=1 // pred_region
      _
    $region21: #{tpu_custom_call.1} parent=1 // pred_fallthru
      _
    // Predicated region
    $region22: #{tpu_custom_call.1} parent=1 // pred_check
      _
    $region23: #{tpu_custom_call.1} parent=1 // pred_check_branch
      %41 = sbr.rel (0) target = $region25
    $region24: #{tpu_custom_call.1} parent=1 // pred_region
      _
    $region25: #{tpu_custom_call.1} parent=1 // pred_fallthru
      _
    // Predicated region
    $region26: #{tpu_custom_call.1} parent=1 // pred_check
      _
    $region27: #{tpu_custom_call.1} parent=1 // pred_check_branch
      %43 = sbr.rel (0) target = $region29
    $region28: #{tpu_custom_call.1} parent=1 // pred_region
      %45 = vsyncadd [#allocation7], 0
      %s47 = sshll.u32 %s6, 4
      %s48 = int_to_ptr.hbm [resolvable:$true] %s47
      %s49 = sshll.u32 [#allocation6], 4
      %s50 = int_to_ptr.vmem [resolvable:$true] %s49
      %52 = dma.hbm_to_vmem [thread:$0]  %s48, 32, %s50, [#allocation7]
    $region29: #{tpu_custom_call.1} parent=1 // pred_fallthru
      _
    // Predicated region
    $region30: #{tpu_custom_call.1} parent=1 // pred_check
      _
    $region31: #{tpu_custom_call.1} parent=1 // pred_check_branch
      %54 = sbr.rel (0) target = $region33
    $region32: #{tpu_custom_call.1} parent=1 // pred_region
      %56 = vsyncadd [#allocation7], 0
      %s57 = sshll.u32 %s7, 4
      %s58 = int_to_ptr.hbm [resolvable:$true] %s57
      %s59 = sshll.u32 [#allocation8], 4
      %s60 = int_to_ptr.vmem [resolvable:$true] %s59
      %65 = dma.hbm_to_vmem [thread:$0]  %s58, 4096, %s60, [#allocation7], 128, 128, 8
    $region33: #{tpu_custom_call.1} parent=1 // pred_fallthru
      _
    // Predicated region
    $region34: #{tpu_custom_call.1} parent=1 // pred_check
      _
    $region35: #{tpu_custom_call.1} parent=1 // pred_check_branch
      %67 = sbr.rel (0) target = $region37
    $region36: #{tpu_custom_call.1} parent=1 // pred_region
      %69 = vsyncadd [#allocation10], 0
      %s71 = sshll.u32 %s8, 4
      %s72 = int_to_ptr.hbm [resolvable:$true] %s71
      %s73 = sshll.u32 [#allocation9], 4
      %s74 = int_to_ptr.vmem [resolvable:$true] %s73
      %76 = dma.hbm_to_vmem [thread:$0]  %s72, 32, %s74, [#allocation10]
    $region37: #{tpu_custom_call.1} parent=1 // pred_fallthru
      _
    // Predicated region
    $region38: #{tpu_custom_call.1} parent=1 // pred_check
      _
    $region39: #{tpu_custom_call.1} parent=1 // pred_check_branch
      %78 = sbr.rel (0) target = $region41
    $region40: #{tpu_custom_call.1} parent=1 // pred_region
      %80 = vsyncadd [#allocation10], 0
      %s82 = sshll.u32 %s9, 4
      %s83 = int_to_ptr.hbm [resolvable:$true] %s82
      %s84 = sshll.u32 [#allocation11], 4
      %s85 = int_to_ptr.vmem [resolvable:$true] %s84
      %87 = dma.hbm_to_vmem [thread:$0]  %s83, 32, %s85, [#allocation10]
    $region41: #{tpu_custom_call.1} parent=1 // pred_fallthru
      _
    // Predicated region
    $region42: #{tpu_custom_call.1} parent=1 // pred_check
      _
    $region43: #{tpu_custom_call.1} parent=1 // pred_check_branch
      %89 = sbr.rel (0) target = $region45
    $region44: #{tpu_custom_call.1} parent=1 // pred_region
      _
    $region45: #{tpu_custom_call.1} parent=1 // pred_fallthru
      _
    // Predicated region
    $region46: #{tpu_custom_call.1} parent=1 // pred_check
      _
    $region47: #{tpu_custom_call.1} parent=1 // pred_check_branch
      %91 = sbr.rel (0) target = $region49
    $region48: #{tpu_custom_call.1} parent=1 // pred_region
      %93 = dma.done [#allocation4], 128
    $region49: #{tpu_custom_call.1} parent=1 // pred_fallthru
      _
    // Predicated region
    $region50: #{tpu_custom_call.1} parent=1 // pred_check
      _
    $region51: #{tpu_custom_call.1} parent=1 // pred_check_branch
      %95 = sbr.rel (0) target = $region53
    $region52: #{tpu_custom_call.1} parent=1 // pred_region
      %97 = dma.done [#allocation7], 32
    $region53: #{tpu_custom_call.1} parent=1 // pred_fallthru
      _
    // Predicated region
    $region54: #{tpu_custom_call.1} parent=1 // pred_check
      _
    $region55: #{tpu_custom_call.1} parent=1 // pred_check_branch
      %99 = sbr.rel (0) target = $region57
    $region56: #{tpu_custom_call.1} parent=1 // pred_region
      %101 = dma.done [#allocation7], 4096
    $region57: #{tpu_custom_call.1} parent=1 // pred_fallthru
      _
    // Predicated region
    $region58: #{tpu_custom_call.1} parent=1 // pred_check
      _
    $region59: #{tpu_custom_call.1} parent=1 // pred_check_branch
      %103 = sbr.rel (0) target = $region61
    $region60: #{tpu_custom_call.1} parent=1 // pred_region
      %105 = dma.done [#allocation10], 32
    $region61: #{tpu_custom_call.1} parent=1 // pred_fallthru
      _
    // Predicated region
    $region62: #{tpu_custom_call.1} parent=1 // pred_check
      _
    $region63: #{tpu_custom_call.1} parent=1 // pred_check_branch
      %107 = sbr.rel (0) target = $region65
    $region64: #{tpu_custom_call.1} parent=1 // pred_region
      %109 = dma.done [#allocation10], 32
    $region65: #{tpu_custom_call.1} parent=1 // pred_fallthru
      _
    %v111 = vld [vmem:[%s0] sm:$0xff]
    %v112 = vld [vmem:[%s0 + $0x8] sm:$0xff]
    %v113 = vld [vmem:[%s0 + $0x10] sm:$0xff]
    %v114 = vld [vmem:[%s0 + $0x18] sm:$0xff]
    %v115 = vld [vmem:[%s0 + $0x20] sm:$0xff]
    %v116 = vld [vmem:[%s0 + $0x28] sm:$0xff]
    %v117 = vld [vmem:[%s0 + $0x30] sm:$0xff]
    %v118 = vld [vmem:[%s0 + $0x38] sm:$0xff]
    %v119 = vld [vmem:[%s0 + $0x40] sm:$0xff]
    %v120 = vld [vmem:[%s0 + $0x48] sm:$0xff]
    %v121 = vld [vmem:[%s0 + $0x50] sm:$0xff]
    %v122 = vld [vmem:[%s0 + $0x58] sm:$0xff]
    %v123 = vld [vmem:[%s0 + $0x60] sm:$0xff]
    %v124 = vld [vmem:[%s0 + $0x68] sm:$0xff]
    %v125 = vld [vmem:[%s0 + $0x70] sm:$0xff]
    %v126 = vld [vmem:[%s0 + $0x78] sm:$0xff]
    %v127 = vld [vmem:[%s0 + $0x80] sm:$0xff]
    %v128 = vld [vmem:[%s0 + $0x88] sm:$0xff]
    %v129 = vld [vmem:[%s0 + $0x90] sm:$0xff]
    %v130 = vld [vmem:[%s0 + $0x98] sm:$0xff]
    %v131 = vld [vmem:[%s0 + $0xa0] sm:$0xff]
    %v132 = vld [vmem:[%s0 + $0xa8] sm:$0xff]
    %v133 = vld [vmem:[%s0 + $0xb0] sm:$0xff]
    %v134 = vld [vmem:[%s0 + $0xb8] sm:$0xff]
    %v135 = vld [vmem:[%s0 + $0xc0] sm:$0xff]
    %v136 = vld [vmem:[%s0 + $0xc8] sm:$0xff]
    %v137 = vld [vmem:[%s0 + $0xd0] sm:$0xff]
    %v138 = vld [vmem:[%s0 + $0xd8] sm:$0xff]
    %v139 = vld [vmem:[%s0 + $0xe0] sm:$0xff]
    %v140 = vld [vmem:[%s0 + $0xe8] sm:$0xff]
    %v141 = vld [vmem:[%s0 + $0xf0] sm:$0xff]
    %v142 = vld [vmem:[%s0 + $0xf8] sm:$0xff]
    %v143 = vpack.c.bf16 %v112, %v111
    %v144 = vpack.c.bf16 %v114, %v113
    %v145 = vpack.c.bf16 %v116, %v115
    %v146 = vpack.c.bf16 %v118, %v117
    %v147 = vpack.c.bf16 %v120, %v119
    %v148 = vpack.c.bf16 %v122, %v121
    %v149 = vpack.c.bf16 %v124, %v123
    %v150 = vpack.c.bf16 %v126, %v125
    %v151 = vpack.c.bf16 %v128, %v127
    %v152 = vpack.c.bf16 %v130, %v129
    %v153 = vpack.c.bf16 %v132, %v131
    %v154 = vpack.c.bf16 %v134, %v133
    %v155 = vpack.c.bf16 %v136, %v135
    %v156 = vpack.c.bf16 %v138, %v137
    %v157 = vpack.c.bf16 %v140, %v139
    %v158 = vpack.c.bf16 %v142, %v141
    %v159 = vld [vmem:[%s2] sm:$0xff]
    %v160 = vld [vmem:[%s2 + $0x8] sm:$0xff]
    %v161 = vld [vmem:[%s1] sm:$0xff]
    %v162 = vld [vmem:[%s1 + $0x8] sm:$0xff]
    %v163 = vld [vmem:[%s1 + $0x10] sm:$0xff]
    %v164 = vld [vmem:[%s1 + $0x18] sm:$0xff]
    %v165 = vld [vmem:[%s1 + $0x20] sm:$0xff]
    %v166 = vld [vmem:[%s1 + $0x28] sm:$0xff]
    %v167 = vld [vmem:[%s1 + $0x30] sm:$0xff]
    %v168 = vld [vmem:[%s1 + $0x38] sm:$0xff]
    %v169 = vld [vmem:[%s1 + $0x40] sm:$0xff]
    %v170 = vld [vmem:[%s1 + $0x48] sm:$0xff]
    %v171 = vld [vmem:[%s1 + $0x50] sm:$0xff]
    %v172 = vld [vmem:[%s1 + $0x58] sm:$0xff]
    %v173 = vld [vmem:[%s1 + $0x60] sm:$0xff]
    %v174 = vld [vmem:[%s1 + $0x68] sm:$0xff]
    %v175 = vld [vmem:[%s1 + $0x70] sm:$0xff]
    %v176 = vld [vmem:[%s1 + $0x78] sm:$0xff]
    %v177 = vld [vmem:[%s1 + $0x80] sm:$0xff]
    %v178 = vld [vmem:[%s1 + $0x88] sm:$0xff]
    %v179 = vld [vmem:[%s1 + $0x90] sm:$0xff]
    %v180 = vld [vmem:[%s1 + $0x98] sm:$0xff]
    %v181 = vld [vmem:[%s1 + $0xa0] sm:$0xff]
    %v182 = vld [vmem:[%s1 + $0xa8] sm:$0xff]
    %v183 = vld [vmem:[%s1 + $0xb0] sm:$0xff]
    %v184 = vld [vmem:[%s1 + $0xb8] sm:$0xff]
    %v185 = vld [vmem:[%s1 + $0xc0] sm:$0xff]
    %v186 = vld [vmem:[%s1 + $0xc8] sm:$0xff]
    %v187 = vld [vmem:[%s1 + $0xd0] sm:$0xff]
    %v188 = vld [vmem:[%s1 + $0xd8] sm:$0xff]
    %v189 = vld [vmem:[%s1 + $0xe0] sm:$0xff]
    %v190 = vld [vmem:[%s1 + $0xe8] sm:$0xff]
    %v191 = vld [vmem:[%s1 + $0xf0] sm:$0xff]
    %v192 = vld [vmem:[%s1 + $0xf8] sm:$0xff]
    %v193 = vpack.c.bf16 %v162, %v161
    %v194 = vpack.c.bf16 %v164, %v163
    %v195 = vpack.c.bf16 %v166, %v165
    %v196 = vpack.c.bf16 %v168, %v167
    %v197 = vpack.c.bf16 %v170, %v169
    %v198 = vpack.c.bf16 %v172, %v171
    %v199 = vpack.c.bf16 %v174, %v173
    %v200 = vpack.c.bf16 %v176, %v175
    %v201 = vpack.c.bf16 %v178, %v177
    %v202 = vpack.c.bf16 %v180, %v179
    %v203 = vpack.c.bf16 %v182, %v181
    %v204 = vpack.c.bf16 %v184, %v183
    %v205 = vpack.c.bf16 %v186, %v185
    %v206 = vpack.c.bf16 %v188, %v187
    %v207 = vpack.c.bf16 %v190, %v189
    %v208 = vpack.c.bf16 %v192, %v191
    %v209 = vld [vmem:[#allocation3] sm:$0xff]
    %211 = vst [vmem:[#allocation1] ss:$4 sm:$0xff] %v209
    %v212 = vld.sshfl [vmem:[#allocation1] sm:$0xff pattern:$0x73625140]
    %v213 = vld.sshfl [vmem:[#allocation1 + $0x8] sm:$0xff pattern:$0x73625140]
    %v214 = vld.sshfl [vmem:[#allocation1 + $0x10] sm:$0xff pattern:$0x73625140]
    %v215 = vld.sshfl [vmem:[#allocation1 + $0x18] sm:$0xff pattern:$0x73625140]
    %vm216 = vcmask 23552
    %v218 = vsel %vm216, %v193, 0
    %v221 = vsel %vm216, %v194, 0
    %v224 = vsel %vm216, %v195, 0
    %v227 = vsel %vm216, %v196, 0
    %v230 = vsel %vm216, %v197, 0
    %v233 = vsel %vm216, %v198, 0
    %v236 = vsel %vm216, %v199, 0
    %v239 = vsel %vm216, %v200, 0
    %v242 = vsel %vm216, %v201, 0
    %v245 = vsel %vm216, %v202, 0
    %v248 = vsel %vm216, %v203, 0
    %v251 = vsel %vm216, %v204, 0
    %v254 = vsel %vm216, %v205, 0
    %v257 = vsel %vm216, %v206, 0
    %v260 = vsel %vm216, %v207, 0
    %v263 = vsel %vm216, %v208, 0
    %vm265 = vcmask 1040384
    %vm266 = vcmask 1041408
    %v267 = vsel %vm265, 4294967295, 65535
    %v268 = vsel %vm266, %v267, 0
    %v269 = vand.u32 %v212, %v268
    %v271 = vand.u32 %v213, %v268
    %v273 = vand.u32 %v214, %v268
    %v275 = vand.u32 %v215, %v268
    %277 = vmatpush.bf16.msra.mxu0 0
    %278 = vmatpush.bf16.msra.mxu0 0
    %279 = vmatpush.bf16.msra.mxu0 0
    %280 = vmatpush.bf16.msra.mxu0 0
    %281 = vmatpush.bf16.msra.mxu0 0
    %282 = vmatpush.bf16.msra.mxu0 0
    %283 = vmatpush.bf16.msra.mxu0 0
    %284 = vmatpush.bf16.msra.mxu0 %v269
    %285 = vmatmul.bf16.gmra.mxu0 %v218
    %v286 = vpop.f32.mrf.mxu0
    %v287 = vadd.f32 0.0, %v286
    %v288 = vpop.f32.mrf.mxu0
    %v289 = vadd.f32 0.0, %v288
    %290 = vmatmul.bf16.gmra.mxu0 %v221
    %v291 = vpop.f32.mrf.mxu0
    %v292 = vadd.f32 0.0, %v291
    %v293 = vpop.f32.mrf.mxu0
    %v294 = vadd.f32 0.0, %v293
    %295 = vmatmul.bf16.gmra.mxu0 %v224
    %v296 = vpop.f32.mrf.mxu0
    %v297 = vadd.f32 0.0, %v296
    %v298 = vpop.f32.mrf.mxu0
    %v299 = vadd.f32 0.0, %v298
    %300 = vmatmul.bf16.gmra.mxu0 %v227
    %v301 = vpop.f32.mrf.mxu0
    %v302 = vadd.f32 0.0, %v301
    %v303 = vpop.f32.mrf.mxu0
    %v304 = vadd.f32 0.0, %v303
    %305 = vmatmul.bf16.gmra.mxu0 %v230
    %v306 = vpop.f32.mrf.mxu0
    %v307 = vadd.f32 0.0, %v306
    %v308 = vpop.f32.mrf.mxu0
    %v309 = vadd.f32 0.0, %v308
    %310 = vmatmul.bf16.gmra.mxu0 %v233
    %v311 = vpop.f32.mrf.mxu0
    %v312 = vadd.f32 0.0, %v311
    %v313 = vpop.f32.mrf.mxu0
    %v314 = vadd.f32 0.0, %v313
    %315 = vmatmul.bf16.gmra.mxu0 %v236
    %v316 = vpop.f32.mrf.mxu0
    %v317 = vadd.f32 0.0, %v316
    %v318 = vpop.f32.mrf.mxu0
    %v319 = vadd.f32 0.0, %v318
    %320 = vmatmul.bf16.gmra.mxu0 %v239
    %v321 = vpop.f32.mrf.mxu0
    %v322 = vadd.f32 0.0, %v321
    %v323 = vpop.f32.mrf.mxu0
    %v324 = vadd.f32 0.0, %v323
    %325 = vmatmul.bf16.gmra.mxu0 %v242
    %v326 = vpop.f32.mrf.mxu0
    %v327 = vadd.f32 0.0, %v326
    %v328 = vpop.f32.mrf.mxu0
    %v329 = vadd.f32 0.0, %v328
    %330 = vmatmul.bf16.gmra.mxu0 %v245
    %v331 = vpop.f32.mrf.mxu0
    %v332 = vadd.f32 0.0, %v331
    %v333 = vpop.f32.mrf.mxu0
    %v334 = vadd.f32 0.0, %v333
    %335 = vmatmul.bf16.gmra.mxu0 %v248
    %v336 = vpop.f32.mrf.mxu0
    %v337 = vadd.f32 0.0, %v336
    %v338 = vpop.f32.mrf.mxu0
    %v339 = vadd.f32 0.0, %v338
    %340 = vmatmul.bf16.gmra.mxu0 %v251
    %v341 = vpop.f32.mrf.mxu0
    %v342 = vadd.f32 0.0, %v341
    %v343 = vpop.f32.mrf.mxu0
    %v344 = vadd.f32 0.0, %v343
    %345 = vmatmul.bf16.gmra.mxu0 %v254
    %v346 = vpop.f32.mrf.mxu0
    %v347 = vadd.f32 0.0, %v346
    %v348 = vpop.f32.mrf.mxu0
    %v349 = vadd.f32 0.0, %v348
    %350 = vmatmul.bf16.gmra.mxu0 %v257
    %v351 = vpop.f32.mrf.mxu0
    %v352 = vadd.f32 0.0, %v351
    %v353 = vpop.f32.mrf.mxu0
    %v354 = vadd.f32 0.0, %v353
    %355 = vmatmul.bf16.gmra.mxu0 %v260
    %v356 = vpop.f32.mrf.mxu0
    %v357 = vadd.f32 0.0, %v356
    %v358 = vpop.f32.mrf.mxu0
    %v359 = vadd.f32 0.0, %v358
    %360 = vmatmul.bf16.gmra.mxu0 %v263
    %v361 = vpop.f32.mrf.mxu0
    %v362 = vadd.f32 0.0, %v361
    %v363 = vpop.f32.mrf.mxu0
    %v364 = vadd.f32 0.0, %v363
    %365 = vdwg.mxu0
    %366 = vmatpush.bf16.msra.mxu0 0
    %367 = vmatpush.bf16.msra.mxu0 0
    %368 = vmatpush.bf16.msra.mxu0 0
    %369 = vmatpush.bf16.msra.mxu0 0
    %370 = vmatpush.bf16.msra.mxu0 0
    %371 = vmatpush.bf16.msra.mxu0 0
    %372 = vmatpush.bf16.msra.mxu0 0
    %373 = vmatpush.bf16.msra.mxu0 %v271
    %374 = vmatmul.bf16.gmra.mxu0 %v218
    %v375 = vpop.f32.mrf.mxu0
    %v376 = vadd.f32 0.0, %v375
    %v377 = vpop.f32.mrf.mxu0
    %v378 = vadd.f32 0.0, %v377
    %379 = vmatmul.bf16.gmra.mxu0 %v221
    %v380 = vpop.f32.mrf.mxu0
    %v381 = vadd.f32 0.0, %v380
    %v382 = vpop.f32.mrf.mxu0
    %v383 = vadd.f32 0.0, %v382
    %384 = vmatmul.bf16.gmra.mxu0 %v224
    %v385 = vpop.f32.mrf.mxu0
    %v386 = vadd.f32 0.0, %v385
    %v387 = vpop.f32.mrf.mxu0
    %v388 = vadd.f32 0.0, %v387
    %389 = vmatmul.bf16.gmra.mxu0 %v227
    %v390 = vpop.f32.mrf.mxu0
    %v391 = vadd.f32 0.0, %v390
    %v392 = vpop.f32.mrf.mxu0
    %v393 = vadd.f32 0.0, %v392
    %394 = vmatmul.bf16.gmra.mxu0 %v230
    %v395 = vpop.f32.mrf.mxu0
    %v396 = vadd.f32 0.0, %v395
    %v397 = vpop.f32.mrf.mxu0
    %v398 = vadd.f32 0.0, %v397
    %399 = vmatmul.bf16.gmra.mxu0 %v233
    %v400 = vpop.f32.mrf.mxu0
    %v401 = vadd.f32 0.0, %v400
    %v402 = vpop.f32.mrf.mxu0
    %v403 = vadd.f32 0.0, %v402
    %404 = vmatmul.bf16.gmra.mxu0 %v236
    %v405 = vpop.f32.mrf.mxu0
    %v406 = vadd.f32 0.0, %v405
    %v407 = vpop.f32.mrf.mxu0
    %v408 = vadd.f32 0.0, %v407
    %409 = vmatmul.bf16.gmra.mxu0 %v239
    %v410 = vpop.f32.mrf.mxu0
    %v411 = vadd.f32 0.0, %v410
    %v412 = vpop.f32.mrf.mxu0
    %v413 = vadd.f32 0.0, %v412
    %414 = vmatmul.bf16.gmra.mxu0 %v242
    %v415 = vpop.f32.mrf.mxu0
    %v416 = vadd.f32 0.0, %v415
    %v417 = vpop.f32.mrf.mxu0
    %v418 = vadd.f32 0.0, %v417
    %419 = vmatmul.bf16.gmra.mxu0 %v245
    %v420 = vpop.f32.mrf.mxu0
    %v421 = vadd.f32 0.0, %v420
    %v422 = vpop.f32.mrf.mxu0
    %v423 = vadd.f32 0.0, %v422
    %424 = vmatmul.bf16.gmra.mxu0 %v248
    %v425 = vpop.f32.mrf.mxu0
    %v426 = vadd.f32 0.0, %v425
    %v427 = vpop.f32.mrf.mxu0
    %v428 = vadd.f32 0.0, %v427
    %429 = vmatmul.bf16.gmra.mxu0 %v251
    %v430 = vpop.f32.mrf.mxu0
    %v431 = vadd.f32 0.0, %v430
    %v432 = vpop.f32.mrf.mxu0
    %v433 = vadd.f32 0.0, %v432
    %434 = vmatmul.bf16.gmra.mxu0 %v254
    %v435 = vpop.f32.mrf.mxu0
    %v436 = vadd.f32 0.0, %v435
    %v437 = vpop.f32.mrf.mxu0
    %v438 = vadd.f32 0.0, %v437
    %439 = vmatmul.bf16.gmra.mxu0 %v257
    %v440 = vpop.f32.mrf.mxu0
    %v441 = vadd.f32 0.0, %v440
    %v442 = vpop.f32.mrf.mxu0
    %v443 = vadd.f32 0.0, %v442
    %444 = vmatmul.bf16.gmra.mxu0 %v260
    %v445 = vpop.f32.mrf.mxu0
    %v446 = vadd.f32 0.0, %v445
    %v447 = vpop.f32.mrf.mxu0
    %v448 = vadd.f32 0.0, %v447
    %449 = vmatmul.bf16.gmra.mxu0 %v263
    %v450 = vpop.f32.mrf.mxu0
    %v451 = vadd.f32 0.0, %v450
    %v452 = vpop.f32.mrf.mxu0
    %v453 = vadd.f32 0.0, %v452
    %454 = vdwg.mxu0
    %455 = vmatpush.bf16.msra.mxu0 0
    %456 = vmatpush.bf16.msra.mxu0 0
    %457 = vmatpush.bf16.msra.mxu0 0
    %458 = vmatpush.bf16.msra.mxu0 0
    %459 = vmatpush.bf16.msra.mxu0 0
    %460 = vmatpush.bf16.msra.mxu0 0
    %461 = vmatpush.bf16.msra.mxu0 0
    %462 = vmatpush.bf16.msra.mxu0 %v273
    %463 = vmatmul.bf16.gmra.mxu0 %v218
    %v464 = vpop.f32.mrf.mxu0
    %v465 = vadd.f32 0.0, %v464
    %v466 = vpop.f32.mrf.mxu0
    %v467 = vadd.f32 0.0, %v466
    %468 = vmatmul.bf16.gmra.mxu0 %v221
    %v469 = vpop.f32.mrf.mxu0
    %v470 = vadd.f32 0.0, %v469
    %v471 = vpop.f32.mrf.mxu0
    %v472 = vadd.f32 0.0, %v471
    %473 = vmatmul.bf16.gmra.mxu0 %v224
    %v474 = vpop.f32.mrf.mxu0
    %v475 = vadd.f32 0.0, %v474
    %v476 = vpop.f32.mrf.mxu0
    %v477 = vadd.f32 0.0, %v476
    %478 = vmatmul.bf16.gmra.mxu0 %v227
    %v479 = vpop.f32.mrf.mxu0
    %v480 = vadd.f32 0.0, %v479
    %v481 = vpop.f32.mrf.mxu0
    %v482 = vadd.f32 0.0, %v481
    %483 = vmatmul.bf16.gmra.mxu0 %v230
    %v484 = vpop.f32.mrf.mxu0
    %v485 = vadd.f32 0.0, %v484
    %v486 = vpop.f32.mrf.mxu0
    %v487 = vadd.f32 0.0, %v486
    %488 = vmatmul.bf16.gmra.mxu0 %v233
    %v489 = vpop.f32.mrf.mxu0
    %v490 = vadd.f32 0.0, %v489
    %v491 = vpop.f32.mrf.mxu0
    %v492 = vadd.f32 0.0, %v491
    %493 = vmatmul.bf16.gmra.mxu0 %v236
    %v494 = vpop.f32.mrf.mxu0
    %v495 = vadd.f32 0.0, %v494
    %v496 = vpop.f32.mrf.mxu0
    %v497 = vadd.f32 0.0, %v496
    %498 = vmatmul.bf16.gmra.mxu0 %v239
    %v499 = vpop.f32.mrf.mxu0
    %v500 = vadd.f32 0.0, %v499
    %v501 = vpop.f32.mrf.mxu0
    %v502 = vadd.f32 0.0, %v501
    %503 = vmatmul.bf16.gmra.mxu0 %v242
    %v504 = vpop.f32.mrf.mxu0
    %v505 = vadd.f32 0.0, %v504
    %v506 = vpop.f32.mrf.mxu0
    %v507 = vadd.f32 0.0, %v506
    %508 = vmatmul.bf16.gmra.mxu0 %v245
    %v509 = vpop.f32.mrf.mxu0
    %v510 = vadd.f32 0.0, %v509
    %v511 = vpop.f32.mrf.mxu0
    %v512 = vadd.f32 0.0, %v511
    %513 = vmatmul.bf16.gmra.mxu0 %v248
    %v514 = vpop.f32.mrf.mxu0
    %v515 = vadd.f32 0.0, %v514
    %v516 = vpop.f32.mrf.mxu0
    %v517 = vadd.f32 0.0, %v516
    %518 = vmatmul.bf16.gmra.mxu0 %v251
    %v519 = vpop.f32.mrf.mxu0
    %v520 = vadd.f32 0.0, %v519
    %v521 = vpop.f32.mrf.mxu0
    %v522 = vadd.f32 0.0, %v521
    %523 = vmatmul.bf16.gmra.mxu0 %v254
    %v524 = vpop.f32.mrf.mxu0
    %v525 = vadd.f32 0.0, %v524
    %v526 = vpop.f32.mrf.mxu0
    %v527 = vadd.f32 0.0, %v526
    %528 = vmatmul.bf16.gmra.mxu0 %v257
    %v529 = vpop.f32.mrf.mxu0
    %v530 = vadd.f32 0.0, %v529
    %v531 = vpop.f32.mrf.mxu0
    %v532 = vadd.f32 0.0, %v531
    %533 = vmatmul.bf16.gmra.mxu0 %v260
    %v534 = vpop.f32.mrf.mxu0
    %v535 = vadd.f32 0.0, %v534
    %v536 = vpop.f32.mrf.mxu0
    %v537 = vadd.f32 0.0, %v536
    %538 = vmatmul.bf16.gmra.mxu0 %v263
    %v539 = vpop.f32.mrf.mxu0
    %v540 = vadd.f32 0.0, %v539
    %v541 = vpop.f32.mrf.mxu0
    %v542 = vadd.f32 0.0, %v541
    %543 = vdwg.mxu0
    %544 = vmatpush.bf16.msra.mxu0 0
    %545 = vmatpush.bf16.msra.mxu0 0
    %546 = vmatpush.bf16.msra.mxu0 0
    %547 = vmatpush.bf16.msra.mxu0 0
    %548 = vmatpush.bf16.msra.mxu0 0
    %549 = vmatpush.bf16.msra.mxu0 0
    %550 = vmatpush.bf16.msra.mxu0 0
    %551 = vmatpush.bf16.msra.mxu0 %v275
    %552 = vmatmul.bf16.gmra.mxu0 %v218
    %v553 = vpop.f32.mrf.mxu0
    %v554 = vadd.f32 0.0, %v553
    %v555 = vpop.f32.mrf.mxu0
    %v556 = vadd.f32 0.0, %v555
    %557 = vmatmul.bf16.gmra.mxu0 %v221
    %v558 = vpop.f32.mrf.mxu0
    %v559 = vadd.f32 0.0, %v558
    %v560 = vpop.f32.mrf.mxu0
    %v561 = vadd.f32 0.0, %v560
    %562 = vmatmul.bf16.gmra.mxu0 %v224
    %v563 = vpop.f32.mrf.mxu0
    %v564 = vadd.f32 0.0, %v563
    %v565 = vpop.f32.mrf.mxu0
    %v566 = vadd.f32 0.0, %v565
    %567 = vmatmul.bf16.gmra.mxu0 %v227
    %v568 = vpop.f32.mrf.mxu0
    %v569 = vadd.f32 0.0, %v568
    %v570 = vpop.f32.mrf.mxu0
    %v571 = vadd.f32 0.0, %v570
    %572 = vmatmul.bf16.gmra.mxu0 %v230
    %v573 = vpop.f32.mrf.mxu0
    %v574 = vadd.f32 0.0, %v573
    %v575 = vpop.f32.mrf.mxu0
    %v576 = vadd.f32 0.0, %v575
    %577 = vmatmul.bf16.gmra.mxu0 %v233
    %v578 = vpop.f32.mrf.mxu0
    %v579 = vadd.f32 0.0, %v578
    %v580 = vpop.f32.mrf.mxu0
    %v581 = vadd.f32 0.0, %v580
    %582 = vmatmul.bf16.gmra.mxu0 %v236
    %v583 = vpop.f32.mrf.mxu0
    %v584 = vadd.f32 0.0, %v583
    %v585 = vpop.f32.mrf.mxu0
    %v586 = vadd.f32 0.0, %v585
    %587 = vmatmul.bf16.gmra.mxu0 %v239
    %v588 = vpop.f32.mrf.mxu0
    %v589 = vadd.f32 0.0, %v588
    %v590 = vpop.f32.mrf.mxu0
    %v591 = vadd.f32 0.0, %v590
    %592 = vmatmul.bf16.gmra.mxu0 %v242
    %v593 = vpop.f32.mrf.mxu0
    %v594 = vadd.f32 0.0, %v593
    %v595 = vpop.f32.mrf.mxu0
    %v596 = vadd.f32 0.0, %v595
    %597 = vmatmul.bf16.gmra.mxu0 %v245
    %v598 = vpop.f32.mrf.mxu0
    %v599 = vadd.f32 0.0, %v598
    %v600 = vpop.f32.mrf.mxu0
    %v601 = vadd.f32 0.0, %v600
    %602 = vmatmul.bf16.gmra.mxu0 %v248
    %v603 = vpop.f32.mrf.mxu0
    %v604 = vadd.f32 0.0, %v603
    %v605 = vpop.f32.mrf.mxu0
    %v606 = vadd.f32 0.0, %v605
    %607 = vmatmul.bf16.gmra.mxu0 %v251
    %v608 = vpop.f32.mrf.mxu0
    %v609 = vadd.f32 0.0, %v608
    %v610 = vpop.f32.mrf.mxu0
    %v611 = vadd.f32 0.0, %v610
    %612 = vmatmul.bf16.gmra.mxu0 %v254
    %v613 = vpop.f32.mrf.mxu0
    %v614 = vadd.f32 0.0, %v613
    %v615 = vpop.f32.mrf.mxu0
    %v616 = vadd.f32 0.0, %v615
    %617 = vmatmul.bf16.gmra.mxu0 %v257
    %v618 = vpop.f32.mrf.mxu0
    %v619 = vadd.f32 0.0, %v618
    %v620 = vpop.f32.mrf.mxu0
    %v621 = vadd.f32 0.0, %v620
    %622 = vmatmul.bf16.gmra.mxu0 %v260
    %v623 = vpop.f32.mrf.mxu0
    %v624 = vadd.f32 0.0, %v623
    %v625 = vpop.f32.mrf.mxu0
    %v626 = vadd.f32 0.0, %v625
    %627 = vmatmul.bf16.gmra.mxu0 %v263
    %v628 = vpop.f32.mrf.mxu0
    %v629 = vadd.f32 0.0, %v628
    %v630 = vpop.f32.mrf.mxu0
    %v631 = vadd.f32 0.0, %v630
    %632 = vdwg.mxu0
    %v635 = vunpack.c.l.b16 %v159
    %v636 = vunpack.c.h.b16 %v159
    %v637 = vunpack.c.l.b16 %v160
    %v638 = vunpack.c.h.b16 %v160
    %v639 = vpack.c.b16 %v635, %v635
    %v640 = vpack.c.b16 %v636, %v636
    %v641 = vpack.c.b16 %v637, %v637
    %v642 = vpack.c.b16 %v638, %v638
    %vm643 = vcmask 64512
    %v645 = vsel %vm643, %v143, 0
    %v648 = vsel %vm643, %v144, 0
    %v651 = vsel %vm643, %v145, 0
    %v654 = vsel %vm643, %v146, 0
    %v657 = vsel %vm643, %v147, 0
    %v660 = vsel %vm643, %v148, 0
    %v663 = vsel %vm643, %v149, 0
    %v666 = vsel %vm643, %v150, 0
    %v669 = vsel %vm643, %v151, 0
    %v672 = vsel %vm643, %v152, 0
    %v675 = vsel %vm643, %v153, 0
    %v678 = vsel %vm643, %v154, 0
    %v681 = vsel %vm643, %v155, 0
    %v684 = vsel %vm643, %v156, 0
    %v687 = vsel %vm643, %v157, 0
    %v690 = vsel %vm643, %v158, 0
    %vm692 = vcmask 1043456
    %v694 = vsel %vm692, %v639, 0
    %v697 = vsel %vm692, %v640, 0
    %v700 = vsel %vm692, %v641, 0
    %v703 = vsel %vm692, %v642, 0
    %705 = vmatpush.bf16.msra.mxu0 0
    %706 = vmatpush.bf16.msra.mxu0 0
    %707 = vmatpush.bf16.msra.mxu0 0
    %708 = vmatpush.bf16.msra.mxu0 0
    %709 = vmatpush.bf16.msra.mxu0 0
    %710 = vmatpush.bf16.msra.mxu0 0
    %711 = vmatpush.bf16.msra.mxu0 0
    %712 = vmatpush.bf16.msra.mxu0 %v694
    %713 = vmatmul.bf16.gmra.mxu0 %v645
    %v714 = vpop.f32.mrf.mxu0
    %v715 = vadd.f32 %v287, %v714
    %v716 = vpop.f32.mrf.mxu0
    %v717 = vadd.f32 %v289, %v716
    %718 = vmatmul.bf16.gmra.mxu0 %v648
    %v719 = vpop.f32.mrf.mxu0
    %v720 = vadd.f32 %v292, %v719
    %v721 = vpop.f32.mrf.mxu0
    %v722 = vadd.f32 %v294, %v721
    %723 = vmatmul.bf16.gmra.mxu0 %v651
    %v724 = vpop.f32.mrf.mxu0
    %v725 = vadd.f32 %v297, %v724
    %v726 = vpop.f32.mrf.mxu0
    %v727 = vadd.f32 %v299, %v726
    %728 = vmatmul.bf16.gmra.mxu0 %v654
    %v729 = vpop.f32.mrf.mxu0
    %v730 = vadd.f32 %v302, %v729
    %v731 = vpop.f32.mrf.mxu0
    %v732 = vadd.f32 %v304, %v731
    %733 = vmatmul.bf16.gmra.mxu0 %v657
    %v734 = vpop.f32.mrf.mxu0
    %v735 = vadd.f32 %v307, %v734
    %v736 = vpop.f32.mrf.mxu0
    %v737 = vadd.f32 %v309, %v736
    %738 = vmatmul.bf16.gmra.mxu0 %v660
    %v739 = vpop.f32.mrf.mxu0
    %v740 = vadd.f32 %v312, %v739
    %v741 = vpop.f32.mrf.mxu0
    %v742 = vadd.f32 %v314, %v741
    %743 = vmatmul.bf16.gmra.mxu0 %v663
    %v744 = vpop.f32.mrf.mxu0
    %v745 = vadd.f32 %v317, %v744
    %v746 = vpop.f32.mrf.mxu0
    %v747 = vadd.f32 %v319, %v746
    %748 = vmatmul.bf16.gmra.mxu0 %v666
    %v749 = vpop.f32.mrf.mxu0
    %v750 = vadd.f32 %v322, %v749
    %v751 = vpop.f32.mrf.mxu0
    %v752 = vadd.f32 %v324, %v751
    %753 = vmatmul.bf16.gmra.mxu0 %v669
    %v754 = vpop.f32.mrf.mxu0
    %v755 = vadd.f32 %v327, %v754
    %v756 = vpop.f32.mrf.mxu0
    %v757 = vadd.f32 %v329, %v756
    %758 = vmatmul.bf16.gmra.mxu0 %v672
    %v759 = vpop.f32.mrf.mxu0
    %v760 = vadd.f32 %v332, %v759
    %v761 = vpop.f32.mrf.mxu0
    %v762 = vadd.f32 %v334, %v761
    %763 = vmatmul.bf16.gmra.mxu0 %v675
    %v764 = vpop.f32.mrf.mxu0
    %v765 = vadd.f32 %v337, %v764
    %v766 = vpop.f32.mrf.mxu0
    %v767 = vadd.f32 %v339, %v766
    %768 = vmatmul.bf16.gmra.mxu0 %v678
    %v769 = vpop.f32.mrf.mxu0
    %v770 = vadd.f32 %v342, %v769
    %v771 = vpop.f32.mrf.mxu0
    %v772 = vadd.f32 %v344, %v771
    %773 = vmatmul.bf16.gmra.mxu0 %v681
    %v774 = vpop.f32.mrf.mxu0
    %v775 = vadd.f32 %v347, %v774
    %v776 = vpop.f32.mrf.mxu0
    %v777 = vadd.f32 %v349, %v776
    %778 = vmatmul.bf16.gmra.mxu0 %v684
    %v779 = vpop.f32.mrf.mxu0
    %v780 = vadd.f32 %v352, %v779
    %v781 = vpop.f32.mrf.mxu0
    %v782 = vadd.f32 %v354, %v781
    %783 = vmatmul.bf16.gmra.mxu0 %v687
    %v784 = vpop.f32.mrf.mxu0
    %v785 = vadd.f32 %v357, %v784
    %v786 = vpop.f32.mrf.mxu0
    %v787 = vadd.f32 %v359, %v786
    %788 = vmatmul.bf16.gmra.mxu0 %v690
    %v789 = vpop.f32.mrf.mxu0
    %v790 = vadd.f32 %v362, %v789
    %v791 = vpop.f32.mrf.mxu0
    %v792 = vadd.f32 %v364, %v791
    %793 = vdwg.mxu0
    %794 = vmatpush.bf16.msra.mxu0 0
    %795 = vmatpush.bf16.msra.mxu0 0
    %796 = vmatpush.bf16.msra.mxu0 0
    %797 = vmatpush.bf16.msra.mxu0 0
    %798 = vmatpush.bf16.msra.mxu0 0
    %799 = vmatpush.bf16.msra.mxu0 0
    %800 = vmatpush.bf16.msra.mxu0 0
    %801 = vmatpush.bf16.msra.mxu0 %v697
    %802 = vmatmul.bf16.gmra.mxu0 %v645
    %v803 = vpop.f32.mrf.mxu0
    %v804 = vadd.f32 %v376, %v803
    %v805 = vpop.f32.mrf.mxu0
    %v806 = vadd.f32 %v378, %v805
    %807 = vmatmul.bf16.gmra.mxu0 %v648
    %v808 = vpop.f32.mrf.mxu0
    %v809 = vadd.f32 %v381, %v808
    %v810 = vpop.f32.mrf.mxu0
    %v811 = vadd.f32 %v383, %v810
    %812 = vmatmul.bf16.gmra.mxu0 %v651
    %v813 = vpop.f32.mrf.mxu0
    %v814 = vadd.f32 %v386, %v813
    %v815 = vpop.f32.mrf.mxu0
    %v816 = vadd.f32 %v388, %v815
    %817 = vmatmul.bf16.gmra.mxu0 %v654
    %v818 = vpop.f32.mrf.mxu0
    %v819 = vadd.f32 %v391, %v818
    %v820 = vpop.f32.mrf.mxu0
    %v821 = vadd.f32 %v393, %v820
    %822 = vmatmul.bf16.gmra.mxu0 %v657
    %v823 = vpop.f32.mrf.mxu0
    %v824 = vadd.f32 %v396, %v823
    %v825 = vpop.f32.mrf.mxu0
    %v826 = vadd.f32 %v398, %v825
    %827 = vmatmul.bf16.gmra.mxu0 %v660
    %v828 = vpop.f32.mrf.mxu0
    %v829 = vadd.f32 %v401, %v828
    %v830 = vpop.f32.mrf.mxu0
    %v831 = vadd.f32 %v403, %v830
    %832 = vmatmul.bf16.gmra.mxu0 %v663
    %v833 = vpop.f32.mrf.mxu0
    %v834 = vadd.f32 %v406, %v833
    %v835 = vpop.f32.mrf.mxu0
    %v836 = vadd.f32 %v408, %v835
    %837 = vmatmul.bf16.gmra.mxu0 %v666
    %v838 = vpop.f32.mrf.mxu0
    %v839 = vadd.f32 %v411, %v838
    %v840 = vpop.f32.mrf.mxu0
    %v841 = vadd.f32 %v413, %v840
    %842 = vmatmul.bf16.gmra.mxu0 %v669
    %v843 = vpop.f32.mrf.mxu0
    %v844 = vadd.f32 %v416, %v843
    %v845 = vpop.f32.mrf.mxu0
    %v846 = vadd.f32 %v418, %v845
    %847 = vmatmul.bf16.gmra.mxu0 %v672
    %v848 = vpop.f32.mrf.mxu0
    %v849 = vadd.f32 %v421, %v848
    %v850 = vpop.f32.mrf.mxu0
    %v851 = vadd.f32 %v423, %v850
    %852 = vmatmul.bf16.gmra.mxu0 %v675
    %v853 = vpop.f32.mrf.mxu0
    %v854 = vadd.f32 %v426, %v853
    %v855 = vpop.f32.mrf.mxu0
    %v856 = vadd.f32 %v428, %v855
    %857 = vmatmul.bf16.gmra.mxu0 %v678
    %v858 = vpop.f32.mrf.mxu0
    %v859 = vadd.f32 %v431, %v858
    %v860 = vpop.f32.mrf.mxu0
    %v861 = vadd.f32 %v433, %v860
    %862 = vmatmul.bf16.gmra.mxu0 %v681
    %v863 = vpop.f32.mrf.mxu0
    %v864 = vadd.f32 %v436, %v863
    %v865 = vpop.f32.mrf.mxu0
    %v866 = vadd.f32 %v438, %v865
    %867 = vmatmul.bf16.gmra.mxu0 %v684
    %v868 = vpop.f32.mrf.mxu0
    %v869 = vadd.f32 %v441, %v868
    %v870 = vpop.f32.mrf.mxu0
    %v871 = vadd.f32 %v443, %v870
    %872 = vmatmul.bf16.gmra.mxu0 %v687
    %v873 = vpop.f32.mrf.mxu0
    %v874 = vadd.f32 %v446, %v873
    %v875 = vpop.f32.mrf.mxu0
    %v876 = vadd.f32 %v448, %v875
    %877 = vmatmul.bf16.gmra.mxu0 %v690
    %v878 = vpop.f32.mrf.mxu0
    %v879 = vadd.f32 %v451, %v878
    %v880 = vpop.f32.mrf.mxu0
    %v881 = vadd.f32 %v453, %v880
    %882 = vdwg.mxu0
    %883 = vmatpush.bf16.msra.mxu0 0
    %884 = vmatpush.bf16.msra.mxu0 0
    %885 = vmatpush.bf16.msra.mxu0 0
    %886 = vmatpush.bf16.msra.mxu0 0
    %887 = vmatpush.bf16.msra.mxu0 0
    %888 = vmatpush.bf16.msra.mxu0 0
    %889 = vmatpush.bf16.msra.mxu0 0
    %890 = vmatpush.bf16.msra.mxu0 %v700
    %891 = vmatmul.bf16.gmra.mxu0 %v645
    %v892 = vpop.f32.mrf.mxu0
    %v893 = vadd.f32 %v465, %v892
    %v894 = vpop.f32.mrf.mxu0
    %v895 = vadd.f32 %v467, %v894
    %896 = vmatmul.bf16.gmra.mxu0 %v648
    %v897 = vpop.f32.mrf.mxu0
    %v898 = vadd.f32 %v470, %v897
    %v899 = vpop.f32.mrf.mxu0
    %v900 = vadd.f32 %v472, %v899
    %901 = vmatmul.bf16.gmra.mxu0 %v651
    %v902 = vpop.f32.mrf.mxu0
    %v903 = vadd.f32 %v475, %v902
    %v904 = vpop.f32.mrf.mxu0
    %v905 = vadd.f32 %v477, %v904
    %906 = vmatmul.bf16.gmra.mxu0 %v654
    %v907 = vpop.f32.mrf.mxu0
    %v908 = vadd.f32 %v480, %v907
    %v909 = vpop.f32.mrf.mxu0
    %v910 = vadd.f32 %v482, %v909
    %911 = vmatmul.bf16.gmra.mxu0 %v657
    %v912 = vpop.f32.mrf.mxu0
    %v913 = vadd.f32 %v485, %v912
    %v914 = vpop.f32.mrf.mxu0
    %v915 = vadd.f32 %v487, %v914
    %916 = vmatmul.bf16.gmra.mxu0 %v660
    %v917 = vpop.f32.mrf.mxu0
    %v918 = vadd.f32 %v490, %v917
    %v919 = vpop.f32.mrf.mxu0
    %v920 = vadd.f32 %v492, %v919
    %921 = vmatmul.bf16.gmra.mxu0 %v663
    %v922 = vpop.f32.mrf.mxu0
    %v923 = vadd.f32 %v495, %v922
    %v924 = vpop.f32.mrf.mxu0
    %v925 = vadd.f32 %v497, %v924
    %926 = vmatmul.bf16.gmra.mxu0 %v666
    %v927 = vpop.f32.mrf.mxu0
    %v928 = vadd.f32 %v500, %v927
    %v929 = vpop.f32.mrf.mxu0
    %v930 = vadd.f32 %v502, %v929
    %931 = vmatmul.bf16.gmra.mxu0 %v669
    %v932 = vpop.f32.mrf.mxu0
    %v933 = vadd.f32 %v505, %v932
    %v934 = vpop.f32.mrf.mxu0
    %v935 = vadd.f32 %v507, %v934
    %936 = vmatmul.bf16.gmra.mxu0 %v672
    %v937 = vpop.f32.mrf.mxu0
    %v938 = vadd.f32 %v510, %v937
    %v939 = vpop.f32.mrf.mxu0
    %v940 = vadd.f32 %v512, %v939
    %941 = vmatmul.bf16.gmra.mxu0 %v675
    %v942 = vpop.f32.mrf.mxu0
    %v943 = vadd.f32 %v515, %v942
    %v944 = vpop.f32.mrf.mxu0
    %v945 = vadd.f32 %v517, %v944
    %946 = vmatmul.bf16.gmra.mxu0 %v678
    %v947 = vpop.f32.mrf.mxu0
    %v948 = vadd.f32 %v520, %v947
    %v949 = vpop.f32.mrf.mxu0
    %v950 = vadd.f32 %v522, %v949
    %951 = vmatmul.bf16.gmra.mxu0 %v681
    %v952 = vpop.f32.mrf.mxu0
    %v953 = vadd.f32 %v525, %v952
    %v954 = vpop.f32.mrf.mxu0
    %v955 = vadd.f32 %v527, %v954
    %956 = vmatmul.bf16.gmra.mxu0 %v684
    %v957 = vpop.f32.mrf.mxu0
    %v958 = vadd.f32 %v530, %v957
    %v959 = vpop.f32.mrf.mxu0
    %v960 = vadd.f32 %v532, %v959
    %961 = vmatmul.bf16.gmra.mxu0 %v687
    %v962 = vpop.f32.mrf.mxu0
    %v963 = vadd.f32 %v535, %v962
    %v964 = vpop.f32.mrf.mxu0
    %v965 = vadd.f32 %v537, %v964
    %966 = vmatmul.bf16.gmra.mxu0 %v690
    %v967 = vpop.f32.mrf.mxu0
    %v968 = vadd.f32 %v540, %v967
    %v969 = vpop.f32.mrf.mxu0
    %v970 = vadd.f32 %v542, %v969
    %971 = vdwg.mxu0
    %972 = vmatpush.bf16.msra.mxu0 0
    %973 = vmatpush.bf16.msra.mxu0 0
    %974 = vmatpush.bf16.msra.mxu0 0
    %975 = vmatpush.bf16.msra.mxu0 0
    %976 = vmatpush.bf16.msra.mxu0 0
    %977 = vmatpush.bf16.msra.mxu0 0
    %978 = vmatpush.bf16.msra.mxu0 0
    %979 = vmatpush.bf16.msra.mxu0 %v703
    %980 = vmatmul.bf16.gmra.mxu0 %v645
    %v981 = vpop.f32.mrf.mxu0
    %v982 = vadd.f32 %v554, %v981
    %v983 = vpop.f32.mrf.mxu0
    %v984 = vadd.f32 %v556, %v983
    %985 = vmatmul.bf16.gmra.mxu0 %v648
    %v986 = vpop.f32.mrf.mxu0
    %v987 = vadd.f32 %v559, %v986
    %v988 = vpop.f32.mrf.mxu0
    %v989 = vadd.f32 %v561, %v988
    %990 = vmatmul.bf16.gmra.mxu0 %v651
    %v991 = vpop.f32.mrf.mxu0
    %v992 = vadd.f32 %v564, %v991
    %v993 = vpop.f32.mrf.mxu0
    %v994 = vadd.f32 %v566, %v993
    %995 = vmatmul.bf16.gmra.mxu0 %v654
    %v996 = vpop.f32.mrf.mxu0
    %v997 = vadd.f32 %v569, %v996
    %v998 = vpop.f32.mrf.mxu0
    %v999 = vadd.f32 %v571, %v998
    %1000 = vmatmul.bf16.gmra.mxu0 %v657
    %v1001 = vpop.f32.mrf.mxu0
    %v1002 = vadd.f32 %v574, %v1001
    %v1003 = vpop.f32.mrf.mxu0
    %v1004 = vadd.f32 %v576, %v1003
    %1005 = vmatmul.bf16.gmra.mxu0 %v660
    %v1006 = vpop.f32.mrf.mxu0
    %v1007 = vadd.f32 %v579, %v1006
    %v1008 = vpop.f32.mrf.mxu0
    %v1009 = vadd.f32 %v581, %v1008
    %1010 = vmatmul.bf16.gmra.mxu0 %v663
    %v1011 = vpop.f32.mrf.mxu0
    %v1012 = vadd.f32 %v584, %v1011
    %v1013 = vpop.f32.mrf.mxu0
    %v1014 = vadd.f32 %v586, %v1013
    %1015 = vmatmul.bf16.gmra.mxu0 %v666
    %v1016 = vpop.f32.mrf.mxu0
    %v1017 = vadd.f32 %v589, %v1016
    %v1018 = vpop.f32.mrf.mxu0
    %v1019 = vadd.f32 %v591, %v1018
    %1020 = vmatmul.bf16.gmra.mxu0 %v669
    %v1021 = vpop.f32.mrf.mxu0
    %v1022 = vadd.f32 %v594, %v1021
    %v1023 = vpop.f32.mrf.mxu0
    %v1024 = vadd.f32 %v596, %v1023
    %1025 = vmatmul.bf16.gmra.mxu0 %v672
    %v1026 = vpop.f32.mrf.mxu0
    %v1027 = vadd.f32 %v599, %v1026
    %v1028 = vpop.f32.mrf.mxu0
    %v1029 = vadd.f32 %v601, %v1028
    %1030 = vmatmul.bf16.gmra.mxu0 %v675
    %v1031 = vpop.f32.mrf.mxu0
    %v1032 = vadd.f32 %v604, %v1031
    %v1033 = vpop.f32.mrf.mxu0
    %v1034 = vadd.f32 %v606, %v1033
    %1035 = vmatmul.bf16.gmra.mxu0 %v678
    %v1036 = vpop.f32.mrf.mxu0
    %v1037 = vadd.f32 %v609, %v1036
    %v1038 = vpop.f32.mrf.mxu0
    %v1039 = vadd.f32 %v611, %v1038
    %1040 = vmatmul.bf16.gmra.mxu0 %v681
    %v1041 = vpop.f32.mrf.mxu0
    %v1042 = vadd.f32 %v614, %v1041
    %v1043 = vpop.f32.mrf.mxu0
    %v1044 = vadd.f32 %v616, %v1043
    %1045 = vmatmul.bf16.gmra.mxu0 %v684
    %v1046 = vpop.f32.mrf.mxu0
    %v1047 = vadd.f32 %v619, %v1046
    %v1048 = vpop.f32.mrf.mxu0
    %v1049 = vadd.f32 %v621, %v1048
    %1050 = vmatmul.bf16.gmra.mxu0 %v687
    %v1051 = vpop.f32.mrf.mxu0
    %v1052 = vadd.f32 %v624, %v1051
    %v1053 = vpop.f32.mrf.mxu0
    %v1054 = vadd.f32 %v626, %v1053
    %1055 = vmatmul.bf16.gmra.mxu0 %v690
    %v1056 = vpop.f32.mrf.mxu0
    %v1057 = vadd.f32 %v629, %v1056
    %v1058 = vpop.f32.mrf.mxu0
    %v1059 = vadd.f32 %v631, %v1058
    %1060 = vdwg.mxu0
    %v1061 = vld [vmem:[%s4] sm:$0xf]
    %v1063 = vperm.slane %v1061, 0
    %v1064 = vperm.slane %v1061, 1
    %v1065 = vperm.slane %v1061, 2
    %v1066 = vperm.slane %v1061, 3
    %v1071 = vadd.f32 %v715, %v1063
    %v1072 = vadd.f32 %v804, %v1064
    %v1073 = vadd.f32 %v893, %v1065
    %v1074 = vadd.f32 %v982, %v1066
    %v1075 = vadd.f32 %v717, %v1063
    %v1076 = vadd.f32 %v806, %v1064
    %v1077 = vadd.f32 %v895, %v1065
    %v1078 = vadd.f32 %v984, %v1066
    %v1079 = vadd.f32 %v720, %v1063
    %v1080 = vadd.f32 %v809, %v1064
    %v1081 = vadd.f32 %v898, %v1065
    %v1082 = vadd.f32 %v987, %v1066
    %v1083 = vadd.f32 %v722, %v1063
    %v1084 = vadd.f32 %v811, %v1064
    %v1085 = vadd.f32 %v900, %v1065
    %v1086 = vadd.f32 %v989, %v1066
    %v1087 = vadd.f32 %v725, %v1063
    %v1088 = vadd.f32 %v814, %v1064
    %v1089 = vadd.f32 %v903, %v1065
    %v1090 = vadd.f32 %v992, %v1066
    %v1091 = vadd.f32 %v727, %v1063
    %v1092 = vadd.f32 %v816, %v1064
    %v1093 = vadd.f32 %v905, %v1065
    %v1094 = vadd.f32 %v994, %v1066
    %v1095 = vadd.f32 %v730, %v1063
    %v1096 = vadd.f32 %v819, %v1064
    %v1097 = vadd.f32 %v908, %v1065
    %v1098 = vadd.f32 %v997, %v1066
    %v1099 = vadd.f32 %v732, %v1063
    %v1100 = vadd.f32 %v821, %v1064
    %v1101 = vadd.f32 %v910, %v1065
    %v1102 = vadd.f32 %v999, %v1066
    %v1103 = vadd.f32 %v735, %v1063
    %v1104 = vadd.f32 %v824, %v1064
    %v1105 = vadd.f32 %v913, %v1065
    %v1106 = vadd.f32 %v1002, %v1066
    %v1107 = vadd.f32 %v737, %v1063
    %v1108 = vadd.f32 %v826, %v1064
    %v1109 = vadd.f32 %v915, %v1065
    %v1110 = vadd.f32 %v1004, %v1066
    %v1111 = vadd.f32 %v740, %v1063
    %v1112 = vadd.f32 %v829, %v1064
    %v1113 = vadd.f32 %v918, %v1065
    %v1114 = vadd.f32 %v1007, %v1066
    %v1115 = vadd.f32 %v742, %v1063
    %v1116 = vadd.f32 %v831, %v1064
    %v1117 = vadd.f32 %v920, %v1065
    %v1118 = vadd.f32 %v1009, %v1066
    %v1119 = vadd.f32 %v745, %v1063
    %v1120 = vadd.f32 %v834, %v1064
    %v1121 = vadd.f32 %v923, %v1065
    %v1122 = vadd.f32 %v1012, %v1066
    %v1123 = vadd.f32 %v747, %v1063
    %v1124 = vadd.f32 %v836, %v1064
    %v1125 = vadd.f32 %v925, %v1065
    %v1126 = vadd.f32 %v1014, %v1066
    %v1127 = vadd.f32 %v750, %v1063
    %v1128 = vadd.f32 %v839, %v1064
    %v1129 = vadd.f32 %v928, %v1065
    %v1130 = vadd.f32 %v1017, %v1066
    %v1131 = vadd.f32 %v752, %v1063
    %v1132 = vadd.f32 %v841, %v1064
    %v1133 = vadd.f32 %v930, %v1065
    %v1134 = vadd.f32 %v1019, %v1066
    %v1135 = vadd.f32 %v755, %v1063
    %v1136 = vadd.f32 %v844, %v1064
    %v1137 = vadd.f32 %v933, %v1065
    %v1138 = vadd.f32 %v1022, %v1066
    %v1139 = vadd.f32 %v757, %v1063
    %v1140 = vadd.f32 %v846, %v1064
    %v1141 = vadd.f32 %v935, %v1065
    %v1142 = vadd.f32 %v1024, %v1066
    %v1143 = vadd.f32 %v760, %v1063
    %v1144 = vadd.f32 %v849, %v1064
    %v1145 = vadd.f32 %v938, %v1065
    %v1146 = vadd.f32 %v1027, %v1066
    %v1147 = vadd.f32 %v762, %v1063
    %v1148 = vadd.f32 %v851, %v1064
    %v1149 = vadd.f32 %v940, %v1065
    %v1150 = vadd.f32 %v1029, %v1066
    %v1151 = vadd.f32 %v765, %v1063
    %v1152 = vadd.f32 %v854, %v1064
    %v1153 = vadd.f32 %v943, %v1065
    %v1154 = vadd.f32 %v1032, %v1066
    %v1155 = vadd.f32 %v767, %v1063
    %v1156 = vadd.f32 %v856, %v1064
    %v1157 = vadd.f32 %v945, %v1065
    %v1158 = vadd.f32 %v1034, %v1066
    %v1159 = vadd.f32 %v770, %v1063
    %v1160 = vadd.f32 %v859, %v1064
    %v1161 = vadd.f32 %v948, %v1065
    %v1162 = vadd.f32 %v1037, %v1066
    %v1163 = vadd.f32 %v772, %v1063
    %v1164 = vadd.f32 %v861, %v1064
    %v1165 = vadd.f32 %v950, %v1065
    %v1166 = vadd.f32 %v1039, %v1066
    %v1167 = vadd.f32 %v775, %v1063
    %v1168 = vadd.f32 %v864, %v1064
    %v1169 = vadd.f32 %v953, %v1065
    %v1170 = vadd.f32 %v1042, %v1066
    %v1171 = vadd.f32 %v777, %v1063
    %v1172 = vadd.f32 %v866, %v1064
    %v1173 = vadd.f32 %v955, %v1065
    %v1174 = vadd.f32 %v1044, %v1066
    %v1175 = vadd.f32 %v780, %v1063
    %v1176 = vadd.f32 %v869, %v1064
    %v1177 = vadd.f32 %v958, %v1065
    %v1178 = vadd.f32 %v1047, %v1066
    %v1179 = vadd.f32 %v782, %v1063
    %v1180 = vadd.f32 %v871, %v1064
    %v1181 = vadd.f32 %v960, %v1065
    %v1182 = vadd.f32 %v1049, %v1066
    %v1183 = vadd.f32 %v785, %v1063
    %v1184 = vadd.f32 %v874, %v1064
    %v1185 = vadd.f32 %v963, %v1065
    %v1186 = vadd.f32 %v1052, %v1066
    %v1187 = vadd.f32 %v787, %v1063
    %v1188 = vadd.f32 %v876, %v1064
    %v1189 = vadd.f32 %v965, %v1065
    %v1190 = vadd.f32 %v1054, %v1066
    %v1191 = vadd.f32 %v790, %v1063
    %v1192 = vadd.f32 %v879, %v1064
    %v1193 = vadd.f32 %v968, %v1065
    %v1194 = vadd.f32 %v1057, %v1066
    %v1195 = vadd.f32 %v792, %v1063
    %v1196 = vadd.f32 %v881, %v1064
    %v1197 = vadd.f32 %v970, %v1065
    %v1198 = vadd.f32 %v1059, %v1066
    %v1199 = vmax.f32 %v1071, 0.0
    %v1200 = vmax.f32 %v1072, 0.0
    %v1201 = vmax.f32 %v1073, 0.0
    %v1202 = vmax.f32 %v1074, 0.0
    %v1203 = vmax.f32 %v1075, 0.0
    %v1204 = vmax.f32 %v1076, 0.0
    %v1205 = vmax.f32 %v1077, 0.0
    %v1206 = vmax.f32 %v1078, 0.0
    %v1207 = vmax.f32 %v1079, 0.0
    %v1208 = vmax.f32 %v1080, 0.0
    %v1209 = vmax.f32 %v1081, 0.0
    %v1210 = vmax.f32 %v1082, 0.0
    %v1211 = vmax.f32 %v1083, 0.0
    %v1212 = vmax.f32 %v1084, 0.0
    %v1213 = vmax.f32 %v1085, 0.0
    %v1214 = vmax.f32 %v1086, 0.0
    %v1215 = vmax.f32 %v1087, 0.0
    %v1216 = vmax.f32 %v1088, 0.0
    %v1217 = vmax.f32 %v1089, 0.0
    %v1218 = vmax.f32 %v1090, 0.0
    %v1219 = vmax.f32 %v1091, 0.0
    %v1220 = vmax.f32 %v1092, 0.0
    %v1221 = vmax.f32 %v1093, 0.0
    %v1222 = vmax.f32 %v1094, 0.0
    %v1223 = vmax.f32 %v1095, 0.0
    %v1224 = vmax.f32 %v1096, 0.0
    %v1225 = vmax.f32 %v1097, 0.0
    %v1226 = vmax.f32 %v1098, 0.0
    %v1227 = vmax.f32 %v1099, 0.0
    %v1228 = vmax.f32 %v1100, 0.0
    %v1229 = vmax.f32 %v1101, 0.0
    %v1230 = vmax.f32 %v1102, 0.0
    %v1231 = vmax.f32 %v1103, 0.0
    %v1232 = vmax.f32 %v1104, 0.0
    %v1233 = vmax.f32 %v1105, 0.0
    %v1234 = vmax.f32 %v1106, 0.0
    %v1235 = vmax.f32 %v1107, 0.0
    %v1236 = vmax.f32 %v1108, 0.0
    %v1237 = vmax.f32 %v1109, 0.0
    %v1238 = vmax.f32 %v1110, 0.0
    %v1239 = vmax.f32 %v1111, 0.0
    %v1240 = vmax.f32 %v1112, 0.0
    %v1241 = vmax.f32 %v1113, 0.0
    %v1242 = vmax.f32 %v1114, 0.0
    %v1243 = vmax.f32 %v1115, 0.0
    %v1244 = vmax.f32 %v1116, 0.0
    %v1245 = vmax.f32 %v1117, 0.0
    %v1246 = vmax.f32 %v1118, 0.0
    %v1247 = vmax.f32 %v1119, 0.0
    %v1248 = vmax.f32 %v1120, 0.0
    %v1249 = vmax.f32 %v1121, 0.0
    %v1250 = vmax.f32 %v1122, 0.0
    %v1251 = vmax.f32 %v1123, 0.0
    %v1252 = vmax.f32 %v1124, 0.0
    %v1253 = vmax.f32 %v1125, 0.0
    %v1254 = vmax.f32 %v1126, 0.0
    %v1255 = vmax.f32 %v1127, 0.0
    %v1256 = vmax.f32 %v1128, 0.0
    %v1257 = vmax.f32 %v1129, 0.0
    %v1258 = vmax.f32 %v1130, 0.0
    %v1259 = vmax.f32 %v1131, 0.0
    %v1260 = vmax.f32 %v1132, 0.0
    %v1261 = vmax.f32 %v1133, 0.0
    %v1262 = vmax.f32 %v1134, 0.0
    %v1263 = vmax.f32 %v1135, 0.0
    %v1264 = vmax.f32 %v1136, 0.0
    %v1265 = vmax.f32 %v1137, 0.0
    %v1266 = vmax.f32 %v1138, 0.0
    %v1267 = vmax.f32 %v1139, 0.0
    %v1268 = vmax.f32 %v1140, 0.0
    %v1269 = vmax.f32 %v1141, 0.0
    %v1270 = vmax.f32 %v1142, 0.0
    %v1271 = vmax.f32 %v1143, 0.0
    %v1272 = vmax.f32 %v1144, 0.0
    %v1273 = vmax.f32 %v1145, 0.0
    %v1274 = vmax.f32 %v1146, 0.0
    %v1275 = vmax.f32 %v1147, 0.0
    %v1276 = vmax.f32 %v1148, 0.0
    %v1277 = vmax.f32 %v1149, 0.0
    %v1278 = vmax.f32 %v1150, 0.0
    %v1279 = vmax.f32 %v1151, 0.0
    %v1280 = vmax.f32 %v1152, 0.0
    %v1281 = vmax.f32 %v1153, 0.0
    %v1282 = vmax.f32 %v1154, 0.0
    %v1283 = vmax.f32 %v1155, 0.0
    %v1284 = vmax.f32 %v1156, 0.0
    %v1285 = vmax.f32 %v1157, 0.0
    %v1286 = vmax.f32 %v1158, 0.0
    %v1287 = vmax.f32 %v1159, 0.0
    %v1288 = vmax.f32 %v1160, 0.0
    %v1289 = vmax.f32 %v1161, 0.0
    %v1290 = vmax.f32 %v1162, 0.0
    %v1291 = vmax.f32 %v1163, 0.0
    %v1292 = vmax.f32 %v1164, 0.0
    %v1293 = vmax.f32 %v1165, 0.0
    %v1294 = vmax.f32 %v1166, 0.0
    %v1295 = vmax.f32 %v1167, 0.0
    %v1296 = vmax.f32 %v1168, 0.0
    %v1297 = vmax.f32 %v1169, 0.0
    %v1298 = vmax.f32 %v1170, 0.0
    %v1299 = vmax.f32 %v1171, 0.0
    %v1300 = vmax.f32 %v1172, 0.0
    %v1301 = vmax.f32 %v1173, 0.0
    %v1302 = vmax.f32 %v1174, 0.0
    %v1303 = vmax.f32 %v1175, 0.0
    %v1304 = vmax.f32 %v1176, 0.0
    %v1305 = vmax.f32 %v1177, 0.0
    %v1306 = vmax.f32 %v1178, 0.0
    %v1307 = vmax.f32 %v1179, 0.0
    %v1308 = vmax.f32 %v1180, 0.0
    %v1309 = vmax.f32 %v1181, 0.0
    %v1310 = vmax.f32 %v1182, 0.0
    %v1311 = vmax.f32 %v1183, 0.0
    %v1312 = vmax.f32 %v1184, 0.0
    %v1313 = vmax.f32 %v1185, 0.0
    %v1314 = vmax.f32 %v1186, 0.0
    %v1315 = vmax.f32 %v1187, 0.0
    %v1316 = vmax.f32 %v1188, 0.0
    %v1317 = vmax.f32 %v1189, 0.0
    %v1318 = vmax.f32 %v1190, 0.0
    %v1319 = vmax.f32 %v1191, 0.0
    %v1320 = vmax.f32 %v1192, 0.0
    %v1321 = vmax.f32 %v1193, 0.0
    %v1322 = vmax.f32 %v1194, 0.0
    %v1323 = vmax.f32 %v1195, 0.0
    %v1324 = vmax.f32 %v1196, 0.0
    %v1325 = vmax.f32 %v1197, 0.0
    %v1326 = vmax.f32 %v1198, 0.0
    %v1327 = vpack.c.bf16 %v1203, %v1199
    %v1328 = vpack.c.bf16 %v1204, %v1200
    %v1329 = vpack.c.bf16 %v1205, %v1201
    %v1330 = vpack.c.bf16 %v1206, %v1202
    %v1331 = vpack.c.bf16 %v1211, %v1207
    %v1332 = vpack.c.bf16 %v1212, %v1208
    %v1333 = vpack.c.bf16 %v1213, %v1209
    %v1334 = vpack.c.bf16 %v1214, %v1210
    %v1335 = vpack.c.bf16 %v1219, %v1215
    %v1336 = vpack.c.bf16 %v1220, %v1216
    %v1337 = vpack.c.bf16 %v1221, %v1217
    %v1338 = vpack.c.bf16 %v1222, %v1218
    %v1339 = vpack.c.bf16 %v1227, %v1223
    %v1340 = vpack.c.bf16 %v1228, %v1224
    %v1341 = vpack.c.bf16 %v1229, %v1225
    %v1342 = vpack.c.bf16 %v1230, %v1226
    %v1343 = vpack.c.bf16 %v1235, %v1231
    %v1344 = vpack.c.bf16 %v1236, %v1232
    %v1345 = vpack.c.bf16 %v1237, %v1233
    %v1346 = vpack.c.bf16 %v1238, %v1234
    %v1347 = vpack.c.bf16 %v1243, %v1239
    %v1348 = vpack.c.bf16 %v1244, %v1240
    %v1349 = vpack.c.bf16 %v1245, %v1241
    %v1350 = vpack.c.bf16 %v1246, %v1242
    %v1351 = vpack.c.bf16 %v1251, %v1247
    %v1352 = vpack.c.bf16 %v1252, %v1248
    %v1353 = vpack.c.bf16 %v1253, %v1249
    %v1354 = vpack.c.bf16 %v1254, %v1250
    %v1355 = vpack.c.bf16 %v1259, %v1255
    %v1356 = vpack.c.bf16 %v1260, %v1256
    %v1357 = vpack.c.bf16 %v1261, %v1257
    %v1358 = vpack.c.bf16 %v1262, %v1258
    %v1359 = vpack.c.bf16 %v1267, %v1263
    %v1360 = vpack.c.bf16 %v1268, %v1264
    %v1361 = vpack.c.bf16 %v1269, %v1265
    %v1362 = vpack.c.bf16 %v1270, %v1266
    %v1363 = vpack.c.bf16 %v1275, %v1271
    %v1364 = vpack.c.bf16 %v1276, %v1272
    %v1365 = vpack.c.bf16 %v1277, %v1273
    %v1366 = vpack.c.bf16 %v1278, %v1274
    %v1367 = vpack.c.bf16 %v1283, %v1279
    %v1368 = vpack.c.bf16 %v1284, %v1280
    %v1369 = vpack.c.bf16 %v1285, %v1281
    %v1370 = vpack.c.bf16 %v1286, %v1282
    %v1371 = vpack.c.bf16 %v1291, %v1287
    %v1372 = vpack.c.bf16 %v1292, %v1288
    %v1373 = vpack.c.bf16 %v1293, %v1289
    %v1374 = vpack.c.bf16 %v1294, %v1290
    %v1375 = vpack.c.bf16 %v1299, %v1295
    %v1376 = vpack.c.bf16 %v1300, %v1296
    %v1377 = vpack.c.bf16 %v1301, %v1297
    %v1378 = vpack.c.bf16 %v1302, %v1298
    %v1379 = vpack.c.bf16 %v1307, %v1303
    %v1380 = vpack.c.bf16 %v1308, %v1304
    %v1381 = vpack.c.bf16 %v1309, %v1305
    %v1382 = vpack.c.bf16 %v1310, %v1306
    %v1383 = vpack.c.bf16 %v1315, %v1311
    %v1384 = vpack.c.bf16 %v1316, %v1312
    %v1385 = vpack.c.bf16 %v1317, %v1313
    %v1386 = vpack.c.bf16 %v1318, %v1314
    %v1387 = vpack.c.bf16 %v1323, %v1319
    %v1388 = vpack.c.bf16 %v1324, %v1320
    %v1389 = vpack.c.bf16 %v1325, %v1321
    %v1390 = vpack.c.bf16 %v1326, %v1322
    %v1391 = vld [vmem:[%s5] sm:$0xff]
    %v1392 = vld [vmem:[%s5 + $0x8] sm:$0xff]
    %v1393 = vld [vmem:[%s5 + $0x10] sm:$0xff]
    %v1394 = vld [vmem:[%s5 + $0x18] sm:$0xff]
    %v1395 = vld [vmem:[%s5 + $0x20] sm:$0xff]
    %v1396 = vld [vmem:[%s5 + $0x28] sm:$0xff]
    %v1397 = vld [vmem:[%s5 + $0x30] sm:$0xff]
    %v1398 = vld [vmem:[%s5 + $0x38] sm:$0xff]
    %v1399 = vld [vmem:[%s5 + $0x40] sm:$0xff]
    %v1400 = vld [vmem:[%s5 + $0x48] sm:$0xff]
    %v1401 = vld [vmem:[%s5 + $0x50] sm:$0xff]
    %v1402 = vld [vmem:[%s5 + $0x58] sm:$0xff]
    %v1403 = vld [vmem:[%s5 + $0x60] sm:$0xff]
    %v1404 = vld [vmem:[%s5 + $0x68] sm:$0xff]
    %v1405 = vld [vmem:[%s5 + $0x70] sm:$0xff]
    %v1406 = vld [vmem:[%s5 + $0x78] sm:$0xff]
    %v1407 = vld [vmem:[%s5 + $0x80] sm:$0xff]
    %v1408 = vld [vmem:[%s5 + $0x88] sm:$0xff]
    %v1409 = vld [vmem:[%s5 + $0x90] sm:$0xff]
    %v1410 = vld [vmem:[%s5 + $0x98] sm:$0xff]
    %v1411 = vld [vmem:[%s5 + $0xa0] sm:$0xff]
    %v1412 = vld [vmem:[%s5 + $0xa8] sm:$0xff]
    %v1413 = vld [vmem:[%s5 + $0xb0] sm:$0xff]
    %v1414 = vld [vmem:[%s5 + $0xb8] sm:$0xff]
    %v1415 = vld [vmem:[%s5 + $0xc0] sm:$0xff]
    %v1416 = vld [vmem:[%s5 + $0xc8] sm:$0xff]
    %v1417 = vld [vmem:[%s5 + $0xd0] sm:$0xff]
    %v1418 = vld [vmem:[%s5 + $0xd8] sm:$0xff]
    %v1419 = vld [vmem:[%s5 + $0xe0] sm:$0xff]
    %v1420 = vld [vmem:[%s5 + $0xe8] sm:$0xff]
    %v1421 = vld [vmem:[%s5 + $0xf0] sm:$0xff]
    %v1422 = vld [vmem:[%s5 + $0xf8] sm:$0xff]
    %v1423 = vld [vmem:[%s5 + $0x100] sm:$0xff]
    %v1424 = vld [vmem:[%s5 + $0x108] sm:$0xff]
    %v1425 = vld [vmem:[%s5 + $0x110] sm:$0xff]
    %v1426 = vld [vmem:[%s5 + $0x118] sm:$0xff]
    %v1427 = vld [vmem:[%s5 + $0x120] sm:$0xff]
    %v1428 = vld [vmem:[%s5 + $0x128] sm:$0xff]
    %v1429 = vld [vmem:[%s5 + $0x130] sm:$0xff]
    %v1430 = vld [vmem:[%s5 + $0x138] sm:$0xff]
    %v1431 = vld [vmem:[%s5 + $0x140] sm:$0xff]
    %v1432 = vld [vmem:[%s5 + $0x148] sm:$0xff]
    %v1433 = vld [vmem:[%s5 + $0x150] sm:$0xff]
    %v1434 = vld [vmem:[%s5 + $0x158] sm:$0xff]
    %v1435 = vld [vmem:[%s5 + $0x160] sm:$0xff]
    %v1436 = vld [vmem:[%s5 + $0x168] sm:$0xff]
    %v1437 = vld [vmem:[%s5 + $0x170] sm:$0xff]
    %v1438 = vld [vmem:[%s5 + $0x178] sm:$0xff]
    %v1439 = vld [vmem:[%s5 + $0x180] sm:$0xff]
    %v1440 = vld [vmem:[%s5 + $0x188] sm:$0xff]
    %v1441 = vld [vmem:[%s5 + $0x190] sm:$0xff]
    %v1442 = vld [vmem:[%s5 + $0x198] sm:$0xff]
    %v1443 = vld [vmem:[%s5 + $0x1a0] sm:$0xff]
    %v1444 = vld [vmem:[%s5 + $0x1a8] sm:$0xff]
    %v1445 = vld [vmem:[%s5 + $0x1b0] sm:$0xff]
    %v1446 = vld [vmem:[%s5 + $0x1b8] sm:$0xff]
    %v1447 = vld [vmem:[%s5 + $0x1c0] sm:$0xff]
    %v1448 = vld [vmem:[%s5 + $0x1c8] sm:$0xff]
    %v1449 = vld [vmem:[%s5 + $0x1d0] sm:$0xff]
    %v1450 = vld [vmem:[%s5 + $0x1d8] sm:$0xff]
    %v1451 = vld [vmem:[%s5 + $0x1e0] sm:$0xff]
    %v1452 = vld [vmem:[%s5 + $0x1e8] sm:$0xff]
    %v1453 = vld [vmem:[%s5 + $0x1f0] sm:$0xff]
    %v1454 = vld [vmem:[%s5 + $0x1f8] sm:$0xff]
    %v1455 = vld [vmem:[#allocation6] sm:$0x3]
    %v1457 = vperm.slane %v1455, 0
    %v1458 = vperm.slane %v1455, 1
    %v1525 = vunpack.c.l.b16 %v1391
    %v1526 = vunpack.c.h.b16 %v1391
    %v1527 = vunpack.c.l.b16 %v1392
    %v1528 = vunpack.c.h.b16 %v1392
    %v1529 = vunpack.c.l.b16 %v1393
    %v1530 = vunpack.c.h.b16 %v1393
    %v1531 = vunpack.c.l.b16 %v1394
    %v1532 = vunpack.c.h.b16 %v1394
    %v1533 = vunpack.c.l.b16 %v1395
    %v1534 = vunpack.c.h.b16 %v1395
    %v1535 = vunpack.c.l.b16 %v1396
    %v1536 = vunpack.c.h.b16 %v1396
    %v1537 = vunpack.c.l.b16 %v1397
    %v1538 = vunpack.c.h.b16 %v1397
    %v1539 = vunpack.c.l.b16 %v1398
    %v1540 = vunpack.c.h.b16 %v1398
    %v1541 = vunpack.c.l.b16 %v1399
    %v1542 = vunpack.c.h.b16 %v1399
    %v1543 = vunpack.c.l.b16 %v1400
    %v1544 = vunpack.c.h.b16 %v1400
    %v1545 = vunpack.c.l.b16 %v1401
    %v1546 = vunpack.c.h.b16 %v1401
    %v1547 = vunpack.c.l.b16 %v1402
    %v1548 = vunpack.c.h.b16 %v1402
    %v1549 = vunpack.c.l.b16 %v1403
    %v1550 = vunpack.c.h.b16 %v1403
    %v1551 = vunpack.c.l.b16 %v1404
    %v1552 = vunpack.c.h.b16 %v1404
    %v1553 = vunpack.c.l.b16 %v1405
    %v1554 = vunpack.c.h.b16 %v1405
    %v1555 = vunpack.c.l.b16 %v1406
    %v1556 = vunpack.c.h.b16 %v1406
    %v1557 = vunpack.c.l.b16 %v1407
    %v1558 = vunpack.c.h.b16 %v1407
    %v1559 = vunpack.c.l.b16 %v1408
    %v1560 = vunpack.c.h.b16 %v1408
    %v1561 = vunpack.c.l.b16 %v1409
    %v1562 = vunpack.c.h.b16 %v1409
    %v1563 = vunpack.c.l.b16 %v1410
    %v1564 = vunpack.c.h.b16 %v1410
    %v1565 = vunpack.c.l.b16 %v1411
    %v1566 = vunpack.c.h.b16 %v1411
    %v1567 = vunpack.c.l.b16 %v1412
    %v1568 = vunpack.c.h.b16 %v1412
    %v1569 = vunpack.c.l.b16 %v1413
    %v1570 = vunpack.c.h.b16 %v1413
    %v1571 = vunpack.c.l.b16 %v1414
    %v1572 = vunpack.c.h.b16 %v1414
    %v1573 = vunpack.c.l.b16 %v1415
    %v1574 = vunpack.c.h.b16 %v1415
    %v1575 = vunpack.c.l.b16 %v1416
    %v1576 = vunpack.c.h.b16 %v1416
    %v1577 = vunpack.c.l.b16 %v1417
    %v1578 = vunpack.c.h.b16 %v1417
    %v1579 = vunpack.c.l.b16 %v1418
    %v1580 = vunpack.c.h.b16 %v1418
    %v1581 = vunpack.c.l.b16 %v1419
    %v1582 = vunpack.c.h.b16 %v1419
    %v1583 = vunpack.c.l.b16 %v1420
    %v1584 = vunpack.c.h.b16 %v1420
    %v1585 = vunpack.c.l.b16 %v1421
    %v1586 = vunpack.c.h.b16 %v1421
    %v1587 = vunpack.c.l.b16 %v1422
    %v1588 = vunpack.c.h.b16 %v1422
    %v1589 = vunpack.c.l.b16 %v1423
    %v1590 = vunpack.c.h.b16 %v1423
    %v1591 = vunpack.c.l.b16 %v1424
    %v1592 = vunpack.c.h.b16 %v1424
    %v1593 = vunpack.c.l.b16 %v1425
    %v1594 = vunpack.c.h.b16 %v1425
    %v1595 = vunpack.c.l.b16 %v1426
    %v1596 = vunpack.c.h.b16 %v1426
    %v1597 = vunpack.c.l.b16 %v1427
    %v1598 = vunpack.c.h.b16 %v1427
    %v1599 = vunpack.c.l.b16 %v1428
    %v1600 = vunpack.c.h.b16 %v1428
    %v1601 = vunpack.c.l.b16 %v1429
    %v1602 = vunpack.c.h.b16 %v1429
    %v1603 = vunpack.c.l.b16 %v1430
    %v1604 = vunpack.c.h.b16 %v1430
    %v1605 = vunpack.c.l.b16 %v1431
    %v1606 = vunpack.c.h.b16 %v1431
    %v1607 = vunpack.c.l.b16 %v1432
    %v1608 = vunpack.c.h.b16 %v1432
    %v1609 = vunpack.c.l.b16 %v1433
    %v1610 = vunpack.c.h.b16 %v1433
    %v1611 = vunpack.c.l.b16 %v1434
    %v1612 = vunpack.c.h.b16 %v1434
    %v1613 = vunpack.c.l.b16 %v1435
    %v1614 = vunpack.c.h.b16 %v1435
    %v1615 = vunpack.c.l.b16 %v1436
    %v1616 = vunpack.c.h.b16 %v1436
    %v1617 = vunpack.c.l.b16 %v1437
    %v1618 = vunpack.c.h.b16 %v1437
    %v1619 = vunpack.c.l.b16 %v1438
    %v1620 = vunpack.c.h.b16 %v1438
    %v1621 = vunpack.c.l.b16 %v1439
    %v1622 = vunpack.c.h.b16 %v1439
    %v1623 = vunpack.c.l.b16 %v1440
    %v1624 = vunpack.c.h.b16 %v1440
    %v1625 = vunpack.c.l.b16 %v1441
    %v1626 = vunpack.c.h.b16 %v1441
    %v1627 = vunpack.c.l.b16 %v1442
    %v1628 = vunpack.c.h.b16 %v1442
    %v1629 = vunpack.c.l.b16 %v1443
    %v1630 = vunpack.c.h.b16 %v1443
    %v1631 = vunpack.c.l.b16 %v1444
    %v1632 = vunpack.c.h.b16 %v1444
    %v1633 = vunpack.c.l.b16 %v1445
    %v1634 = vunpack.c.h.b16 %v1445
    %v1635 = vunpack.c.l.b16 %v1446
    %v1636 = vunpack.c.h.b16 %v1446
    %v1637 = vunpack.c.l.b16 %v1447
    %v1638 = vunpack.c.h.b16 %v1447
    %v1639 = vunpack.c.l.b16 %v1448
    %v1640 = vunpack.c.h.b16 %v1448
    %v1641 = vunpack.c.l.b16 %v1449
    %v1642 = vunpack.c.h.b16 %v1449
    %v1643 = vunpack.c.l.b16 %v1450
    %v1644 = vunpack.c.h.b16 %v1450
    %v1645 = vunpack.c.l.b16 %v1451
    %v1646 = vunpack.c.h.b16 %v1451
    %v1647 = vunpack.c.l.b16 %v1452
    %v1648 = vunpack.c.h.b16 %v1452
    %v1649 = vunpack.c.l.b16 %v1453
    %v1650 = vunpack.c.h.b16 %v1453
    %v1651 = vunpack.c.l.b16 %v1454
    %v1652 = vunpack.c.h.b16 %v1454
    %v1653 = vpack.c.b16 %v1527, %v1525
    %v1654 = vpack.c.b16 %v1528, %v1526
    %v1655 = vpack.c.b16 %v1531, %v1529
    %v1656 = vpack.c.b16 %v1532, %v1530
    %v1657 = vpack.c.b16 %v1535, %v1533
    %v1658 = vpack.c.b16 %v1536, %v1534
    %v1659 = vpack.c.b16 %v1539, %v1537
    %v1660 = vpack.c.b16 %v1540, %v1538
    %v1661 = vpack.c.b16 %v1543, %v1541
    %v1662 = vpack.c.b16 %v1544, %v1542
    %v1663 = vpack.c.b16 %v1547, %v1545
    %v1664 = vpack.c.b16 %v1548, %v1546
    %v1665 = vpack.c.b16 %v1551, %v1549
    %v1666 = vpack.c.b16 %v1552, %v1550
    %v1667 = vpack.c.b16 %v1555, %v1553
    %v1668 = vpack.c.b16 %v1556, %v1554
    %v1669 = vpack.c.b16 %v1559, %v1557
    %v1670 = vpack.c.b16 %v1560, %v1558
    %v1671 = vpack.c.b16 %v1563, %v1561
    %v1672 = vpack.c.b16 %v1564, %v1562
    %v1673 = vpack.c.b16 %v1567, %v1565
    %v1674 = vpack.c.b16 %v1568, %v1566
    %v1675 = vpack.c.b16 %v1571, %v1569
    %v1676 = vpack.c.b16 %v1572, %v1570
    %v1677 = vpack.c.b16 %v1575, %v1573
    %v1678 = vpack.c.b16 %v1576, %v1574
    %v1679 = vpack.c.b16 %v1579, %v1577
    %v1680 = vpack.c.b16 %v1580, %v1578
    %v1681 = vpack.c.b16 %v1583, %v1581
    %v1682 = vpack.c.b16 %v1584, %v1582
    %v1683 = vpack.c.b16 %v1587, %v1585
    %v1684 = vpack.c.b16 %v1588, %v1586
    %v1685 = vpack.c.b16 %v1591, %v1589
    %v1686 = vpack.c.b16 %v1592, %v1590
    %v1687 = vpack.c.b16 %v1595, %v1593
    %v1688 = vpack.c.b16 %v1596, %v1594
    %v1689 = vpack.c.b16 %v1599, %v1597
    %v1690 = vpack.c.b16 %v1600, %v1598
    %v1691 = vpack.c.b16 %v1603, %v1601
    %v1692 = vpack.c.b16 %v1604, %v1602
    %v1693 = vpack.c.b16 %v1607, %v1605
    %v1694 = vpack.c.b16 %v1608, %v1606
    %v1695 = vpack.c.b16 %v1611, %v1609
    %v1696 = vpack.c.b16 %v1612, %v1610
    %v1697 = vpack.c.b16 %v1615, %v1613
    %v1698 = vpack.c.b16 %v1616, %v1614
    %v1699 = vpack.c.b16 %v1619, %v1617
    %v1700 = vpack.c.b16 %v1620, %v1618
    %v1701 = vpack.c.b16 %v1623, %v1621
    %v1702 = vpack.c.b16 %v1624, %v1622
    %v1703 = vpack.c.b16 %v1627, %v1625
    %v1704 = vpack.c.b16 %v1628, %v1626
    %v1705 = vpack.c.b16 %v1631, %v1629
    %v1706 = vpack.c.b16 %v1632, %v1630
    %v1707 = vpack.c.b16 %v1635, %v1633
    %v1708 = vpack.c.b16 %v1636, %v1634
    %v1709 = vpack.c.b16 %v1639, %v1637
    %v1710 = vpack.c.b16 %v1640, %v1638
    %v1711 = vpack.c.b16 %v1643, %v1641
    %v1712 = vpack.c.b16 %v1644, %v1642
    %v1713 = vpack.c.b16 %v1647, %v1645
    %v1714 = vpack.c.b16 %v1648, %v1646
    %v1715 = vpack.c.b16 %v1651, %v1649
    %v1716 = vpack.c.b16 %v1652, %v1650
    %1781 = vmatpush.bf16.msra.mxu0 %v1667
    %1782 = vmatpush.bf16.msra.mxu0 %v1665
    %1783 = vmatpush.bf16.msra.mxu0 %v1663
    %1784 = vmatpush.bf16.msra.mxu0 %v1661
    %1785 = vmatpush.bf16.msra.mxu0 %v1659
    %1786 = vmatpush.bf16.msra.mxu0 %v1657
    %1787 = vmatpush.bf16.msra.mxu0 %v1655
    %1788 = vmatpush.bf16.msra.mxu0 %v1653
    %1789 = vmatmul.bf16.gmra.mxu0 %v1327
    %v1790 = vpop.f32.mrf.mxu0
    %v1791 = vadd.f32 %v1457, %v1790
    %v1792 = vpop.f32.mrf.mxu0
    %v1793 = vadd.f32 %v1457, %v1792
    %1794 = vmatmul.bf16.gmra.mxu0 %v1331
    %v1795 = vpop.f32.mrf.mxu0
    %v1796 = vadd.f32 %v1457, %v1795
    %v1797 = vpop.f32.mrf.mxu0
    %v1798 = vadd.f32 %v1457, %v1797
    %1799 = vmatmul.bf16.gmra.mxu0 %v1335
    %v1800 = vpop.f32.mrf.mxu0
    %v1801 = vadd.f32 %v1457, %v1800
    %v1802 = vpop.f32.mrf.mxu0
    %v1803 = vadd.f32 %v1457, %v1802
    %1804 = vmatmul.bf16.gmra.mxu0 %v1339
    %v1805 = vpop.f32.mrf.mxu0
    %v1806 = vadd.f32 %v1457, %v1805
    %v1807 = vpop.f32.mrf.mxu0
    %v1808 = vadd.f32 %v1457, %v1807
    %1809 = vmatmul.bf16.gmra.mxu0 %v1343
    %v1810 = vpop.f32.mrf.mxu0
    %v1811 = vadd.f32 %v1457, %v1810
    %v1812 = vpop.f32.mrf.mxu0
    %v1813 = vadd.f32 %v1457, %v1812
    %1814 = vmatmul.bf16.gmra.mxu0 %v1347
    %v1815 = vpop.f32.mrf.mxu0
    %v1816 = vadd.f32 %v1457, %v1815
    %v1817 = vpop.f32.mrf.mxu0
    %v1818 = vadd.f32 %v1457, %v1817
    %1819 = vmatmul.bf16.gmra.mxu0 %v1351
    %v1820 = vpop.f32.mrf.mxu0
    %v1821 = vadd.f32 %v1457, %v1820
    %v1822 = vpop.f32.mrf.mxu0
    %v1823 = vadd.f32 %v1457, %v1822
    %1824 = vmatmul.bf16.gmra.mxu0 %v1355
    %v1825 = vpop.f32.mrf.mxu0
    %v1826 = vadd.f32 %v1457, %v1825
    %v1827 = vpop.f32.mrf.mxu0
    %v1828 = vadd.f32 %v1457, %v1827
    %1829 = vmatmul.bf16.gmra.mxu0 %v1359
    %v1830 = vpop.f32.mrf.mxu0
    %v1831 = vadd.f32 %v1457, %v1830
    %v1832 = vpop.f32.mrf.mxu0
    %v1833 = vadd.f32 %v1457, %v1832
    %1834 = vmatmul.bf16.gmra.mxu0 %v1363
    %v1835 = vpop.f32.mrf.mxu0
    %v1836 = vadd.f32 %v1457, %v1835
    %v1837 = vpop.f32.mrf.mxu0
    %v1838 = vadd.f32 %v1457, %v1837
    %1839 = vmatmul.bf16.gmra.mxu0 %v1367
    %v1840 = vpop.f32.mrf.mxu0
    %v1841 = vadd.f32 %v1457, %v1840
    %v1842 = vpop.f32.mrf.mxu0
    %v1843 = vadd.f32 %v1457, %v1842
    %1844 = vmatmul.bf16.gmra.mxu0 %v1371
    %v1845 = vpop.f32.mrf.mxu0
    %v1846 = vadd.f32 %v1457, %v1845
    %v1847 = vpop.f32.mrf.mxu0
    %v1848 = vadd.f32 %v1457, %v1847
    %1849 = vmatmul.bf16.gmra.mxu0 %v1375
    %v1850 = vpop.f32.mrf.mxu0
    %v1851 = vadd.f32 %v1457, %v1850
    %v1852 = vpop.f32.mrf.mxu0
    %v1853 = vadd.f32 %v1457, %v1852
    %1854 = vmatmul.bf16.gmra.mxu0 %v1379
    %v1855 = vpop.f32.mrf.mxu0
    %v1856 = vadd.f32 %v1457, %v1855
    %v1857 = vpop.f32.mrf.mxu0
    %v1858 = vadd.f32 %v1457, %v1857
    %1859 = vmatmul.bf16.gmra.mxu0 %v1383
    %v1860 = vpop.f32.mrf.mxu0
    %v1861 = vadd.f32 %v1457, %v1860
    %v1862 = vpop.f32.mrf.mxu0
    %v1863 = vadd.f32 %v1457, %v1862
    %1864 = vmatmul.bf16.gmra.mxu0 %v1387
    %v1865 = vpop.f32.mrf.mxu0
    %v1866 = vadd.f32 %v1457, %v1865
    %v1867 = vpop.f32.mrf.mxu0
    %v1868 = vadd.f32 %v1457, %v1867
    %1869 = vdwg.mxu0
    %1870 = vmatpush.bf16.msra.mxu0 %v1683
    %1871 = vmatpush.bf16.msra.mxu0 %v1681
    %1872 = vmatpush.bf16.msra.mxu0 %v1679
    %1873 = vmatpush.bf16.msra.mxu0 %v1677
    %1874 = vmatpush.bf16.msra.mxu0 %v1675
    %1875 = vmatpush.bf16.msra.mxu0 %v1673
    %1876 = vmatpush.bf16.msra.mxu0 %v1671
    %1877 = vmatpush.bf16.msra.mxu0 %v1669
    %1878 = vmatmul.bf16.gmra.mxu0 %v1328
    %v1879 = vpop.f32.mrf.mxu0
    %v1880 = vadd.f32 %v1791, %v1879
    %v1881 = vpop.f32.mrf.mxu0
    %v1882 = vadd.f32 %v1793, %v1881
    %1883 = vmatmul.bf16.gmra.mxu0 %v1332
    %v1884 = vpop.f32.mrf.mxu0
    %v1885 = vadd.f32 %v1796, %v1884
    %v1886 = vpop.f32.mrf.mxu0
    %v1887 = vadd.f32 %v1798, %v1886
    %1888 = vmatmul.bf16.gmra.mxu0 %v1336
    %v1889 = vpop.f32.mrf.mxu0
    %v1890 = vadd.f32 %v1801, %v1889
    %v1891 = vpop.f32.mrf.mxu0
    %v1892 = vadd.f32 %v1803, %v1891
    %1893 = vmatmul.bf16.gmra.mxu0 %v1340
    %v1894 = vpop.f32.mrf.mxu0
    %v1895 = vadd.f32 %v1806, %v1894
    %v1896 = vpop.f32.mrf.mxu0
    %v1897 = vadd.f32 %v1808, %v1896
    %1898 = vmatmul.bf16.gmra.mxu0 %v1344
    %v1899 = vpop.f32.mrf.mxu0
    %v1900 = vadd.f32 %v1811, %v1899
    %v1901 = vpop.f32.mrf.mxu0
    %v1902 = vadd.f32 %v1813, %v1901
    %1903 = vmatmul.bf16.gmra.mxu0 %v1348
    %v1904 = vpop.f32.mrf.mxu0
    %v1905 = vadd.f32 %v1816, %v1904
    %v1906 = vpop.f32.mrf.mxu0
    %v1907 = vadd.f32 %v1818, %v1906
    %1908 = vmatmul.bf16.gmra.mxu0 %v1352
    %v1909 = vpop.f32.mrf.mxu0
    %v1910 = vadd.f32 %v1821, %v1909
    %v1911 = vpop.f32.mrf.mxu0
    %v1912 = vadd.f32 %v1823, %v1911
    %1913 = vmatmul.bf16.gmra.mxu0 %v1356
    %v1914 = vpop.f32.mrf.mxu0
    %v1915 = vadd.f32 %v1826, %v1914
    %v1916 = vpop.f32.mrf.mxu0
    %v1917 = vadd.f32 %v1828, %v1916
    %1918 = vmatmul.bf16.gmra.mxu0 %v1360
    %v1919 = vpop.f32.mrf.mxu0
    %v1920 = vadd.f32 %v1831, %v1919
    %v1921 = vpop.f32.mrf.mxu0
    %v1922 = vadd.f32 %v1833, %v1921
    %1923 = vmatmul.bf16.gmra.mxu0 %v1364
    %v1924 = vpop.f32.mrf.mxu0
    %v1925 = vadd.f32 %v1836, %v1924
    %v1926 = vpop.f32.mrf.mxu0
    %v1927 = vadd.f32 %v1838, %v1926
    %1928 = vmatmul.bf16.gmra.mxu0 %v1368
    %v1929 = vpop.f32.mrf.mxu0
    %v1930 = vadd.f32 %v1841, %v1929
    %v1931 = vpop.f32.mrf.mxu0
    %v1932 = vadd.f32 %v1843, %v1931
    %1933 = vmatmul.bf16.gmra.mxu0 %v1372
    %v1934 = vpop.f32.mrf.mxu0
    %v1935 = vadd.f32 %v1846, %v1934
    %v1936 = vpop.f32.mrf.mxu0
    %v1937 = vadd.f32 %v1848, %v1936
    %1938 = vmatmul.bf16.gmra.mxu0 %v1376
    %v1939 = vpop.f32.mrf.mxu0
    %v1940 = vadd.f32 %v1851, %v1939
    %v1941 = vpop.f32.mrf.mxu0
    %v1942 = vadd.f32 %v1853, %v1941
    %1943 = vmatmul.bf16.gmra.mxu0 %v1380
    %v1944 = vpop.f32.mrf.mxu0
    %v1945 = vadd.f32 %v1856, %v1944
    %v1946 = vpop.f32.mrf.mxu0
    %v1947 = vadd.f32 %v1858, %v1946
    %1948 = vmatmul.bf16.gmra.mxu0 %v1384
    %v1949 = vpop.f32.mrf.mxu0
    %v1950 = vadd.f32 %v1861, %v1949
    %v1951 = vpop.f32.mrf.mxu0
    %v1952 = vadd.f32 %v1863, %v1951
    %1953 = vmatmul.bf16.gmra.mxu0 %v1388
    %v1954 = vpop.f32.mrf.mxu0
    %v1955 = vadd.f32 %v1866, %v1954
    %v1956 = vpop.f32.mrf.mxu0
    %v1957 = vadd.f32 %v1868, %v1956
    %1958 = vdwg.mxu0
    %1959 = vmatpush.bf16.msra.mxu0 %v1699
    %1960 = vmatpush.bf16.msra.mxu0 %v1697
    %1961 = vmatpush.bf16.msra.mxu0 %v1695
    %1962 = vmatpush.bf16.msra.mxu0 %v1693
    %1963 = vmatpush.bf16.msra.mxu0 %v1691
    %1964 = vmatpush.bf16.msra.mxu0 %v1689
    %1965 = vmatpush.bf16.msra.mxu0 %v1687
    %1966 = vmatpush.bf16.msra.mxu0 %v1685
    %1967 = vmatmul.bf16.gmra.mxu0 %v1329
    %v1968 = vpop.f32.mrf.mxu0
    %v1969 = vadd.f32 %v1880, %v1968
    %v1970 = vpop.f32.mrf.mxu0
    %v1971 = vadd.f32 %v1882, %v1970
    %1972 = vmatmul.bf16.gmra.mxu0 %v1333
    %v1973 = vpop.f32.mrf.mxu0
    %v1974 = vadd.f32 %v1885, %v1973
    %v1975 = vpop.f32.mrf.mxu0
    %v1976 = vadd.f32 %v1887, %v1975
    %1977 = vmatmul.bf16.gmra.mxu0 %v1337
    %v1978 = vpop.f32.mrf.mxu0
    %v1979 = vadd.f32 %v1890, %v1978
    %v1980 = vpop.f32.mrf.mxu0
    %v1981 = vadd.f32 %v1892, %v1980
    %1982 = vmatmul.bf16.gmra.mxu0 %v1341
    %v1983 = vpop.f32.mrf.mxu0
    %v1984 = vadd.f32 %v1895, %v1983
    %v1985 = vpop.f32.mrf.mxu0
    %v1986 = vadd.f32 %v1897, %v1985
    %1987 = vmatmul.bf16.gmra.mxu0 %v1345
    %v1988 = vpop.f32.mrf.mxu0
    %v1989 = vadd.f32 %v1900, %v1988
    %v1990 = vpop.f32.mrf.mxu0
    %v1991 = vadd.f32 %v1902, %v1990
    %1992 = vmatmul.bf16.gmra.mxu0 %v1349
    %v1993 = vpop.f32.mrf.mxu0
    %v1994 = vadd.f32 %v1905, %v1993
    %v1995 = vpop.f32.mrf.mxu0
    %v1996 = vadd.f32 %v1907, %v1995
    %1997 = vmatmul.bf16.gmra.mxu0 %v1353
    %v1998 = vpop.f32.mrf.mxu0
    %v1999 = vadd.f32 %v1910, %v1998
    %v2000 = vpop.f32.mrf.mxu0
    %v2001 = vadd.f32 %v1912, %v2000
    %2002 = vmatmul.bf16.gmra.mxu0 %v1357
    %v2003 = vpop.f32.mrf.mxu0
    %v2004 = vadd.f32 %v1915, %v2003
    %v2005 = vpop.f32.mrf.mxu0
    %v2006 = vadd.f32 %v1917, %v2005
    %2007 = vmatmul.bf16.gmra.mxu0 %v1361
    %v2008 = vpop.f32.mrf.mxu0
    %v2009 = vadd.f32 %v1920, %v2008
    %v2010 = vpop.f32.mrf.mxu0
    %v2011 = vadd.f32 %v1922, %v2010
    %2012 = vmatmul.bf16.gmra.mxu0 %v1365
    %v2013 = vpop.f32.mrf.mxu0
    %v2014 = vadd.f32 %v1925, %v2013
    %v2015 = vpop.f32.mrf.mxu0
    %v2016 = vadd.f32 %v1927, %v2015
    %2017 = vmatmul.bf16.gmra.mxu0 %v1369
    %v2018 = vpop.f32.mrf.mxu0
    %v2019 = vadd.f32 %v1930, %v2018
    %v2020 = vpop.f32.mrf.mxu0
    %v2021 = vadd.f32 %v1932, %v2020
    %2022 = vmatmul.bf16.gmra.mxu0 %v1373
    %v2023 = vpop.f32.mrf.mxu0
    %v2024 = vadd.f32 %v1935, %v2023
    %v2025 = vpop.f32.mrf.mxu0
    %v2026 = vadd.f32 %v1937, %v2025
    %2027 = vmatmul.bf16.gmra.mxu0 %v1377
    %v2028 = vpop.f32.mrf.mxu0
    %v2029 = vadd.f32 %v1940, %v2028
    %v2030 = vpop.f32.mrf.mxu0
    %v2031 = vadd.f32 %v1942, %v2030
    %2032 = vmatmul.bf16.gmra.mxu0 %v1381
    %v2033 = vpop.f32.mrf.mxu0
    %v2034 = vadd.f32 %v1945, %v2033
    %v2035 = vpop.f32.mrf.mxu0
    %v2036 = vadd.f32 %v1947, %v2035
    %2037 = vmatmul.bf16.gmra.mxu0 %v1385
    %v2038 = vpop.f32.mrf.mxu0
    %v2039 = vadd.f32 %v1950, %v2038
    %v2040 = vpop.f32.mrf.mxu0
    %v2041 = vadd.f32 %v1952, %v2040
    %2042 = vmatmul.bf16.gmra.mxu0 %v1389
    %v2043 = vpop.f32.mrf.mxu0
    %v2044 = vadd.f32 %v1955, %v2043
    %v2045 = vpop.f32.mrf.mxu0
    %v2046 = vadd.f32 %v1957, %v2045
    %2047 = vdwg.mxu0
    %2048 = vmatpush.bf16.msra.mxu0 %v1715
    %2049 = vmatpush.bf16.msra.mxu0 %v1713
    %2050 = vmatpush.bf16.msra.mxu0 %v1711
    %2051 = vmatpush.bf16.msra.mxu0 %v1709
    %2052 = vmatpush.bf16.msra.mxu0 %v1707
    %2053 = vmatpush.bf16.msra.mxu0 %v1705
    %2054 = vmatpush.bf16.msra.mxu0 %v1703
    %2055 = vmatpush.bf16.msra.mxu0 %v1701
    %2056 = vmatmul.bf16.gmra.mxu0 %v1330
    %v2057 = vpop.f32.mrf.mxu0
    %v2058 = vadd.f32 %v1969, %v2057
    %v2059 = vpop.f32.mrf.mxu0
    %v2060 = vadd.f32 %v1971, %v2059
    %2061 = vmatmul.bf16.gmra.mxu0 %v1334
    %v2062 = vpop.f32.mrf.mxu0
    %v2063 = vadd.f32 %v1974, %v2062
    %v2064 = vpop.f32.mrf.mxu0
    %v2065 = vadd.f32 %v1976, %v2064
    %2066 = vmatmul.bf16.gmra.mxu0 %v1338
    %v2067 = vpop.f32.mrf.mxu0
    %v2068 = vadd.f32 %v1979, %v2067
    %v2069 = vpop.f32.mrf.mxu0
    %v2070 = vadd.f32 %v1981, %v2069
    %2071 = vmatmul.bf16.gmra.mxu0 %v1342
    %v2072 = vpop.f32.mrf.mxu0
    %v2073 = vadd.f32 %v1984, %v2072
    %v2074 = vpop.f32.mrf.mxu0
    %v2075 = vadd.f32 %v1986, %v2074
    %2076 = vmatmul.bf16.gmra.mxu0 %v1346
    %v2077 = vpop.f32.mrf.mxu0
    %v2078 = vadd.f32 %v1989, %v2077
    %v2079 = vpop.f32.mrf.mxu0
    %v2080 = vadd.f32 %v1991, %v2079
    %2081 = vmatmul.bf16.gmra.mxu0 %v1350
    %v2082 = vpop.f32.mrf.mxu0
    %v2083 = vadd.f32 %v1994, %v2082
    %v2084 = vpop.f32.mrf.mxu0
    %v2085 = vadd.f32 %v1996, %v2084
    %2086 = vmatmul.bf16.gmra.mxu0 %v1354
    %v2087 = vpop.f32.mrf.mxu0
    %v2088 = vadd.f32 %v1999, %v2087
    %v2089 = vpop.f32.mrf.mxu0
    %v2090 = vadd.f32 %v2001, %v2089
    %2091 = vmatmul.bf16.gmra.mxu0 %v1358
    %v2092 = vpop.f32.mrf.mxu0
    %v2093 = vadd.f32 %v2004, %v2092
    %v2094 = vpop.f32.mrf.mxu0
    %v2095 = vadd.f32 %v2006, %v2094
    %2096 = vmatmul.bf16.gmra.mxu0 %v1362
    %v2097 = vpop.f32.mrf.mxu0
    %v2098 = vadd.f32 %v2009, %v2097
    %v2099 = vpop.f32.mrf.mxu0
    %v2100 = vadd.f32 %v2011, %v2099
    %2101 = vmatmul.bf16.gmra.mxu0 %v1366
    %v2102 = vpop.f32.mrf.mxu0
    %v2103 = vadd.f32 %v2014, %v2102
    %v2104 = vpop.f32.mrf.mxu0
    %v2105 = vadd.f32 %v2016, %v2104
    %2106 = vmatmul.bf16.gmra.mxu0 %v1370
    %v2107 = vpop.f32.mrf.mxu0
    %v2108 = vadd.f32 %v2019, %v2107
    %v2109 = vpop.f32.mrf.mxu0
    %v2110 = vadd.f32 %v2021, %v2109
    %2111 = vmatmul.bf16.gmra.mxu0 %v1374
    %v2112 = vpop.f32.mrf.mxu0
    %v2113 = vadd.f32 %v2024, %v2112
    %v2114 = vpop.f32.mrf.mxu0
    %v2115 = vadd.f32 %v2026, %v2114
    %2116 = vmatmul.bf16.gmra.mxu0 %v1378
    %v2117 = vpop.f32.mrf.mxu0
    %v2118 = vadd.f32 %v2029, %v2117
    %v2119 = vpop.f32.mrf.mxu0
    %v2120 = vadd.f32 %v2031, %v2119
    %2121 = vmatmul.bf16.gmra.mxu0 %v1382
    %v2122 = vpop.f32.mrf.mxu0
    %v2123 = vadd.f32 %v2034, %v2122
    %v2124 = vpop.f32.mrf.mxu0
    %v2125 = vadd.f32 %v2036, %v2124
    %2126 = vmatmul.bf16.gmra.mxu0 %v1386
    %v2127 = vpop.f32.mrf.mxu0
    %v2128 = vadd.f32 %v2039, %v2127
    %v2129 = vpop.f32.mrf.mxu0
    %v2130 = vadd.f32 %v2041, %v2129
    %2131 = vmatmul.bf16.gmra.mxu0 %v1390
    %v2132 = vpop.f32.mrf.mxu0
    %v2133 = vadd.f32 %v2044, %v2132
    %v2134 = vpop.f32.mrf.mxu0
    %v2135 = vadd.f32 %v2046, %v2134
    %2136 = vdwg.mxu0
    %2137 = vmatpush.bf16.msra.mxu0 %v1668
    %2138 = vmatpush.bf16.msra.mxu0 %v1666
    %2139 = vmatpush.bf16.msra.mxu0 %v1664
    %2140 = vmatpush.bf16.msra.mxu0 %v1662
    %2141 = vmatpush.bf16.msra.mxu0 %v1660
    %2142 = vmatpush.bf16.msra.mxu0 %v1658
    %2143 = vmatpush.bf16.msra.mxu0 %v1656
    %2144 = vmatpush.bf16.msra.mxu0 %v1654
    %2145 = vmatmul.bf16.gmra.mxu0 %v1327
    %v2146 = vpop.f32.mrf.mxu0
    %v2147 = vadd.f32 %v1458, %v2146
    %v2148 = vpop.f32.mrf.mxu0
    %v2149 = vadd.f32 %v1458, %v2148
    %2150 = vmatmul.bf16.gmra.mxu0 %v1331
    %v2151 = vpop.f32.mrf.mxu0
    %v2152 = vadd.f32 %v1458, %v2151
    %v2153 = vpop.f32.mrf.mxu0
    %v2154 = vadd.f32 %v1458, %v2153
    %2155 = vmatmul.bf16.gmra.mxu0 %v1335
    %v2156 = vpop.f32.mrf.mxu0
    %v2157 = vadd.f32 %v1458, %v2156
    %v2158 = vpop.f32.mrf.mxu0
    %v2159 = vadd.f32 %v1458, %v2158
    %2160 = vmatmul.bf16.gmra.mxu0 %v1339
    %v2161 = vpop.f32.mrf.mxu0
    %v2162 = vadd.f32 %v1458, %v2161
    %v2163 = vpop.f32.mrf.mxu0
    %v2164 = vadd.f32 %v1458, %v2163
    %2165 = vmatmul.bf16.gmra.mxu0 %v1343
    %v2166 = vpop.f32.mrf.mxu0
    %v2167 = vadd.f32 %v1458, %v2166
    %v2168 = vpop.f32.mrf.mxu0
    %v2169 = vadd.f32 %v1458, %v2168
    %2170 = vmatmul.bf16.gmra.mxu0 %v1347
    %v2171 = vpop.f32.mrf.mxu0
    %v2172 = vadd.f32 %v1458, %v2171
    %v2173 = vpop.f32.mrf.mxu0
    %v2174 = vadd.f32 %v1458, %v2173
    %2175 = vmatmul.bf16.gmra.mxu0 %v1351
    %v2176 = vpop.f32.mrf.mxu0
    %v2177 = vadd.f32 %v1458, %v2176
    %v2178 = vpop.f32.mrf.mxu0
    %v2179 = vadd.f32 %v1458, %v2178
    %2180 = vmatmul.bf16.gmra.mxu0 %v1355
    %v2181 = vpop.f32.mrf.mxu0
    %v2182 = vadd.f32 %v1458, %v2181
    %v2183 = vpop.f32.mrf.mxu0
    %v2184 = vadd.f32 %v1458, %v2183
    %2185 = vmatmul.bf16.gmra.mxu0 %v1359
    %v2186 = vpop.f32.mrf.mxu0
    %v2187 = vadd.f32 %v1458, %v2186
    %v2188 = vpop.f32.mrf.mxu0
    %v2189 = vadd.f32 %v1458, %v2188
    %2190 = vmatmul.bf16.gmra.mxu0 %v1363
    %v2191 = vpop.f32.mrf.mxu0
    %v2192 = vadd.f32 %v1458, %v2191
    %v2193 = vpop.f32.mrf.mxu0
    %v2194 = vadd.f32 %v1458, %v2193
    %2195 = vmatmul.bf16.gmra.mxu0 %v1367
    %v2196 = vpop.f32.mrf.mxu0
    %v2197 = vadd.f32 %v1458, %v2196
    %v2198 = vpop.f32.mrf.mxu0
    %v2199 = vadd.f32 %v1458, %v2198
    %2200 = vmatmul.bf16.gmra.mxu0 %v1371
    %v2201 = vpop.f32.mrf.mxu0
    %v2202 = vadd.f32 %v1458, %v2201
    %v2203 = vpop.f32.mrf.mxu0
    %v2204 = vadd.f32 %v1458, %v2203
    %2205 = vmatmul.bf16.gmra.mxu0 %v1375
    %v2206 = vpop.f32.mrf.mxu0
    %v2207 = vadd.f32 %v1458, %v2206
    %v2208 = vpop.f32.mrf.mxu0
    %v2209 = vadd.f32 %v1458, %v2208
    %2210 = vmatmul.bf16.gmra.mxu0 %v1379
    %v2211 = vpop.f32.mrf.mxu0
    %v2212 = vadd.f32 %v1458, %v2211
    %v2213 = vpop.f32.mrf.mxu0
    %v2214 = vadd.f32 %v1458, %v2213
    %2215 = vmatmul.bf16.gmra.mxu0 %v1383
    %v2216 = vpop.f32.mrf.mxu0
    %v2217 = vadd.f32 %v1458, %v2216
    %v2218 = vpop.f32.mrf.mxu0
    %v2219 = vadd.f32 %v1458, %v2218
    %2220 = vmatmul.bf16.gmra.mxu0 %v1387
    %v2221 = vpop.f32.mrf.mxu0
    %v2222 = vadd.f32 %v1458, %v2221
    %v2223 = vpop.f32.mrf.mxu0
    %v2224 = vadd.f32 %v1458, %v2223
    %2225 = vdwg.mxu0
    %2226 = vmatpush.bf16.msra.mxu0 %v1684
    %2227 = vmatpush.bf16.msra.mxu0 %v1682
    %2228 = vmatpush.bf16.msra.mxu0 %v1680
    %2229 = vmatpush.bf16.msra.mxu0 %v1678
    %2230 = vmatpush.bf16.msra.mxu0 %v1676
    %2231 = vmatpush.bf16.msra.mxu0 %v1674
    %2232 = vmatpush.bf16.msra.mxu0 %v1672
    %2233 = vmatpush.bf16.msra.mxu0 %v1670
    %2234 = vmatmul.bf16.gmra.mxu0 %v1328
    %v2235 = vpop.f32.mrf.mxu0
    %v2236 = vadd.f32 %v2147, %v2235
    %v2237 = vpop.f32.mrf.mxu0
    %v2238 = vadd.f32 %v2149, %v2237
    %2239 = vmatmul.bf16.gmra.mxu0 %v1332
    %v2240 = vpop.f32.mrf.mxu0
    %v2241 = vadd.f32 %v2152, %v2240
    %v2242 = vpop.f32.mrf.mxu0
    %v2243 = vadd.f32 %v2154, %v2242
    %2244 = vmatmul.bf16.gmra.mxu0 %v1336
    %v2245 = vpop.f32.mrf.mxu0
    %v2246 = vadd.f32 %v2157, %v2245
    %v2247 = vpop.f32.mrf.mxu0
    %v2248 = vadd.f32 %v2159, %v2247
    %2249 = vmatmul.bf16.gmra.mxu0 %v1340
    %v2250 = vpop.f32.mrf.mxu0
    %v2251 = vadd.f32 %v2162, %v2250
    %v2252 = vpop.f32.mrf.mxu0
    %v2253 = vadd.f32 %v2164, %v2252
    %2254 = vmatmul.bf16.gmra.mxu0 %v1344
    %v2255 = vpop.f32.mrf.mxu0
    %v2256 = vadd.f32 %v2167, %v2255
    %v2257 = vpop.f32.mrf.mxu0
    %v2258 = vadd.f32 %v2169, %v2257
    %2259 = vmatmul.bf16.gmra.mxu0 %v1348
    %v2260 = vpop.f32.mrf.mxu0
    %v2261 = vadd.f32 %v2172, %v2260
    %v2262 = vpop.f32.mrf.mxu0
    %v2263 = vadd.f32 %v2174, %v2262
    %2264 = vmatmul.bf16.gmra.mxu0 %v1352
    %v2265 = vpop.f32.mrf.mxu0
    %v2266 = vadd.f32 %v2177, %v2265
    %v2267 = vpop.f32.mrf.mxu0
    %v2268 = vadd.f32 %v2179, %v2267
    %2269 = vmatmul.bf16.gmra.mxu0 %v1356
    %v2270 = vpop.f32.mrf.mxu0
    %v2271 = vadd.f32 %v2182, %v2270
    %v2272 = vpop.f32.mrf.mxu0
    %v2273 = vadd.f32 %v2184, %v2272
    %2274 = vmatmul.bf16.gmra.mxu0 %v1360
    %v2275 = vpop.f32.mrf.mxu0
    %v2276 = vadd.f32 %v2187, %v2275
    %v2277 = vpop.f32.mrf.mxu0
    %v2278 = vadd.f32 %v2189, %v2277
    %2279 = vmatmul.bf16.gmra.mxu0 %v1364
    %v2280 = vpop.f32.mrf.mxu0
    %v2281 = vadd.f32 %v2192, %v2280
    %v2282 = vpop.f32.mrf.mxu0
    %v2283 = vadd.f32 %v2194, %v2282
    %2284 = vmatmul.bf16.gmra.mxu0 %v1368
    %v2285 = vpop.f32.mrf.mxu0
    %v2286 = vadd.f32 %v2197, %v2285
    %v2287 = vpop.f32.mrf.mxu0
    %v2288 = vadd.f32 %v2199, %v2287
    %2289 = vmatmul.bf16.gmra.mxu0 %v1372
    %v2290 = vpop.f32.mrf.mxu0
    %v2291 = vadd.f32 %v2202, %v2290
    %v2292 = vpop.f32.mrf.mxu0
    %v2293 = vadd.f32 %v2204, %v2292
    %2294 = vmatmul.bf16.gmra.mxu0 %v1376
    %v2295 = vpop.f32.mrf.mxu0
    %v2296 = vadd.f32 %v2207, %v2295
    %v2297 = vpop.f32.mrf.mxu0
    %v2298 = vadd.f32 %v2209, %v2297
    %2299 = vmatmul.bf16.gmra.mxu0 %v1380
    %v2300 = vpop.f32.mrf.mxu0
    %v2301 = vadd.f32 %v2212, %v2300
    %v2302 = vpop.f32.mrf.mxu0
    %v2303 = vadd.f32 %v2214, %v2302
    %2304 = vmatmul.bf16.gmra.mxu0 %v1384
    %v2305 = vpop.f32.mrf.mxu0
    %v2306 = vadd.f32 %v2217, %v2305
    %v2307 = vpop.f32.mrf.mxu0
    %v2308 = vadd.f32 %v2219, %v2307
    %2309 = vmatmul.bf16.gmra.mxu0 %v1388
    %v2310 = vpop.f32.mrf.mxu0
    %v2311 = vadd.f32 %v2222, %v2310
    %v2312 = vpop.f32.mrf.mxu0
    %v2313 = vadd.f32 %v2224, %v2312
    %2314 = vdwg.mxu0
    %2315 = vmatpush.bf16.msra.mxu0 %v1700
    %2316 = vmatpush.bf16.msra.mxu0 %v1698
    %2317 = vmatpush.bf16.msra.mxu0 %v1696
    %2318 = vmatpush.bf16.msra.mxu0 %v1694
    %2319 = vmatpush.bf16.msra.mxu0 %v1692
    %2320 = vmatpush.bf16.msra.mxu0 %v1690
    %2321 = vmatpush.bf16.msra.mxu0 %v1688
    %2322 = vmatpush.bf16.msra.mxu0 %v1686
    %2323 = vmatmul.bf16.gmra.mxu0 %v1329
    %v2324 = vpop.f32.mrf.mxu0
    %v2325 = vadd.f32 %v2236, %v2324
    %v2326 = vpop.f32.mrf.mxu0
    %v2327 = vadd.f32 %v2238, %v2326
    %2328 = vmatmul.bf16.gmra.mxu0 %v1333
    %v2329 = vpop.f32.mrf.mxu0
    %v2330 = vadd.f32 %v2241, %v2329
    %v2331 = vpop.f32.mrf.mxu0
    %v2332 = vadd.f32 %v2243, %v2331
    %2333 = vmatmul.bf16.gmra.mxu0 %v1337
    %v2334 = vpop.f32.mrf.mxu0
    %v2335 = vadd.f32 %v2246, %v2334
    %v2336 = vpop.f32.mrf.mxu0
    %v2337 = vadd.f32 %v2248, %v2336
    %2338 = vmatmul.bf16.gmra.mxu0 %v1341
    %v2339 = vpop.f32.mrf.mxu0
    %v2340 = vadd.f32 %v2251, %v2339
    %v2341 = vpop.f32.mrf.mxu0
    %v2342 = vadd.f32 %v2253, %v2341
    %2343 = vmatmul.bf16.gmra.mxu0 %v1345
    %v2344 = vpop.f32.mrf.mxu0
    %v2345 = vadd.f32 %v2256, %v2344
    %v2346 = vpop.f32.mrf.mxu0
    %v2347 = vadd.f32 %v2258, %v2346
    %2348 = vmatmul.bf16.gmra.mxu0 %v1349
    %v2349 = vpop.f32.mrf.mxu0
    %v2350 = vadd.f32 %v2261, %v2349
    %v2351 = vpop.f32.mrf.mxu0
    %v2352 = vadd.f32 %v2263, %v2351
    %2353 = vmatmul.bf16.gmra.mxu0 %v1353
    %v2354 = vpop.f32.mrf.mxu0
    %v2355 = vadd.f32 %v2266, %v2354
    %v2356 = vpop.f32.mrf.mxu0
    %v2357 = vadd.f32 %v2268, %v2356
    %2358 = vmatmul.bf16.gmra.mxu0 %v1357
    %v2359 = vpop.f32.mrf.mxu0
    %v2360 = vadd.f32 %v2271, %v2359
    %v2361 = vpop.f32.mrf.mxu0
    %v2362 = vadd.f32 %v2273, %v2361
    %2363 = vmatmul.bf16.gmra.mxu0 %v1361
    %v2364 = vpop.f32.mrf.mxu0
    %v2365 = vadd.f32 %v2276, %v2364
    %v2366 = vpop.f32.mrf.mxu0
    %v2367 = vadd.f32 %v2278, %v2366
    %2368 = vmatmul.bf16.gmra.mxu0 %v1365
    %v2369 = vpop.f32.mrf.mxu0
    %v2370 = vadd.f32 %v2281, %v2369
    %v2371 = vpop.f32.mrf.mxu0
    %v2372 = vadd.f32 %v2283, %v2371
    %2373 = vmatmul.bf16.gmra.mxu0 %v1369
    %v2374 = vpop.f32.mrf.mxu0
    %v2375 = vadd.f32 %v2286, %v2374
    %v2376 = vpop.f32.mrf.mxu0
    %v2377 = vadd.f32 %v2288, %v2376
    %2378 = vmatmul.bf16.gmra.mxu0 %v1373
    %v2379 = vpop.f32.mrf.mxu0
    %v2380 = vadd.f32 %v2291, %v2379
    %v2381 = vpop.f32.mrf.mxu0
    %v2382 = vadd.f32 %v2293, %v2381
    %2383 = vmatmul.bf16.gmra.mxu0 %v1377
    %v2384 = vpop.f32.mrf.mxu0
    %v2385 = vadd.f32 %v2296, %v2384
    %v2386 = vpop.f32.mrf.mxu0
    %v2387 = vadd.f32 %v2298, %v2386
    %2388 = vmatmul.bf16.gmra.mxu0 %v1381
    %v2389 = vpop.f32.mrf.mxu0
    %v2390 = vadd.f32 %v2301, %v2389
    %v2391 = vpop.f32.mrf.mxu0
    %v2392 = vadd.f32 %v2303, %v2391
    %2393 = vmatmul.bf16.gmra.mxu0 %v1385
    %v2394 = vpop.f32.mrf.mxu0
    %v2395 = vadd.f32 %v2306, %v2394
    %v2396 = vpop.f32.mrf.mxu0
    %v2397 = vadd.f32 %v2308, %v2396
    %2398 = vmatmul.bf16.gmra.mxu0 %v1389
    %v2399 = vpop.f32.mrf.mxu0
    %v2400 = vadd.f32 %v2311, %v2399
    %v2401 = vpop.f32.mrf.mxu0
    %v2402 = vadd.f32 %v2313, %v2401
    %2403 = vdwg.mxu0
    %2404 = vmatpush.bf16.msra.mxu0 %v1716
    %2405 = vmatpush.bf16.msra.mxu0 %v1714
    %2406 = vmatpush.bf16.msra.mxu0 %v1712
    %2407 = vmatpush.bf16.msra.mxu0 %v1710
    %2408 = vmatpush.bf16.msra.mxu0 %v1708
    %2409 = vmatpush.bf16.msra.mxu0 %v1706
    %2410 = vmatpush.bf16.msra.mxu0 %v1704
    %2411 = vmatpush.bf16.msra.mxu0 %v1702
    %2412 = vmatmul.bf16.gmra.mxu0 %v1330
    %v2413 = vpop.f32.mrf.mxu0
    %v2414 = vadd.f32 %v2325, %v2413
    %v2415 = vpop.f32.mrf.mxu0
    %v2416 = vadd.f32 %v2327, %v2415
    %2417 = vmatmul.bf16.gmra.mxu0 %v1334
    %v2418 = vpop.f32.mrf.mxu0
    %v2419 = vadd.f32 %v2330, %v2418
    %v2420 = vpop.f32.mrf.mxu0
    %v2421 = vadd.f32 %v2332, %v2420
    %2422 = vmatmul.bf16.gmra.mxu0 %v1338
    %v2423 = vpop.f32.mrf.mxu0
    %v2424 = vadd.f32 %v2335, %v2423
    %v2425 = vpop.f32.mrf.mxu0
    %v2426 = vadd.f32 %v2337, %v2425
    %2427 = vmatmul.bf16.gmra.mxu0 %v1342
    %v2428 = vpop.f32.mrf.mxu0
    %v2429 = vadd.f32 %v2340, %v2428
    %v2430 = vpop.f32.mrf.mxu0
    %v2431 = vadd.f32 %v2342, %v2430
    %2432 = vmatmul.bf16.gmra.mxu0 %v1346
    %v2433 = vpop.f32.mrf.mxu0
    %v2434 = vadd.f32 %v2345, %v2433
    %v2435 = vpop.f32.mrf.mxu0
    %v2436 = vadd.f32 %v2347, %v2435
    %2437 = vmatmul.bf16.gmra.mxu0 %v1350
    %v2438 = vpop.f32.mrf.mxu0
    %v2439 = vadd.f32 %v2350, %v2438
    %v2440 = vpop.f32.mrf.mxu0
    %v2441 = vadd.f32 %v2352, %v2440
    %2442 = vmatmul.bf16.gmra.mxu0 %v1354
    %v2443 = vpop.f32.mrf.mxu0
    %v2444 = vadd.f32 %v2355, %v2443
    %v2445 = vpop.f32.mrf.mxu0
    %v2446 = vadd.f32 %v2357, %v2445
    %2447 = vmatmul.bf16.gmra.mxu0 %v1358
    %v2448 = vpop.f32.mrf.mxu0
    %v2449 = vadd.f32 %v2360, %v2448
    %v2450 = vpop.f32.mrf.mxu0
    %v2451 = vadd.f32 %v2362, %v2450
    %2452 = vmatmul.bf16.gmra.mxu0 %v1362
    %v2453 = vpop.f32.mrf.mxu0
    %v2454 = vadd.f32 %v2365, %v2453
    %v2455 = vpop.f32.mrf.mxu0
    %v2456 = vadd.f32 %v2367, %v2455
    %2457 = vmatmul.bf16.gmra.mxu0 %v1366
    %v2458 = vpop.f32.mrf.mxu0
    %v2459 = vadd.f32 %v2370, %v2458
    %v2460 = vpop.f32.mrf.mxu0
    %v2461 = vadd.f32 %v2372, %v2460
    %2462 = vmatmul.bf16.gmra.mxu0 %v1370
    %v2463 = vpop.f32.mrf.mxu0
    %v2464 = vadd.f32 %v2375, %v2463
    %v2465 = vpop.f32.mrf.mxu0
    %v2466 = vadd.f32 %v2377, %v2465
    %2467 = vmatmul.bf16.gmra.mxu0 %v1374
    %v2468 = vpop.f32.mrf.mxu0
    %v2469 = vadd.f32 %v2380, %v2468
    %v2470 = vpop.f32.mrf.mxu0
    %v2471 = vadd.f32 %v2382, %v2470
    %2472 = vmatmul.bf16.gmra.mxu0 %v1378
    %v2473 = vpop.f32.mrf.mxu0
    %v2474 = vadd.f32 %v2385, %v2473
    %v2475 = vpop.f32.mrf.mxu0
    %v2476 = vadd.f32 %v2387, %v2475
    %2477 = vmatmul.bf16.gmra.mxu0 %v1382
    %v2478 = vpop.f32.mrf.mxu0
    %v2479 = vadd.f32 %v2390, %v2478
    %v2480 = vpop.f32.mrf.mxu0
    %v2481 = vadd.f32 %v2392, %v2480
    %2482 = vmatmul.bf16.gmra.mxu0 %v1386
    %v2483 = vpop.f32.mrf.mxu0
    %v2484 = vadd.f32 %v2395, %v2483
    %v2485 = vpop.f32.mrf.mxu0
    %v2486 = vadd.f32 %v2397, %v2485
    %2487 = vmatmul.bf16.gmra.mxu0 %v1390
    %v2488 = vpop.f32.mrf.mxu0
    %v2489 = vadd.f32 %v2400, %v2488
    %v2490 = vpop.f32.mrf.mxu0
    %v2491 = vadd.f32 %v2402, %v2490
    %2492 = vdwg.mxu0
    %v2493 = vmax.f32 %v2058, 0.0
    %v2494 = vmax.f32 %v2414, 0.0
    %v2495 = vmax.f32 %v2060, 0.0
    %v2496 = vmax.f32 %v2416, 0.0
    %v2497 = vmax.f32 %v2063, 0.0
    %v2498 = vmax.f32 %v2419, 0.0
    %v2499 = vmax.f32 %v2065, 0.0
    %v2500 = vmax.f32 %v2421, 0.0
    %v2501 = vmax.f32 %v2068, 0.0
    %v2502 = vmax.f32 %v2424, 0.0
    %v2503 = vmax.f32 %v2070, 0.0
    %v2504 = vmax.f32 %v2426, 0.0
    %v2505 = vmax.f32 %v2073, 0.0
    %v2506 = vmax.f32 %v2429, 0.0
    %v2507 = vmax.f32 %v2075, 0.0
    %v2508 = vmax.f32 %v2431, 0.0
    %v2509 = vmax.f32 %v2078, 0.0
    %v2510 = vmax.f32 %v2434, 0.0
    %v2511 = vmax.f32 %v2080, 0.0
    %v2512 = vmax.f32 %v2436, 0.0
    %v2513 = vmax.f32 %v2083, 0.0
    %v2514 = vmax.f32 %v2439, 0.0
    %v2515 = vmax.f32 %v2085, 0.0
    %v2516 = vmax.f32 %v2441, 0.0
    %v2517 = vmax.f32 %v2088, 0.0
    %v2518 = vmax.f32 %v2444, 0.0
    %v2519 = vmax.f32 %v2090, 0.0
    %v2520 = vmax.f32 %v2446, 0.0
    %v2521 = vmax.f32 %v2093, 0.0
    %v2522 = vmax.f32 %v2449, 0.0
    %v2523 = vmax.f32 %v2095, 0.0
    %v2524 = vmax.f32 %v2451, 0.0
    %v2525 = vmax.f32 %v2098, 0.0
    %v2526 = vmax.f32 %v2454, 0.0
    %v2527 = vmax.f32 %v2100, 0.0
    %v2528 = vmax.f32 %v2456, 0.0
    %v2529 = vmax.f32 %v2103, 0.0
    %v2530 = vmax.f32 %v2459, 0.0
    %v2531 = vmax.f32 %v2105, 0.0
    %v2532 = vmax.f32 %v2461, 0.0
    %v2533 = vmax.f32 %v2108, 0.0
    %v2534 = vmax.f32 %v2464, 0.0
    %v2535 = vmax.f32 %v2110, 0.0
    %v2536 = vmax.f32 %v2466, 0.0
    %v2537 = vmax.f32 %v2113, 0.0
    %v2538 = vmax.f32 %v2469, 0.0
    %v2539 = vmax.f32 %v2115, 0.0
    %v2540 = vmax.f32 %v2471, 0.0
    %v2541 = vmax.f32 %v2118, 0.0
    %v2542 = vmax.f32 %v2474, 0.0
    %v2543 = vmax.f32 %v2120, 0.0
    %v2544 = vmax.f32 %v2476, 0.0
    %v2545 = vmax.f32 %v2123, 0.0
    %v2546 = vmax.f32 %v2479, 0.0
    %v2547 = vmax.f32 %v2125, 0.0
    %v2548 = vmax.f32 %v2481, 0.0
    %v2549 = vmax.f32 %v2128, 0.0
    %v2550 = vmax.f32 %v2484, 0.0
    %v2551 = vmax.f32 %v2130, 0.0
    %v2552 = vmax.f32 %v2486, 0.0
    %v2553 = vmax.f32 %v2133, 0.0
    %v2554 = vmax.f32 %v2489, 0.0
    %v2555 = vmax.f32 %v2135, 0.0
    %v2556 = vmax.f32 %v2491, 0.0
    %v2557 = vpack.c.bf16 %v2495, %v2493
    %v2558 = vpack.c.bf16 %v2496, %v2494
    %v2559 = vpack.c.bf16 %v2499, %v2497
    %v2560 = vpack.c.bf16 %v2500, %v2498
    %v2561 = vpack.c.bf16 %v2503, %v2501
    %v2562 = vpack.c.bf16 %v2504, %v2502
    %v2563 = vpack.c.bf16 %v2507, %v2505
    %v2564 = vpack.c.bf16 %v2508, %v2506
    %v2565 = vpack.c.bf16 %v2511, %v2509
    %v2566 = vpack.c.bf16 %v2512, %v2510
    %v2567 = vpack.c.bf16 %v2515, %v2513
    %v2568 = vpack.c.bf16 %v2516, %v2514
    %v2569 = vpack.c.bf16 %v2519, %v2517
    %v2570 = vpack.c.bf16 %v2520, %v2518
    %v2571 = vpack.c.bf16 %v2523, %v2521
    %v2572 = vpack.c.bf16 %v2524, %v2522
    %v2573 = vpack.c.bf16 %v2527, %v2525
    %v2574 = vpack.c.bf16 %v2528, %v2526
    %v2575 = vpack.c.bf16 %v2531, %v2529
    %v2576 = vpack.c.bf16 %v2532, %v2530
    %v2577 = vpack.c.bf16 %v2535, %v2533
    %v2578 = vpack.c.bf16 %v2536, %v2534
    %v2579 = vpack.c.bf16 %v2539, %v2537
    %v2580 = vpack.c.bf16 %v2540, %v2538
    %v2581 = vpack.c.bf16 %v2543, %v2541
    %v2582 = vpack.c.bf16 %v2544, %v2542
    %v2583 = vpack.c.bf16 %v2547, %v2545
    %v2584 = vpack.c.bf16 %v2548, %v2546
    %v2585 = vpack.c.bf16 %v2551, %v2549
    %v2586 = vpack.c.bf16 %v2552, %v2550
    %v2587 = vpack.c.bf16 %v2555, %v2553
    %v2588 = vpack.c.bf16 %v2556, %v2554
    %v2589 = vld [vmem:[#allocation8] sm:$0xff]
    %v2590 = vld [vmem:[#allocation8 + $0x8] sm:$0xff]
    %v2591 = vld [vmem:[#allocation8 + $0x10] sm:$0xff]
    %v2592 = vld [vmem:[#allocation8 + $0x18] sm:$0xff]
    %v2593 = vld [vmem:[#allocation8 + $0x20] sm:$0xff]
    %v2594 = vld [vmem:[#allocation8 + $0x28] sm:$0xff]
    %v2595 = vld [vmem:[#allocation8 + $0x30] sm:$0xff]
    %v2596 = vld [vmem:[#allocation8 + $0x38] sm:$0xff]
    %v2597 = vld [vmem:[#allocation8 + $0x40] sm:$0xff]
    %v2598 = vld [vmem:[#allocation8 + $0x48] sm:$0xff]
    %v2599 = vld [vmem:[#allocation8 + $0x50] sm:$0xff]
    %v2600 = vld [vmem:[#allocation8 + $0x58] sm:$0xff]
    %v2601 = vld [vmem:[#allocation8 + $0x60] sm:$0xff]
    %v2602 = vld [vmem:[#allocation8 + $0x68] sm:$0xff]
    %v2603 = vld [vmem:[#allocation8 + $0x70] sm:$0xff]
    %v2604 = vld [vmem:[#allocation8 + $0x78] sm:$0xff]
    %v2605 = vld [vmem:[#allocation8 + $0x80] sm:$0xff]
    %v2606 = vld [vmem:[#allocation8 + $0x88] sm:$0xff]
    %v2607 = vld [vmem:[#allocation8 + $0x90] sm:$0xff]
    %v2608 = vld [vmem:[#allocation8 + $0x98] sm:$0xff]
    %v2609 = vld [vmem:[#allocation8 + $0xa0] sm:$0xff]
    %v2610 = vld [vmem:[#allocation8 + $0xa8] sm:$0xff]
    %v2611 = vld [vmem:[#allocation8 + $0xb0] sm:$0xff]
    %v2612 = vld [vmem:[#allocation8 + $0xb8] sm:$0xff]
    %v2613 = vld [vmem:[#allocation8 + $0xc0] sm:$0xff]
    %v2614 = vld [vmem:[#allocation8 + $0xc8] sm:$0xff]
    %v2615 = vld [vmem:[#allocation8 + $0xd0] sm:$0xff]
    %v2616 = vld [vmem:[#allocation8 + $0xd8] sm:$0xff]
    %v2617 = vld [vmem:[#allocation8 + $0xe0] sm:$0xff]
    %v2618 = vld [vmem:[#allocation8 + $0xe8] sm:$0xff]
    %v2619 = vld [vmem:[#allocation8 + $0xf0] sm:$0xff]
    %v2620 = vld [vmem:[#allocation8 + $0xf8] sm:$0xff]
    %v2621 = vld [vmem:[#allocation9] sm:$0x3]
    %v2623 = vperm.slane %v2621, 0
    %v2624 = vperm.slane %v2621, 1
    %v2659 = vunpack.c.l.b16 %v2589
    %v2660 = vunpack.c.h.b16 %v2589
    %v2661 = vunpack.c.l.b16 %v2590
    %v2662 = vunpack.c.h.b16 %v2590
    %v2663 = vunpack.c.l.b16 %v2591
    %v2664 = vunpack.c.h.b16 %v2591
    %v2665 = vunpack.c.l.b16 %v2592
    %v2666 = vunpack.c.h.b16 %v2592
    %v2667 = vunpack.c.l.b16 %v2593
    %v2668 = vunpack.c.h.b16 %v2593
    %v2669 = vunpack.c.l.b16 %v2594
    %v2670 = vunpack.c.h.b16 %v2594
    %v2671 = vunpack.c.l.b16 %v2595
    %v2672 = vunpack.c.h.b16 %v2595
    %v2673 = vunpack.c.l.b16 %v2596
    %v2674 = vunpack.c.h.b16 %v2596
    %v2675 = vunpack.c.l.b16 %v2597
    %v2676 = vunpack.c.h.b16 %v2597
    %v2677 = vunpack.c.l.b16 %v2598
    %v2678 = vunpack.c.h.b16 %v2598
    %v2679 = vunpack.c.l.b16 %v2599
    %v2680 = vunpack.c.h.b16 %v2599
    %v2681 = vunpack.c.l.b16 %v2600
    %v2682 = vunpack.c.h.b16 %v2600
    %v2683 = vunpack.c.l.b16 %v2601
    %v2684 = vunpack.c.h.b16 %v2601
    %v2685 = vunpack.c.l.b16 %v2602
    %v2686 = vunpack.c.h.b16 %v2602
    %v2687 = vunpack.c.l.b16 %v2603
    %v2688 = vunpack.c.h.b16 %v2603
    %v2689 = vunpack.c.l.b16 %v2604
    %v2690 = vunpack.c.h.b16 %v2604
    %v2691 = vunpack.c.l.b16 %v2605
    %v2692 = vunpack.c.h.b16 %v2605
    %v2693 = vunpack.c.l.b16 %v2606
    %v2694 = vunpack.c.h.b16 %v2606
    %v2695 = vunpack.c.l.b16 %v2607
    %v2696 = vunpack.c.h.b16 %v2607
    %v2697 = vunpack.c.l.b16 %v2608
    %v2698 = vunpack.c.h.b16 %v2608
    %v2699 = vunpack.c.l.b16 %v2609
    %v2700 = vunpack.c.h.b16 %v2609
    %v2701 = vunpack.c.l.b16 %v2610
    %v2702 = vunpack.c.h.b16 %v2610
    %v2703 = vunpack.c.l.b16 %v2611
    %v2704 = vunpack.c.h.b16 %v2611
    %v2705 = vunpack.c.l.b16 %v2612
    %v2706 = vunpack.c.h.b16 %v2612
    %v2707 = vunpack.c.l.b16 %v2613
    %v2708 = vunpack.c.h.b16 %v2613
    %v2709 = vunpack.c.l.b16 %v2614
    %v2710 = vunpack.c.h.b16 %v2614
    %v2711 = vunpack.c.l.b16 %v2615
    %v2712 = vunpack.c.h.b16 %v2615
    %v2713 = vunpack.c.l.b16 %v2616
    %v2714 = vunpack.c.h.b16 %v2616
    %v2715 = vunpack.c.l.b16 %v2617
    %v2716 = vunpack.c.h.b16 %v2617
    %v2717 = vunpack.c.l.b16 %v2618
    %v2718 = vunpack.c.h.b16 %v2618
    %v2719 = vunpack.c.l.b16 %v2619
    %v2720 = vunpack.c.h.b16 %v2619
    %v2721 = vunpack.c.l.b16 %v2620
    %v2722 = vunpack.c.h.b16 %v2620
    %v2723 = vpack.c.b16 %v2661, %v2659
    %v2724 = vpack.c.b16 %v2662, %v2660
    %v2725 = vpack.c.b16 %v2665, %v2663
    %v2726 = vpack.c.b16 %v2666, %v2664
    %v2727 = vpack.c.b16 %v2669, %v2667
    %v2728 = vpack.c.b16 %v2670, %v2668
    %v2729 = vpack.c.b16 %v2673, %v2671
    %v2730 = vpack.c.b16 %v2674, %v2672
    %v2731 = vpack.c.b16 %v2677, %v2675
    %v2732 = vpack.c.b16 %v2678, %v2676
    %v2733 = vpack.c.b16 %v2681, %v2679
    %v2734 = vpack.c.b16 %v2682, %v2680
    %v2735 = vpack.c.b16 %v2685, %v2683
    %v2736 = vpack.c.b16 %v2686, %v2684
    %v2737 = vpack.c.b16 %v2689, %v2687
    %v2738 = vpack.c.b16 %v2690, %v2688
    %v2739 = vpack.c.b16 %v2693, %v2691
    %v2740 = vpack.c.b16 %v2694, %v2692
    %v2741 = vpack.c.b16 %v2697, %v2695
    %v2742 = vpack.c.b16 %v2698, %v2696
    %v2743 = vpack.c.b16 %v2701, %v2699
    %v2744 = vpack.c.b16 %v2702, %v2700
    %v2745 = vpack.c.b16 %v2705, %v2703
    %v2746 = vpack.c.b16 %v2706, %v2704
    %v2747 = vpack.c.b16 %v2709, %v2707
    %v2748 = vpack.c.b16 %v2710, %v2708
    %v2749 = vpack.c.b16 %v2713, %v2711
    %v2750 = vpack.c.b16 %v2714, %v2712
    %v2751 = vpack.c.b16 %v2717, %v2715
    %v2752 = vpack.c.b16 %v2718, %v2716
    %v2753 = vpack.c.b16 %v2721, %v2719
    %v2754 = vpack.c.b16 %v2722, %v2720
    %2787 = vmatpush.bf16.msra.mxu0 %v2737
    %2788 = vmatpush.bf16.msra.mxu0 %v2735
    %2789 = vmatpush.bf16.msra.mxu0 %v2733
    %2790 = vmatpush.bf16.msra.mxu0 %v2731
    %2791 = vmatpush.bf16.msra.mxu0 %v2729
    %2792 = vmatpush.bf16.msra.mxu0 %v2727
    %2793 = vmatpush.bf16.msra.mxu0 %v2725
    %2794 = vmatpush.bf16.msra.mxu0 %v2723
    %2795 = vmatmul.bf16.gmra.mxu0 %v2557
    %v2796 = vpop.f32.mrf.mxu0
    %v2797 = vadd.f32 %v2623, %v2796
    %v2798 = vpop.f32.mrf.mxu0
    %v2799 = vadd.f32 %v2623, %v2798
    %2800 = vmatmul.bf16.gmra.mxu0 %v2559
    %v2801 = vpop.f32.mrf.mxu0
    %v2802 = vadd.f32 %v2623, %v2801
    %v2803 = vpop.f32.mrf.mxu0
    %v2804 = vadd.f32 %v2623, %v2803
    %2805 = vmatmul.bf16.gmra.mxu0 %v2561
    %v2806 = vpop.f32.mrf.mxu0
    %v2807 = vadd.f32 %v2623, %v2806
    %v2808 = vpop.f32.mrf.mxu0
    %v2809 = vadd.f32 %v2623, %v2808
    %2810 = vmatmul.bf16.gmra.mxu0 %v2563
    %v2811 = vpop.f32.mrf.mxu0
    %v2812 = vadd.f32 %v2623, %v2811
    %v2813 = vpop.f32.mrf.mxu0
    %v2814 = vadd.f32 %v2623, %v2813
    %2815 = vmatmul.bf16.gmra.mxu0 %v2565
    %v2816 = vpop.f32.mrf.mxu0
    %v2817 = vadd.f32 %v2623, %v2816
    %v2818 = vpop.f32.mrf.mxu0
    %v2819 = vadd.f32 %v2623, %v2818
    %2820 = vmatmul.bf16.gmra.mxu0 %v2567
    %v2821 = vpop.f32.mrf.mxu0
    %v2822 = vadd.f32 %v2623, %v2821
    %v2823 = vpop.f32.mrf.mxu0
    %v2824 = vadd.f32 %v2623, %v2823
    %2825 = vmatmul.bf16.gmra.mxu0 %v2569
    %v2826 = vpop.f32.mrf.mxu0
    %v2827 = vadd.f32 %v2623, %v2826
    %v2828 = vpop.f32.mrf.mxu0
    %v2829 = vadd.f32 %v2623, %v2828
    %2830 = vmatmul.bf16.gmra.mxu0 %v2571
    %v2831 = vpop.f32.mrf.mxu0
    %v2832 = vadd.f32 %v2623, %v2831
    %v2833 = vpop.f32.mrf.mxu0
    %v2834 = vadd.f32 %v2623, %v2833
    %2835 = vmatmul.bf16.gmra.mxu0 %v2573
    %v2836 = vpop.f32.mrf.mxu0
    %v2837 = vadd.f32 %v2623, %v2836
    %v2838 = vpop.f32.mrf.mxu0
    %v2839 = vadd.f32 %v2623, %v2838
    %2840 = vmatmul.bf16.gmra.mxu0 %v2575
    %v2841 = vpop.f32.mrf.mxu0
    %v2842 = vadd.f32 %v2623, %v2841
    %v2843 = vpop.f32.mrf.mxu0
    %v2844 = vadd.f32 %v2623, %v2843
    %2845 = vmatmul.bf16.gmra.mxu0 %v2577
    %v2846 = vpop.f32.mrf.mxu0
    %v2847 = vadd.f32 %v2623, %v2846
    %v2848 = vpop.f32.mrf.mxu0
    %v2849 = vadd.f32 %v2623, %v2848
    %2850 = vmatmul.bf16.gmra.mxu0 %v2579
    %v2851 = vpop.f32.mrf.mxu0
    %v2852 = vadd.f32 %v2623, %v2851
    %v2853 = vpop.f32.mrf.mxu0
    %v2854 = vadd.f32 %v2623, %v2853
    %2855 = vmatmul.bf16.gmra.mxu0 %v2581
    %v2856 = vpop.f32.mrf.mxu0
    %v2857 = vadd.f32 %v2623, %v2856
    %v2858 = vpop.f32.mrf.mxu0
    %v2859 = vadd.f32 %v2623, %v2858
    %2860 = vmatmul.bf16.gmra.mxu0 %v2583
    %v2861 = vpop.f32.mrf.mxu0
    %v2862 = vadd.f32 %v2623, %v2861
    %v2863 = vpop.f32.mrf.mxu0
    %v2864 = vadd.f32 %v2623, %v2863
    %2865 = vmatmul.bf16.gmra.mxu0 %v2585
    %v2866 = vpop.f32.mrf.mxu0
    %v2867 = vadd.f32 %v2623, %v2866
    %v2868 = vpop.f32.mrf.mxu0
    %v2869 = vadd.f32 %v2623, %v2868
    %2870 = vmatmul.bf16.gmra.mxu0 %v2587
    %v2871 = vpop.f32.mrf.mxu0
    %v2872 = vadd.f32 %v2623, %v2871
    %v2873 = vpop.f32.mrf.mxu0
    %v2874 = vadd.f32 %v2623, %v2873
    %2875 = vdwg.mxu0
    %2876 = vmatpush.bf16.msra.mxu0 %v2753
    %2877 = vmatpush.bf16.msra.mxu0 %v2751
    %2878 = vmatpush.bf16.msra.mxu0 %v2749
    %2879 = vmatpush.bf16.msra.mxu0 %v2747
    %2880 = vmatpush.bf16.msra.mxu0 %v2745
    %2881 = vmatpush.bf16.msra.mxu0 %v2743
    %2882 = vmatpush.bf16.msra.mxu0 %v2741
    %2883 = vmatpush.bf16.msra.mxu0 %v2739
    %2884 = vmatmul.bf16.gmra.mxu0 %v2558
    %v2885 = vpop.f32.mrf.mxu0
    %v2886 = vadd.f32 %v2797, %v2885
    %v2887 = vpop.f32.mrf.mxu0
    %v2888 = vadd.f32 %v2799, %v2887
    %2889 = vmatmul.bf16.gmra.mxu0 %v2560
    %v2890 = vpop.f32.mrf.mxu0
    %v2891 = vadd.f32 %v2802, %v2890
    %v2892 = vpop.f32.mrf.mxu0
    %v2893 = vadd.f32 %v2804, %v2892
    %2894 = vmatmul.bf16.gmra.mxu0 %v2562
    %v2895 = vpop.f32.mrf.mxu0
    %v2896 = vadd.f32 %v2807, %v2895
    %v2897 = vpop.f32.mrf.mxu0
    %v2898 = vadd.f32 %v2809, %v2897
    %2899 = vmatmul.bf16.gmra.mxu0 %v2564
    %v2900 = vpop.f32.mrf.mxu0
    %v2901 = vadd.f32 %v2812, %v2900
    %v2902 = vpop.f32.mrf.mxu0
    %v2903 = vadd.f32 %v2814, %v2902
    %2904 = vmatmul.bf16.gmra.mxu0 %v2566
    %v2905 = vpop.f32.mrf.mxu0
    %v2906 = vadd.f32 %v2817, %v2905
    %v2907 = vpop.f32.mrf.mxu0
    %v2908 = vadd.f32 %v2819, %v2907
    %2909 = vmatmul.bf16.gmra.mxu0 %v2568
    %v2910 = vpop.f32.mrf.mxu0
    %v2911 = vadd.f32 %v2822, %v2910
    %v2912 = vpop.f32.mrf.mxu0
    %v2913 = vadd.f32 %v2824, %v2912
    %2914 = vmatmul.bf16.gmra.mxu0 %v2570
    %v2915 = vpop.f32.mrf.mxu0
    %v2916 = vadd.f32 %v2827, %v2915
    %v2917 = vpop.f32.mrf.mxu0
    %v2918 = vadd.f32 %v2829, %v2917
    %2919 = vmatmul.bf16.gmra.mxu0 %v2572
    %v2920 = vpop.f32.mrf.mxu0
    %v2921 = vadd.f32 %v2832, %v2920
    %v2922 = vpop.f32.mrf.mxu0
    %v2923 = vadd.f32 %v2834, %v2922
    %2924 = vmatmul.bf16.gmra.mxu0 %v2574
    %v2925 = vpop.f32.mrf.mxu0
    %v2926 = vadd.f32 %v2837, %v2925
    %v2927 = vpop.f32.mrf.mxu0
    %v2928 = vadd.f32 %v2839, %v2927
    %2929 = vmatmul.bf16.gmra.mxu0 %v2576
    %v2930 = vpop.f32.mrf.mxu0
    %v2931 = vadd.f32 %v2842, %v2930
    %v2932 = vpop.f32.mrf.mxu0
    %v2933 = vadd.f32 %v2844, %v2932
    %2934 = vmatmul.bf16.gmra.mxu0 %v2578
    %v2935 = vpop.f32.mrf.mxu0
    %v2936 = vadd.f32 %v2847, %v2935
    %v2937 = vpop.f32.mrf.mxu0
    %v2938 = vadd.f32 %v2849, %v2937
    %2939 = vmatmul.bf16.gmra.mxu0 %v2580
    %v2940 = vpop.f32.mrf.mxu0
    %v2941 = vadd.f32 %v2852, %v2940
    %v2942 = vpop.f32.mrf.mxu0
    %v2943 = vadd.f32 %v2854, %v2942
    %2944 = vmatmul.bf16.gmra.mxu0 %v2582
    %v2945 = vpop.f32.mrf.mxu0
    %v2946 = vadd.f32 %v2857, %v2945
    %v2947 = vpop.f32.mrf.mxu0
    %v2948 = vadd.f32 %v2859, %v2947
    %2949 = vmatmul.bf16.gmra.mxu0 %v2584
    %v2950 = vpop.f32.mrf.mxu0
    %v2951 = vadd.f32 %v2862, %v2950
    %v2952 = vpop.f32.mrf.mxu0
    %v2953 = vadd.f32 %v2864, %v2952
    %2954 = vmatmul.bf16.gmra.mxu0 %v2586
    %v2955 = vpop.f32.mrf.mxu0
    %v2956 = vadd.f32 %v2867, %v2955
    %v2957 = vpop.f32.mrf.mxu0
    %v2958 = vadd.f32 %v2869, %v2957
    %2959 = vmatmul.bf16.gmra.mxu0 %v2588
    %v2960 = vpop.f32.mrf.mxu0
    %v2961 = vadd.f32 %v2872, %v2960
    %v2962 = vpop.f32.mrf.mxu0
    %v2963 = vadd.f32 %v2874, %v2962
    %2964 = vdwg.mxu0
    %2965 = vmatpush.bf16.msra.mxu0 %v2738
    %2966 = vmatpush.bf16.msra.mxu0 %v2736
    %2967 = vmatpush.bf16.msra.mxu0 %v2734
    %2968 = vmatpush.bf16.msra.mxu0 %v2732
    %2969 = vmatpush.bf16.msra.mxu0 %v2730
    %2970 = vmatpush.bf16.msra.mxu0 %v2728
    %2971 = vmatpush.bf16.msra.mxu0 %v2726
    %2972 = vmatpush.bf16.msra.mxu0 %v2724
    %2973 = vmatmul.bf16.gmra.mxu0 %v2557
    %v2974 = vpop.f32.mrf.mxu0
    %v2975 = vadd.f32 %v2624, %v2974
    %v2976 = vpop.f32.mrf.mxu0
    %v2977 = vadd.f32 %v2624, %v2976
    %2978 = vmatmul.bf16.gmra.mxu0 %v2559
    %v2979 = vpop.f32.mrf.mxu0
    %v2980 = vadd.f32 %v2624, %v2979
    %v2981 = vpop.f32.mrf.mxu0
    %v2982 = vadd.f32 %v2624, %v2981
    %2983 = vmatmul.bf16.gmra.mxu0 %v2561
    %v2984 = vpop.f32.mrf.mxu0
    %v2985 = vadd.f32 %v2624, %v2984
    %v2986 = vpop.f32.mrf.mxu0
    %v2987 = vadd.f32 %v2624, %v2986
    %2988 = vmatmul.bf16.gmra.mxu0 %v2563
    %v2989 = vpop.f32.mrf.mxu0
    %v2990 = vadd.f32 %v2624, %v2989
    %v2991 = vpop.f32.mrf.mxu0
    %v2992 = vadd.f32 %v2624, %v2991
    %2993 = vmatmul.bf16.gmra.mxu0 %v2565
    %v2994 = vpop.f32.mrf.mxu0
    %v2995 = vadd.f32 %v2624, %v2994
    %v2996 = vpop.f32.mrf.mxu0
    %v2997 = vadd.f32 %v2624, %v2996
    %2998 = vmatmul.bf16.gmra.mxu0 %v2567
    %v2999 = vpop.f32.mrf.mxu0
    %v3000 = vadd.f32 %v2624, %v2999
    %v3001 = vpop.f32.mrf.mxu0
    %v3002 = vadd.f32 %v2624, %v3001
    %3003 = vmatmul.bf16.gmra.mxu0 %v2569
    %v3004 = vpop.f32.mrf.mxu0
    %v3005 = vadd.f32 %v2624, %v3004
    %v3006 = vpop.f32.mrf.mxu0
    %v3007 = vadd.f32 %v2624, %v3006
    %3008 = vmatmul.bf16.gmra.mxu0 %v2571
    %v3009 = vpop.f32.mrf.mxu0
    %v3010 = vadd.f32 %v2624, %v3009
    %v3011 = vpop.f32.mrf.mxu0
    %v3012 = vadd.f32 %v2624, %v3011
    %3013 = vmatmul.bf16.gmra.mxu0 %v2573
    %v3014 = vpop.f32.mrf.mxu0
    %v3015 = vadd.f32 %v2624, %v3014
    %v3016 = vpop.f32.mrf.mxu0
    %v3017 = vadd.f32 %v2624, %v3016
    %3018 = vmatmul.bf16.gmra.mxu0 %v2575
    %v3019 = vpop.f32.mrf.mxu0
    %v3020 = vadd.f32 %v2624, %v3019
    %v3021 = vpop.f32.mrf.mxu0
    %v3022 = vadd.f32 %v2624, %v3021
    %3023 = vmatmul.bf16.gmra.mxu0 %v2577
    %v3024 = vpop.f32.mrf.mxu0
    %v3025 = vadd.f32 %v2624, %v3024
    %v3026 = vpop.f32.mrf.mxu0
    %v3027 = vadd.f32 %v2624, %v3026
    %3028 = vmatmul.bf16.gmra.mxu0 %v2579
    %v3029 = vpop.f32.mrf.mxu0
    %v3030 = vadd.f32 %v2624, %v3029
    %v3031 = vpop.f32.mrf.mxu0
    %v3032 = vadd.f32 %v2624, %v3031
    %3033 = vmatmul.bf16.gmra.mxu0 %v2581
    %v3034 = vpop.f32.mrf.mxu0
    %v3035 = vadd.f32 %v2624, %v3034
    %v3036 = vpop.f32.mrf.mxu0
    %v3037 = vadd.f32 %v2624, %v3036
    %3038 = vmatmul.bf16.gmra.mxu0 %v2583
    %v3039 = vpop.f32.mrf.mxu0
    %v3040 = vadd.f32 %v2624, %v3039
    %v3041 = vpop.f32.mrf.mxu0
    %v3042 = vadd.f32 %v2624, %v3041
    %3043 = vmatmul.bf16.gmra.mxu0 %v2585
    %v3044 = vpop.f32.mrf.mxu0
    %v3045 = vadd.f32 %v2624, %v3044
    %v3046 = vpop.f32.mrf.mxu0
    %v3047 = vadd.f32 %v2624, %v3046
    %3048 = vmatmul.bf16.gmra.mxu0 %v2587
    %v3049 = vpop.f32.mrf.mxu0
    %v3050 = vadd.f32 %v2624, %v3049
    %v3051 = vpop.f32.mrf.mxu0
    %v3052 = vadd.f32 %v2624, %v3051
    %3053 = vdwg.mxu0
    %3054 = vmatpush.bf16.msra.mxu0 %v2754
    %3055 = vmatpush.bf16.msra.mxu0 %v2752
    %3056 = vmatpush.bf16.msra.mxu0 %v2750
    %3057 = vmatpush.bf16.msra.mxu0 %v2748
    %3058 = vmatpush.bf16.msra.mxu0 %v2746
    %3059 = vmatpush.bf16.msra.mxu0 %v2744
    %3060 = vmatpush.bf16.msra.mxu0 %v2742
    %3061 = vmatpush.bf16.msra.mxu0 %v2740
    %3062 = vmatmul.bf16.gmra.mxu0 %v2558
    %v3063 = vpop.f32.mrf.mxu0
    %v3064 = vadd.f32 %v2975, %v3063
    %v3065 = vpop.f32.mrf.mxu0
    %v3066 = vadd.f32 %v2977, %v3065
    %3067 = vmatmul.bf16.gmra.mxu0 %v2560
    %v3068 = vpop.f32.mrf.mxu0
    %v3069 = vadd.f32 %v2980, %v3068
    %v3070 = vpop.f32.mrf.mxu0
    %v3071 = vadd.f32 %v2982, %v3070
    %3072 = vmatmul.bf16.gmra.mxu0 %v2562
    %v3073 = vpop.f32.mrf.mxu0
    %v3074 = vadd.f32 %v2985, %v3073
    %v3075 = vpop.f32.mrf.mxu0
    %v3076 = vadd.f32 %v2987, %v3075
    %3077 = vmatmul.bf16.gmra.mxu0 %v2564
    %v3078 = vpop.f32.mrf.mxu0
    %v3079 = vadd.f32 %v2990, %v3078
    %v3080 = vpop.f32.mrf.mxu0
    %v3081 = vadd.f32 %v2992, %v3080
    %3082 = vmatmul.bf16.gmra.mxu0 %v2566
    %v3083 = vpop.f32.mrf.mxu0
    %v3084 = vadd.f32 %v2995, %v3083
    %v3085 = vpop.f32.mrf.mxu0
    %v3086 = vadd.f32 %v2997, %v3085
    %3087 = vmatmul.bf16.gmra.mxu0 %v2568
    %v3088 = vpop.f32.mrf.mxu0
    %v3089 = vadd.f32 %v3000, %v3088
    %v3090 = vpop.f32.mrf.mxu0
    %v3091 = vadd.f32 %v3002, %v3090
    %3092 = vmatmul.bf16.gmra.mxu0 %v2570
    %v3093 = vpop.f32.mrf.mxu0
    %v3094 = vadd.f32 %v3005, %v3093
    %v3095 = vpop.f32.mrf.mxu0
    %v3096 = vadd.f32 %v3007, %v3095
    %3097 = vmatmul.bf16.gmra.mxu0 %v2572
    %v3098 = vpop.f32.mrf.mxu0
    %v3099 = vadd.f32 %v3010, %v3098
    %v3100 = vpop.f32.mrf.mxu0
    %v3101 = vadd.f32 %v3012, %v3100
    %3102 = vmatmul.bf16.gmra.mxu0 %v2574
    %v3103 = vpop.f32.mrf.mxu0
    %v3104 = vadd.f32 %v3015, %v3103
    %v3105 = vpop.f32.mrf.mxu0
    %v3106 = vadd.f32 %v3017, %v3105
    %3107 = vmatmul.bf16.gmra.mxu0 %v2576
    %v3108 = vpop.f32.mrf.mxu0
    %v3109 = vadd.f32 %v3020, %v3108
    %v3110 = vpop.f32.mrf.mxu0
    %v3111 = vadd.f32 %v3022, %v3110
    %3112 = vmatmul.bf16.gmra.mxu0 %v2578
    %v3113 = vpop.f32.mrf.mxu0
    %v3114 = vadd.f32 %v3025, %v3113
    %v3115 = vpop.f32.mrf.mxu0
    %v3116 = vadd.f32 %v3027, %v3115
    %3117 = vmatmul.bf16.gmra.mxu0 %v2580
    %v3118 = vpop.f32.mrf.mxu0
    %v3119 = vadd.f32 %v3030, %v3118
    %v3120 = vpop.f32.mrf.mxu0
    %v3121 = vadd.f32 %v3032, %v3120
    %3122 = vmatmul.bf16.gmra.mxu0 %v2582
    %v3123 = vpop.f32.mrf.mxu0
    %v3124 = vadd.f32 %v3035, %v3123
    %v3125 = vpop.f32.mrf.mxu0
    %v3126 = vadd.f32 %v3037, %v3125
    %3127 = vmatmul.bf16.gmra.mxu0 %v2584
    %v3128 = vpop.f32.mrf.mxu0
    %v3129 = vadd.f32 %v3040, %v3128
    %v3130 = vpop.f32.mrf.mxu0
    %v3131 = vadd.f32 %v3042, %v3130
    %3132 = vmatmul.bf16.gmra.mxu0 %v2586
    %v3133 = vpop.f32.mrf.mxu0
    %v3134 = vadd.f32 %v3045, %v3133
    %v3135 = vpop.f32.mrf.mxu0
    %v3136 = vadd.f32 %v3047, %v3135
    %3137 = vmatmul.bf16.gmra.mxu0 %v2588
    %v3138 = vpop.f32.mrf.mxu0
    %v3139 = vadd.f32 %v3050, %v3138
    %v3140 = vpop.f32.mrf.mxu0
    %v3141 = vadd.f32 %v3052, %v3140
    %3142 = vdwg.mxu0
    %v3143 = vmax.f32 %v2886, 0.0
    %v3144 = vmax.f32 %v3064, 0.0
    %v3145 = vmax.f32 %v2888, 0.0
    %v3146 = vmax.f32 %v3066, 0.0
    %v3147 = vmax.f32 %v2891, 0.0
    %v3148 = vmax.f32 %v3069, 0.0
    %v3149 = vmax.f32 %v2893, 0.0
    %v3150 = vmax.f32 %v3071, 0.0
    %v3151 = vmax.f32 %v2896, 0.0
    %v3152 = vmax.f32 %v3074, 0.0
    %v3153 = vmax.f32 %v2898, 0.0
    %v3154 = vmax.f32 %v3076, 0.0
    %v3155 = vmax.f32 %v2901, 0.0
    %v3156 = vmax.f32 %v3079, 0.0
    %v3157 = vmax.f32 %v2903, 0.0
    %v3158 = vmax.f32 %v3081, 0.0
    %v3159 = vmax.f32 %v2906, 0.0
    %v3160 = vmax.f32 %v3084, 0.0
    %v3161 = vmax.f32 %v2908, 0.0
    %v3162 = vmax.f32 %v3086, 0.0
    %v3163 = vmax.f32 %v2911, 0.0
    %v3164 = vmax.f32 %v3089, 0.0
    %v3165 = vmax.f32 %v2913, 0.0
    %v3166 = vmax.f32 %v3091, 0.0
    %v3167 = vmax.f32 %v2916, 0.0
    %v3168 = vmax.f32 %v3094, 0.0
    %v3169 = vmax.f32 %v2918, 0.0
    %v3170 = vmax.f32 %v3096, 0.0
    %v3171 = vmax.f32 %v2921, 0.0
    %v3172 = vmax.f32 %v3099, 0.0
    %v3173 = vmax.f32 %v2923, 0.0
    %v3174 = vmax.f32 %v3101, 0.0
    %v3175 = vmax.f32 %v2926, 0.0
    %v3176 = vmax.f32 %v3104, 0.0
    %v3177 = vmax.f32 %v2928, 0.0
    %v3178 = vmax.f32 %v3106, 0.0
    %v3179 = vmax.f32 %v2931, 0.0
    %v3180 = vmax.f32 %v3109, 0.0
    %v3181 = vmax.f32 %v2933, 0.0
    %v3182 = vmax.f32 %v3111, 0.0
    %v3183 = vmax.f32 %v2936, 0.0
    %v3184 = vmax.f32 %v3114, 0.0
    %v3185 = vmax.f32 %v2938, 0.0
    %v3186 = vmax.f32 %v3116, 0.0
    %v3187 = vmax.f32 %v2941, 0.0
    %v3188 = vmax.f32 %v3119, 0.0
    %v3189 = vmax.f32 %v2943, 0.0
    %v3190 = vmax.f32 %v3121, 0.0
    %v3191 = vmax.f32 %v2946, 0.0
    %v3192 = vmax.f32 %v3124, 0.0
    %v3193 = vmax.f32 %v2948, 0.0
    %v3194 = vmax.f32 %v3126, 0.0
    %v3195 = vmax.f32 %v2951, 0.0
    %v3196 = vmax.f32 %v3129, 0.0
    %v3197 = vmax.f32 %v2953, 0.0
    %v3198 = vmax.f32 %v3131, 0.0
    %v3199 = vmax.f32 %v2956, 0.0
    %v3200 = vmax.f32 %v3134, 0.0
    %v3201 = vmax.f32 %v2958, 0.0
    %v3202 = vmax.f32 %v3136, 0.0
    %v3203 = vmax.f32 %v2961, 0.0
    %v3204 = vmax.f32 %v3139, 0.0
    %v3205 = vmax.f32 %v2963, 0.0
    %v3206 = vmax.f32 %v3141, 0.0
    %v3207 = vld [vmem:[#allocation11] sm:$0x3]
    %v3208 = vpack.c.bf16 %v3145, %v3143
    %v3209 = vpack.c.bf16 %v3146, %v3144
    %v3210 = vpack.c.bf16 %v3149, %v3147
    %v3211 = vpack.c.bf16 %v3150, %v3148
    %v3212 = vpack.c.bf16 %v3153, %v3151
    %v3213 = vpack.c.bf16 %v3154, %v3152
    %v3214 = vpack.c.bf16 %v3157, %v3155
    %v3215 = vpack.c.bf16 %v3158, %v3156
    %v3216 = vpack.c.bf16 %v3161, %v3159
    %v3217 = vpack.c.bf16 %v3162, %v3160
    %v3218 = vpack.c.bf16 %v3165, %v3163
    %v3219 = vpack.c.bf16 %v3166, %v3164
    %v3220 = vpack.c.bf16 %v3169, %v3167
    %v3221 = vpack.c.bf16 %v3170, %v3168
    %v3222 = vpack.c.bf16 %v3173, %v3171
    %v3223 = vpack.c.bf16 %v3174, %v3172
    %v3224 = vpack.c.bf16 %v3177, %v3175
    %v3225 = vpack.c.bf16 %v3178, %v3176
    %v3226 = vpack.c.bf16 %v3181, %v3179
    %v3227 = vpack.c.bf16 %v3182, %v3180
    %v3228 = vpack.c.bf16 %v3185, %v3183
    %v3229 = vpack.c.bf16 %v3186, %v3184
    %v3230 = vpack.c.bf16 %v3189, %v3187
    %v3231 = vpack.c.bf16 %v3190, %v3188
    %v3232 = vpack.c.bf16 %v3193, %v3191
    %v3233 = vpack.c.bf16 %v3194, %v3192
    %v3234 = vpack.c.bf16 %v3197, %v3195
    %v3235 = vpack.c.bf16 %v3198, %v3196
    %v3236 = vpack.c.bf16 %v3201, %v3199
    %v3237 = vpack.c.bf16 %v3202, %v3200
    %v3238 = vpack.c.bf16 %v3205, %v3203
    %v3239 = vpack.c.bf16 %v3206, %v3204
    %s3240 = sld [smem:[#allocation2]]
    %v3241 = vstv %s3240
    %3243 = vst [vmem:[#allocation1] ss:$9 sm:$0xff] %v3207
    %v3244 = vld [vmem:[#allocation1] sm:$0xff]
    %v3245 = vld [vmem:[#allocation1 + $0x9] sm:$0xff]
    %3248 = vmatpush.bf16.xpose.msra.mxu0 %v3222
    %3249 = vmatpush.bf16.xpose.msra.mxu0 %v3220
    %3250 = vmatpush.bf16.xpose.msra.mxu0 %v3218
    %3251 = vmatpush.bf16.xpose.msra.mxu0 %v3216
    %3252 = vmatpush.bf16.xpose.msra.mxu0 %v3214
    %3253 = vmatpush.bf16.xpose.msra.mxu0 %v3212
    %3254 = vmatpush.bf16.xpose.msra.mxu0 %v3210
    %3255 = vmatpush.bf16.xpose.msra.mxu0 %v3208
    %3256 = vmatmul.bf16.gmra.mxu0 %v3244
    %v3257 = vpop.f32.mrf.mxu0
    %v3258 = vadd.f32 %v3241, %v3257
    %v3259 = vpop.f32.mrf.mxu0
    %3260 = vdwg.mxu0
    %3261 = vmatpush.bf16.xpose.msra.mxu0 %v3223
    %3262 = vmatpush.bf16.xpose.msra.mxu0 %v3221
    %3263 = vmatpush.bf16.xpose.msra.mxu0 %v3219
    %3264 = vmatpush.bf16.xpose.msra.mxu0 %v3217
    %3265 = vmatpush.bf16.xpose.msra.mxu0 %v3215
    %3266 = vmatpush.bf16.xpose.msra.mxu0 %v3213
    %3267 = vmatpush.bf16.xpose.msra.mxu0 %v3211
    %3268 = vmatpush.bf16.xpose.msra.mxu0 %v3209
    %3269 = vmatmul.bf16.gmra.mxu0 %v3245
    %v3270 = vpop.f32.mrf.mxu0
    %v3271 = vadd.f32 %v3258, %v3270
    %v3272 = vpop.f32.mrf.mxu0
    %3273 = vdwg.mxu0
    %3274 = vmatpush.bf16.xpose.msra.mxu0 %v3238
    %3275 = vmatpush.bf16.xpose.msra.mxu0 %v3236
    %3276 = vmatpush.bf16.xpose.msra.mxu0 %v3234
    %3277 = vmatpush.bf16.xpose.msra.mxu0 %v3232
    %3278 = vmatpush.bf16.xpose.msra.mxu0 %v3230
    %3279 = vmatpush.bf16.xpose.msra.mxu0 %v3228
    %3280 = vmatpush.bf16.xpose.msra.mxu0 %v3226
    %3281 = vmatpush.bf16.xpose.msra.mxu0 %v3224
    %3282 = vmatmul.bf16.gmra.mxu0 %v3244
    %v3283 = vpop.f32.mrf.mxu0
    %v3284 = vadd.f32 %v3241, %v3283
    %v3285 = vpop.f32.mrf.mxu0
    %3286 = vdwg.mxu0
    %3287 = vmatpush.bf16.xpose.msra.mxu0 %v3239
    %3288 = vmatpush.bf16.xpose.msra.mxu0 %v3237
    %3289 = vmatpush.bf16.xpose.msra.mxu0 %v3235
    %3290 = vmatpush.bf16.xpose.msra.mxu0 %v3233
    %3291 = vmatpush.bf16.xpose.msra.mxu0 %v3231
    %3292 = vmatpush.bf16.xpose.msra.mxu0 %v3229
    %3293 = vmatpush.bf16.xpose.msra.mxu0 %v3227
    %3294 = vmatpush.bf16.xpose.msra.mxu0 %v3225
    %3295 = vmatmul.bf16.gmra.mxu0 %v3245
    %v3296 = vpop.f32.mrf.mxu0
    %v3297 = vadd.f32 %v3284, %v3296
    %v3298 = vpop.f32.mrf.mxu0
    %3299 = vdwg.mxu0
    %v3300 = vxor.u32 %v3271, 2147483648
    %v3301 = vxor.u32 %v3297, 2147483648
    %v3302 = vmul.f32 %v3300, 1.442695
    %v3303 = vpow.pop %v3302
    %v3304 = vmul.f32 %v3301, 1.442695
    %v3305 = vpow.pop %v3304
    %v3306 = vadd.f32 %v3303, 1.0
    %v3307 = vadd.f32 %v3305, 1.0
    %v3308 = vrcp.pop %v3306
    %v3309 = vmul.f32 %v3306, %v3308
    %v3310 = vsub.f32 1.0, %v3309
    %v3311 = vmul.f32 %v3308, %v3310
    %v3312 = vadd.f32 %v3308, %v3311
    %vm3313 = vweird.f32 %v3306
    %vm3314 = vweird.f32 %v3308
    %vm3315 = vmor %vm3313, %vm3314
    %v3316 = vsel %vm3315, %v3308, %v3312
    %v3317 = vand.u32 2147483647, %v3306
    %vm3318 = vcmp.eq.f32.partialorder %v3317, 8.507059e+37
    %v3319 = vand.u32 %v3306, 2147483648
    %v3320 = vor.u32 1.1754944e-38, %v3319
    %v3321 = vsel %vm3318, %v3320, %v3316
    %v3322 = vmul.f32 1.0, %v3321
    %v3323 = vrcp.pop %v3307
    %v3324 = vmul.f32 %v3307, %v3323
    %v3325 = vsub.f32 1.0, %v3324
    %v3326 = vmul.f32 %v3323, %v3325
    %v3327 = vadd.f32 %v3323, %v3326
    %vm3328 = vweird.f32 %v3307
    %vm3329 = vweird.f32 %v3323
    %vm3330 = vmor %vm3328, %vm3329
    %v3331 = vsel %vm3330, %v3323, %v3327
    %v3332 = vand.u32 2147483647, %v3307
    %vm3333 = vcmp.eq.f32.partialorder %v3332, 8.507059e+37
    %v3334 = vand.u32 %v3307, 2147483648
    %v3335 = vor.u32 1.1754944e-38, %v3334
    %v3336 = vsel %vm3333, %v3335, %v3331
    %v3337 = vmul.f32 1.0, %v3336
    %v3340 = vrot.slane %v3337, 7
    %v3341 = vsel %vm265, %v3322, %v3340
    %v3343 = vlaneseq
    %vm3344 = vcmp.ge.s32.totalorder %v3343, 0
    %vm3345 = vcmp.lt.s32.totalorder %v3343, 256
    %vm3346 = vmand %vm3344, %vm3345
    %3347 = vst.msk [vmem:[#allocation12] sm:$0x3] %vm3346, %v3341
    // Predicated region
    $region66: #{tpu_custom_call.1} parent=1 // pred_check
      _
    $region67: #{tpu_custom_call.1} parent=1 // pred_check_branch
      %3349 = sbr.rel (0) target = $region69
    $region68: #{tpu_custom_call.1} parent=1 // pred_region
      %3351 = vsyncadd [#allocation5], 0
      %s3353 = sshll.u32 [#allocation12], 4
      %s3354 = int_to_ptr.vmem [resolvable:$true] %s3353
      %s3355 = sshll.u32 %s11, 4
      %s3356 = int_to_ptr.hbm [resolvable:$true] %s3355
      %3358 = dma.vmem_to_hbm [thread:$0]  %s3354, 32, %s3356, [#allocation5]
    $region69: #{tpu_custom_call.1} parent=1 // pred_fallthru
      _
    // Predicated region
    $region70: #{tpu_custom_call.1} parent=1 // pred_check
      _
    $region71: #{tpu_custom_call.1} parent=1 // pred_check_branch
      %3360 = sbr.rel (0) target = $region73
    $region72: #{tpu_custom_call.1} parent=1 // pred_region
      %3362 = dma.done [#allocation5], 32
    $region73: #{tpu_custom_call.1} parent=1 // pred_fallthru
      _
    %3363 = vsyncpa [#allocation4], 1
    %3364 = vsyncpa [#allocation7], 1
    %3365 = vsyncpa [#allocation10], 1
    %3366 = vsyncpa [#allocation5], 1

</llo_original>
